<compile_context>
chip_gen: v7x
topology: tpu7x:2x2x1
jax: 0.10.0
libtpu: 0.0.40
codegen_flags: <defaults>
</compile_context>

<pallas_src>
import jax
import jax.numpy as jnp
from jax.experimental import pallas as pl
from jax.experimental.pallas import tpu as pltpu

I_SIZE = 28        # input features per timestep
T_STEPS = 28       # sequence length
H_SIZE = 64        # GRU hidden size (logical)
H_PAD = 128        # hidden size padded to one full vreg lane group
G3 = 3 * H_PAD     # fused gate axis: [r | z | n], each gate 128 lanes wide
O_SIZE = 10        # classifier outputs (logical)
O_PAD = 128        # lane-dense padded classifier output width


def _sigmoid1eup(x):
    # Exact sigmoid via a single tanh EUP push: sigmoid(x) = 0.5*tanh(0.5*x) + 0.5.
    return 0.5 * jnp.tanh(0.5 * x) + 0.5


def gru_kernel(x_ref, wih_ref, whh_ref, bih_ref, bhh_ref, wo_ref, bo_ref,
               out_ref, gi_scratch):
    # x_ref:   (T*B, I)       bf16, time-major flattened input
    # wih_ref: (I, 3*H_PAD)   bf16, zero-padded, gate order [r|z|n]
    # whh_ref: (H_PAD, 3*H_PAD) bf16
    # bih_ref/bhh_ref: (1, 3*H_PAD) f32
    # wo_ref:  (H_PAD, O_PAD) bf16, bo_ref: (1, O_PAD) f32
    # out_ref: (B, O_PAD)     f32
    # gi_scratch: (T*B, 3*H_PAD) f32 VMEM scratch for the hoisted input projection
    B = out_ref.shape[0]
    T = x_ref.shape[0] // B

    # ---- Hoisted input projection: one bf16 GEMM (f32 accumulate) for all timesteps,
    #      b_ih folded in, result parked in VMEM scratch (too big for the vreg file).
    gi_scratch[...] = (
        jnp.dot(x_ref[...], wih_ref[...], preferred_element_type=jnp.float32)
        + bih_ref[...]
    )                                                    # (T*B, 3*H_PAD) f32

    # ---- Loop-invariant values hoisted (JAX does not CSE broadcasts per iteration).
    whh = whh_ref[...]                                   # (H_PAD, 3*H_PAD) bf16
    bhh = jnp.broadcast_to(bhh_ref[...], (B, G3))        # (B, 3*H_PAD) f32

    # ---- Recurrence: fully unrolled, static 8-sublane/128-lane aligned slices.
    h = jnp.zeros((B, H_PAD), jnp.float32)               # h0 = 0 (padded lanes stay 0)
    for t in range(T):
        gi = gi_scratch[t * B:(t + 1) * B, :]            # (B, 3*H_PAD) f32, from VMEM
        gh = jnp.dot(h.astype(jnp.bfloat16), whh,
                     preferred_element_type=jnp.float32) + bhh

        r = _sigmoid1eup(gi[:, 0:H_PAD] + gh[:, 0:H_PAD])
        z = _sigmoid1eup(gi[:, H_PAD:2 * H_PAD] + gh[:, H_PAD:2 * H_PAD])
        # b_hh_n lives inside gh_n, so it is (correctly) multiplied by r.
        n = jnp.tanh(gi[:, 2 * H_PAD:3 * H_PAD] + r * gh[:, 2 * H_PAD:3 * H_PAD])
        # One fewer VPU op on the serial chain than (1-z)*n + z*h.
        h = n + z * (h - n)

    # ---- Fused classifier on the last hidden state, lane-dense (B, 128) store.
    out_ref[...] = (
        jnp.dot(h.astype(jnp.bfloat16), wo_ref[...],
                preferred_element_type=jnp.float32)
        + bo_ref[...]
    )


@jax.jit
def rnn_net_forward(x, wih_p, whh_p, bih_p, bhh_p, wo_p, bo_p):
    # Matches the PyTorch forward: x.view(-1, 28, 28), batch_first GRU, last step,
    # Linear(64 -> 10).
    x3 = x.reshape(-1, T_STEPS, I_SIZE).astype(jnp.float32)        # (B, T, I)
    B = x3.shape[0]
    # Time-major flatten so per-step slices inside the kernel are contiguous 8-sublane
    # groups; cast to bf16 once here (MXU operand dtype).
    x_flat = jnp.transpose(x3, (1, 0, 2)).reshape(T_STEPS * B, I_SIZE)
    x_flat = x_flat.astype(jnp.bfloat16)

    out_pad = pl.pallas_call(
        gru_kernel,
        out_shape=jax.ShapeDtypeStruct((B, O_PAD), jnp.float32),
        scratch_shapes=[pltpu.VMEM((T_STEPS * B, G3), jnp.float32)],
    )(x_flat, wih_p, whh_p, bih_p, bhh_p, wo_p, bo_p)

    return out_pad[:, :O_SIZE]


def init_params(key):
    """Deterministic init matching PyTorch GRU/Linear parameter shapes, then repacked
    (transposed, gate-fused, zero-padded to 128 lanes, weights cast to bf16)."""
    ks = jax.random.split(key, 6)
    bound = 1.0 / jnp.sqrt(H_SIZE)
    # PyTorch: weight_ih_l0 (3H, I), weight_hh_l0 (3H, H), biases (3H,), gates [r,z,n].
    w_ih = jax.random.uniform(ks[0], (3 * H_SIZE, I_SIZE), jnp.float32, -bound, bound)
    w_hh = jax.random.uniform(ks[1], (3 * H_SIZE, H_SIZE), jnp.float32, -bound, bound)
    b_ih = jax.random.uniform(ks[2], (3 * H_SIZE,), jnp.float32, -bound, bound)
    b_hh = jax.random.uniform(ks[3], (3 * H_SIZE,), jnp.float32, -bound, bound)
    w_out = jax.random.uniform(ks[4], (O_SIZE, H_SIZE), jnp.float32, -bound, bound)
    b_out = jax.random.uniform(ks[5], (O_SIZE,), jnp.float32, -bound, bound)

    # Fused + padded packing: gate g occupies lanes [g*128, g*128+64); rest zero.
    # The padded whh columns / bias lanes MUST stay exactly zero so padded h lanes
    # remain zero through the recurrence.
    wih_p = jnp.zeros((I_SIZE, G3), jnp.float32)
    whh_p = jnp.zeros((H_PAD, G3), jnp.float32)
    bih_p = jnp.zeros((1, G3), jnp.float32)
    bhh_p = jnp.zeros((1, G3), jnp.float32)
    for g in range(3):
        wih_p = wih_p.at[:, g * H_PAD:g * H_PAD + H_SIZE].set(
            w_ih[g * H_SIZE:(g + 1) * H_SIZE, :].T)
        whh_p = whh_p.at[:H_SIZE, g * H_PAD:g * H_PAD + H_SIZE].set(
            w_hh[g * H_SIZE:(g + 1) * H_SIZE, :].T)
        bih_p = bih_p.at[0, g * H_PAD:g * H_PAD + H_SIZE].set(
            b_ih[g * H_SIZE:(g + 1) * H_SIZE])
        bhh_p = bhh_p.at[0, g * H_PAD:g * H_PAD + H_SIZE].set(
            b_hh[g * H_SIZE:(g + 1) * H_SIZE])

    wo_p = jnp.zeros((H_PAD, O_PAD), jnp.float32).at[:H_SIZE, :O_SIZE].set(w_out.T)
    bo_p = jnp.zeros((1, O_PAD), jnp.float32).at[0, :O_SIZE].set(b_out)

    # MXU operands in bf16; biases stay f32 (added after f32 accumulation).
    kernel_params = (wih_p.astype(jnp.bfloat16), whh_p.astype(jnp.bfloat16),
                     bih_p, bhh_p,
                     wo_p.astype(jnp.bfloat16), bo_p)
    raw_params = (w_ih, w_hh, b_ih, b_hh, w_out, b_out)
    return kernel_params, raw_params


def ref_forward(x, raw):
    """Pure-JAX f32 reference reproducing torch.nn.GRU(batch_first) + Linear."""
    w_ih, w_hh, b_ih, b_hh, w_out, b_out = raw
    x3 = x.reshape(-1, T_STEPS, I_SIZE).astype(jnp.float32)
    B = x3.shape[0]
    h0 = jnp.zeros((B, H_SIZE), jnp.float32)

    def step(h, x_t):
        gi = x_t @ w_ih.T + b_ih
        gh = h @ w_hh.T + b_hh
        i_r, i_z, i_n = jnp.split(gi, 3, axis=-1)
        h_r, h_z, h_n = jnp.split(gh, 3, axis=-1)
        r = jax.nn.sigmoid(i_r + h_r)
        z = jax.nn.sigmoid(i_z + h_z)
        n = jnp.tanh(i_n + r * h_n)
        return (1.0 - z) * n + z * h, None

    h_last, _ = jax.lax.scan(step, h0, jnp.transpose(x3, (1, 0, 2)))
    return h_last @ w_out.T + b_out


if __name__ == "__main__":
    key = jax.random.PRNGKey(0)
    k_param, k_x = jax.random.split(key)

    kernel_params, raw = init_params(k_param)

    # Small deterministic MNIST-like batch: (B, 1, 28, 28); forward views it as (B, 28, 28).
    B = 8
    x = jax.random.normal(k_x, (B, 1, 28, 28), jnp.float32)

    out = rnn_net_forward(x, *kernel_params)
    out = jax.block_until_ready(out)

    ref = ref_forward(x, raw)
    assert out.shape == (B, O_SIZE)
    max_err = jnp.max(jnp.abs(out - ref))
    # Tolerance loosened vs. the pure-f32 version: MXU operands are bf16 (f32 accumulate).
    assert jnp.allclose(out, ref, rtol=3e-2, atol=3e-2), f"max abs err {max_err}"

    print("KERNEL_OK")
</pallas_src>

<mosaic_0001>
module attributes {stable_mosaic.version = 11 : i64} {
  func.func @gru_kernel(%arg0: memref<224x28xbf16, #tpu.memory_space<vmem>>, %arg1: memref<28x384xbf16, #tpu.memory_space<vmem>>, %arg2: memref<128x384xbf16, #tpu.memory_space<vmem>>, %arg3: memref<1x384xf32, #tpu.memory_space<vmem>>, %arg4: memref<1x384xf32, #tpu.memory_space<vmem>>, %arg5: memref<128x128xbf16, #tpu.memory_space<vmem>>, %arg6: memref<1x128xf32, #tpu.memory_space<vmem>>, %arg7: memref<8x128xf32, #tpu.memory_space<vmem>>, %arg8: memref<224x384xf32, #tpu.memory_space<vmem>>) attributes {dimension_semantics = [], scalar_prefetch = 0 : i64, scratch_operands = 1 : i64, tpu.core_type = #tpu.core_type<tc>} {
    %c0 = arith.constant 0 : index
    %c0_0 = arith.constant 0 : index
    %0 = vector.load %arg0[%c0, %c0_0] : memref<224x28xbf16, #tpu.memory_space<vmem>>, vector<224x28xbf16>
    %c0_1 = arith.constant 0 : index
    %c0_2 = arith.constant 0 : index
    %1 = vector.load %arg1[%c0_1, %c0_2] : memref<28x384xbf16, #tpu.memory_space<vmem>>, vector<28x384xbf16>
    %cst = arith.constant dense<0.000000e+00> : vector<224x384xf32>
    %2 = tpu.matmul %0, %1, %cst {dimension_numbers = #tpu.dot_dimension_numbers<[1], [0], [0], [1], [0, 0, 1, 1], [], []>} : vector<224x28xbf16>, vector<28x384xbf16>, vector<224x384xf32> -> vector<224x384xf32>
    %c0_3 = arith.constant 0 : index
    %c0_4 = arith.constant 0 : index
    %3 = vector.load %arg3[%c0_3, %c0_4] : memref<1x384xf32, #tpu.memory_space<vmem>>, vector<1x384xf32>
    %4 = vector.broadcast %3 : vector<1x384xf32> to vector<224x384xf32>
    %5 = arith.addf %2, %4 : vector<224x384xf32>
    %c0_5 = arith.constant 0 : index
    %c0_6 = arith.constant 0 : index
    %6 = vector.load %arg8[%c0_5, %c0_6] : memref<224x384xf32, #tpu.memory_space<vmem>>, vector<224x384xf32>
    tpu.vector_store %arg8[%c0_5, %c0_6], %5 {strides = array<i32>} : memref<224x384xf32, #tpu.memory_space<vmem>>, vector<224x384xf32>,
    %c0_7 = arith.constant 0 : index
    %c0_8 = arith.constant 0 : index
    %7 = vector.load %arg2[%c0_7, %c0_8] : memref<128x384xbf16, #tpu.memory_space<vmem>>, vector<128x384xbf16>
    %c0_9 = arith.constant 0 : index
    %c0_10 = arith.constant 0 : index
    %8 = vector.load %arg4[%c0_9, %c0_10] : memref<1x384xf32, #tpu.memory_space<vmem>>, vector<1x384xf32>
    %9 = vector.shape_cast %8 : vector<1x384xf32> to vector<1x384xf32>
    %10 = vector.broadcast %9 : vector<1x384xf32> to vector<8x384xf32>
    %cst_11 = arith.constant 0.000000e+00 : f32
    %11 = vector.broadcast %cst_11 : f32 to vector<8x128xf32>
    %c0_12 = arith.constant 0 : index
    %c0_13 = arith.constant 0 : index
    %12 = vector.load %arg8[%c0_12, %c0_13] : memref<224x384xf32, #tpu.memory_space<vmem>>, vector<8x384xf32>
    %13 = arith.truncf %11 : vector<8x128xf32> to vector<8x128xbf16>
    %cst_14 = arith.constant dense<0.000000e+00> : vector<8x384xf32>
    %14 = tpu.matmul %13, %7, %cst_14 {dimension_numbers = #tpu.dot_dimension_numbers<[1], [0], [0], [1], [0, 0, 1, 1], [], []>} : vector<8x128xbf16>, vector<128x384xbf16>, vector<8x384xf32> -> vector<8x384xf32>
    %15 = arith.addf %14, %10 : vector<8x384xf32>
    %16 = vector.extract_strided_slice %12 {offsets = [0, 0], sizes = [8, 128], strides = [1, 1]} : vector<8x384xf32> to vector<8x128xf32>
    %17 = vector.extract_strided_slice %15 {offsets = [0, 0], sizes = [8, 128], strides = [1, 1]} : vector<8x384xf32> to vector<8x128xf32>
    %18 = arith.addf %16, %17 : vector<8x128xf32>
    %cst_15 = arith.constant 5.000000e-01 : f32
    %19 = vector.broadcast %cst_15 : f32 to vector<8x128xf32>
    %20 = arith.mulf %19, %18 : vector<8x128xf32>
    %21 = math.tanh %20 : vector<8x128xf32>
    %cst_16 = arith.constant 5.000000e-01 : f32
    %22 = vector.broadcast %cst_16 : f32 to vector<8x128xf32>
    %23 = arith.mulf %22, %21 : vector<8x128xf32>
    %cst_17 = arith.constant 5.000000e-01 : f32
    %24 = vector.broadcast %cst_17 : f32 to vector<8x128xf32>
    %25 = arith.addf %23, %24 : vector<8x128xf32>
    %26 = vector.extract_strided_slice %12 {offsets = [0, 128], sizes = [8, 128], strides = [1, 1]} : vector<8x384xf32> to vector<8x128xf32>
    %27 = vector.extract_strided_slice %15 {offsets = [0, 128], sizes = [8, 128], strides = [1, 1]} : vector<8x384xf32> to vector<8x128xf32>
    %28 = arith.addf %26, %27 : vector<8x128xf32>
    %cst_18 = arith.constant 5.000000e-01 : f32
    %29 = vector.broadcast %cst_18 : f32 to vector<8x128xf32>
    %30 = arith.mulf %29, %28 : vector<8x128xf32>
    %31 = math.tanh %30 : vector<8x128xf32>
    %cst_19 = arith.constant 5.000000e-01 : f32
    %32 = vector.broadcast %cst_19 : f32 to vector<8x128xf32>
    %33 = arith.mulf %32, %31 : vector<8x128xf32>
    %cst_20 = arith.constant 5.000000e-01 : f32
    %34 = vector.broadcast %cst_20 : f32 to vector<8x128xf32>
    %35 = arith.addf %33, %34 : vector<8x128xf32>
    %36 = vector.extract_strided_slice %12 {offsets = [0, 256], sizes = [8, 128], strides = [1, 1]} : vector<8x384xf32> to vector<8x128xf32>
    %37 = vector.extract_strided_slice %15 {offsets = [0, 256], sizes = [8, 128], strides = [1, 1]} : vector<8x384xf32> to vector<8x128xf32>
    %38 = arith.mulf %25, %37 : vector<8x128xf32>
    %39 = arith.addf %36, %38 : vector<8x128xf32>
    %40 = math.tanh %39 : vector<8x128xf32>
    %41 = arith.subf %11, %40 : vector<8x128xf32>
    %42 = arith.mulf %35, %41 : vector<8x128xf32>
    %43 = arith.addf %40, %42 : vector<8x128xf32>
    %c8 = arith.constant 8 : index
    %c0_21 = arith.constant 0 : index
    %44 = vector.load %arg8[%c8, %c0_21] : memref<224x384xf32, #tpu.memory_space<vmem>>, vector<8x384xf32>
    %45 = arith.truncf %43 : vector<8x128xf32> to vector<8x128xbf16>
    %cst_22 = arith.constant dense<0.000000e+00> : vector<8x384xf32>
    %46 = tpu.matmul %45, %7, %cst_22 {dimension_numbers = #tpu.dot_dimension_numbers<[1], [0], [0], [1], [0, 0, 1, 1], [], []>} : vector<8x128xbf16>, vector<128x384xbf16>, vector<8x384xf32> -> vector<8x384xf32>
    %47 = arith.addf %46, %10 : vector<8x384xf32>
    %48 = vector.extract_strided_slice %44 {offsets = [0, 0], sizes = [8, 128], strides = [1, 1]} : vector<8x384xf32> to vector<8x128xf32>
    %49 = vector.extract_strided_slice %47 {offsets = [0, 0], sizes = [8, 128], strides = [1, 1]} : vector<8x384xf32> to vector<8x128xf32>
    %50 = arith.addf %48, %49 : vector<8x128xf32>
    %cst_23 = arith.constant 5.000000e-01 : f32
    %51 = vector.broadcast %cst_23 : f32 to vector<8x128xf32>
    %52 = arith.mulf %51, %50 : vector<8x128xf32>
    %53 = math.tanh %52 : vector<8x128xf32>
    %cst_24 = arith.constant 5.000000e-01 : f32
    %54 = vector.broadcast %cst_24 : f32 to vector<8x128xf32>
    %55 = arith.mulf %54, %53 : vector<8x128xf32>
    %cst_25 = arith.constant 5.000000e-01 : f32
    %56 = vector.broadcast %cst_25 : f32 to vector<8x128xf32>
    %57 = arith.addf %55, %56 : vector<8x128xf32>
    %58 = vector.extract_strided_slice %44 {offsets = [0, 128], sizes = [8, 128], strides = [1, 1]} : vector<8x384xf32> to vector<8x128xf32>
    %59 = vector.extract_strided_slice %47 {offsets = [0, 128], sizes = [8, 128], strides = [1, 1]} : vector<8x384xf32> to vector<8x128xf32>
    %60 = arith.addf %58, %59 : vector<8x128xf32>
    %cst_26 = arith.constant 5.000000e-01 : f32
    %61 = vector.broadcast %cst_26 : f32 to vector<8x128xf32>
    %62 = arith.mulf %61, %60 : vector<8x128xf32>
    %63 = math.tanh %62 : vector<8x128xf32>
    %cst_27 = arith.constant 5.000000e-01 : f32
    %64 = vector.broadcast %cst_27 : f32 to vector<8x128xf32>
    %65 = arith.mulf %64, %63 : vector<8x128xf32>
    %cst_28 = arith.constant 5.000000e-01 : f32
    %66 = vector.broadcast %cst_28 : f32 to vector<8x128xf32>
    %67 = arith.addf %65, %66 : vector<8x128xf32>
    %68 = vector.extract_strided_slice %44 {offsets = [0, 256], sizes = [8, 128], strides = [1, 1]} : vector<8x384xf32> to vector<8x128xf32>
    %69 = vector.extract_strided_slice %47 {offsets = [0, 256], sizes = [8, 128], strides = [1, 1]} : vector<8x384xf32> to vector<8x128xf32>
    %70 = arith.mulf %57, %69 : vector<8x128xf32>
    %71 = arith.addf %68, %70 : vector<8x128xf32>
    %72 = math.tanh %71 : vector<8x128xf32>
    %73 = arith.subf %43, %72 : vector<8x128xf32>
    %74 = arith.mulf %67, %73 : vector<8x128xf32>
    %75 = arith.addf %72, %74 : vector<8x128xf32>
    %c16 = arith.constant 16 : index
    %c0_29 = arith.constant 0 : index
    %76 = vector.load %arg8[%c16, %c0_29] : memref<224x384xf32, #tpu.memory_space<vmem>>, vector<8x384xf32>
    %77 = arith.truncf %75 : vector<8x128xf32> to vector<8x128xbf16>
    %cst_30 = arith.constant dense<0.000000e+00> : vector<8x384xf32>
    %78 = tpu.matmul %77, %7, %cst_30 {dimension_numbers = #tpu.dot_dimension_numbers<[1], [0], [0], [1], [0, 0, 1, 1], [], []>} : vector<8x128xbf16>, vector<128x384xbf16>, vector<8x384xf32> -> vector<8x384xf32>
    %79 = arith.addf %78, %10 : vector<8x384xf32>
    %80 = vector.extract_strided_slice %76 {offsets = [0, 0], sizes = [8, 128], strides = [1, 1]} : vector<8x384xf32> to vector<8x128xf32>
    %81 = vector.extract_strided_slice %79 {offsets = [0, 0], sizes = [8, 128], strides = [1, 1]} : vector<8x384xf32> to vector<8x128xf32>
    %82 = arith.addf %80, %81 : vector<8x128xf32>
    %cst_31 = arith.constant 5.000000e-01 : f32
    %83 = vector.broadcast %cst_31 : f32 to vector<8x128xf32>
    %84 = arith.mulf %83, %82 : vector<8x128xf32>
    %85 = math.tanh %84 : vector<8x128xf32>
    %cst_32 = arith.constant 5.000000e-01 : f32
    %86 = vector.broadcast %cst_32 : f32 to vector<8x128xf32>
    %87 = arith.mulf %86, %85 : vector<8x128xf32>
    %cst_33 = arith.constant 5.000000e-01 : f32
    %88 = vector.broadcast %cst_33 : f32 to vector<8x128xf32>
    %89 = arith.addf %87, %88 : vector<8x128xf32>
    %90 = vector.extract_strided_slice %76 {offsets = [0, 128], sizes = [8, 128], strides = [1, 1]} : vector<8x384xf32> to vector<8x128xf32>
    %91 = vector.extract_strided_slice %79 {offsets = [0, 128], sizes = [8, 128], strides = [1, 1]} : vector<8x384xf32> to vector<8x128xf32>
    %92 = arith.addf %90, %91 : vector<8x128xf32>
    %cst_34 = arith.constant 5.000000e-01 : f32
    %93 = vector.broadcast %cst_34 : f32 to vector<8x128xf32>
    %94 = arith.mulf %93, %92 : vector<8x128xf32>
    %95 = math.tanh %94 : vector<8x128xf32>
    %cst_35 = arith.constant 5.000000e-01 : f32
    %96 = vector.broadcast %cst_35 : f32 to vector<8x128xf32>
    %97 = arith.mulf %96, %95 : vector<8x128xf32>
    %cst_36 = arith.constant 5.000000e-01 : f32
    %98 = vector.broadcast %cst_36 : f32 to vector<8x128xf32>
    %99 = arith.addf %97, %98 : vector<8x128xf32>
    %100 = vector.extract_strided_slice %76 {offsets = [0, 256], sizes = [8, 128], strides = [1, 1]} : vector<8x384xf32> to vector<8x128xf32>
    %101 = vector.extract_strided_slice %79 {offsets = [0, 256], sizes = [8, 128], strides = [1, 1]} : vector<8x384xf32> to vector<8x128xf32>
    %102 = arith.mulf %89, %101 : vector<8x128xf32>
    %103 = arith.addf %100, %102 : vector<8x128xf32>
    %104 = math.tanh %103 : vector<8x128xf32>
    %105 = arith.subf %75, %104 : vector<8x128xf32>
    %106 = arith.mulf %99, %105 : vector<8x128xf32>
    %107 = arith.addf %104, %106 : vector<8x128xf32>
    %c24 = arith.constant 24 : index
    %c0_37 = arith.constant 0 : index
    %108 = vector.load %arg8[%c24, %c0_37] : memref<224x384xf32, #tpu.memory_space<vmem>>, vector<8x384xf32>
    %109 = arith.truncf %107 : vector<8x128xf32> to vector<8x128xbf16>
    %cst_38 = arith.constant dense<0.000000e+00> : vector<8x384xf32>
    %110 = tpu.matmul %109, %7, %cst_38 {dimension_numbers = #tpu.dot_dimension_numbers<[1], [0], [0], [1], [0, 0, 1, 1], [], []>} : vector<8x128xbf16>, vector<128x384xbf16>, vector<8x384xf32> -> vector<8x384xf32>
    %111 = arith.addf %110, %10 : vector<8x384xf32>
    %112 = vector.extract_strided_slice %108 {offsets = [0, 0], sizes = [8, 128], strides = [1, 1]} : vector<8x384xf32> to vector<8x128xf32>
    %113 = vector.extract_strided_slice %111 {offsets = [0, 0], sizes = [8, 128], strides = [1, 1]} : vector<8x384xf32> to vector<8x128xf32>
    %114 = arith.addf %112, %113 : vector<8x128xf32>
    %cst_39 = arith.constant 5.000000e-01 : f32
    %115 = vector.broadcast %cst_39 : f32 to vector<8x128xf32>
    %116 = arith.mulf %115, %114 : vector<8x128xf32>
    %117 = math.tanh %116 : vector<8x128xf32>
    %cst_40 = arith.constant 5.000000e-01 : f32
    %118 = vector.broadcast %cst_40 : f32 to vector<8x128xf32>
    %119 = arith.mulf %118, %117 : vector<8x128xf32>
    %cst_41 = arith.constant 5.000000e-01 : f32
    %120 = vector.broadcast %cst_41 : f32 to vector<8x128xf32>
    %121 = arith.addf %119, %120 : vector<8x128xf32>
    %122 = vector.extract_strided_slice %108 {offsets = [0, 128], sizes = [8, 128], strides = [1, 1]} : vector<8x384xf32> to vector<8x128xf32>
    %123 = vector.extract_strided_slice %111 {offsets = [0, 128], sizes = [8, 128], strides = [1, 1]} : vector<8x384xf32> to vector<8x128xf32>
    %124 = arith.addf %122, %123 : vector<8x128xf32>
    %cst_42 = arith.constant 5.000000e-01 : f32
    %125 = vector.broadcast %cst_42 : f32 to vector<8x128xf32>
    %126 = arith.mulf %125, %124 : vector<8x128xf32>
    %127 = math.tanh %126 : vector<8x128xf32>
    %cst_43 = arith.constant 5.000000e-01 : f32
    %128 = vector.broadcast %cst_43 : f32 to vector<8x128xf32>
    %129 = arith.mulf %128, %127 : vector<8x128xf32>
    %cst_44 = arith.constant 5.000000e-01 : f32
    %130 = vector.broadcast %cst_44 : f32 to vector<8x128xf32>
    %131 = arith.addf %129, %130 : vector<8x128xf32>
    %132 = vector.extract_strided_slice %108 {offsets = [0, 256], sizes = [8, 128], strides = [1, 1]} : vector<8x384xf32> to vector<8x128xf32>
    %133 = vector.extract_strided_slice %111 {offsets = [0, 256], sizes = [8, 128], strides = [1, 1]} : vector<8x384xf32> to vector<8x128xf32>
    %134 = arith.mulf %121, %133 : vector<8x128xf32>
    %135 = arith.addf %132, %134 : vector<8x128xf32>
    %136 = math.tanh %135 : vector<8x128xf32>
    %137 = arith.subf %107, %136 : vector<8x128xf32>
    %138 = arith.mulf %131, %137 : vector<8x128xf32>
    %139 = arith.addf %136, %138 : vector<8x128xf32>
    %c32 = arith.constant 32 : index
    %c0_45 = arith.constant 0 : index
    %140 = vector.load %arg8[%c32, %c0_45] : memref<224x384xf32, #tpu.memory_space<vmem>>, vector<8x384xf32>
    %141 = arith.truncf %139 : vector<8x128xf32> to vector<8x128xbf16>
    %cst_46 = arith.constant dense<0.000000e+00> : vector<8x384xf32>
    %142 = tpu.matmul %141, %7, %cst_46 {dimension_numbers = #tpu.dot_dimension_numbers<[1], [0], [0], [1], [0, 0, 1, 1], [], []>} : vector<8x128xbf16>, vector<128x384xbf16>, vector<8x384xf32> -> vector<8x384xf32>
    %143 = arith.addf %142, %10 : vector<8x384xf32>
    %144 = vector.extract_strided_slice %140 {offsets = [0, 0], sizes = [8, 128], strides = [1, 1]} : vector<8x384xf32> to vector<8x128xf32>
    %145 = vector.extract_strided_slice %143 {offsets = [0, 0], sizes = [8, 128], strides = [1, 1]} : vector<8x384xf32> to vector<8x128xf32>
    %146 = arith.addf %144, %145 : vector<8x128xf32>
    %cst_47 = arith.constant 5.000000e-01 : f32
    %147 = vector.broadcast %cst_47 : f32 to vector<8x128xf32>
    %148 = arith.mulf %147, %146 : vector<8x128xf32>
    %149 = math.tanh %148 : vector<8x128xf32>
    %cst_48 = arith.constant 5.000000e-01 : f32
    %150 = vector.broadcast %cst_48 : f32 to vector<8x128xf32>
    %151 = arith.mulf %150, %149 : vector<8x128xf32>
    %cst_49 = arith.constant 5.000000e-01 : f32
    %152 = vector.broadcast %cst_49 : f32 to vector<8x128xf32>
    %153 = arith.addf %151, %152 : vector<8x128xf32>
    %154 = vector.extract_strided_slice %140 {offsets = [0, 128], sizes = [8, 128], strides = [1, 1]} : vector<8x384xf32> to vector<8x128xf32>
    %155 = vector.extract_strided_slice %143 {offsets = [0, 128], sizes = [8, 128], strides = [1, 1]} : vector<8x384xf32> to vector<8x128xf32>
    %156 = arith.addf %154, %155 : vector<8x128xf32>
    %cst_50 = arith.constant 5.000000e-01 : f32
    %157 = vector.broadcast %cst_50 : f32 to vector<8x128xf32>
    %158 = arith.mulf %157, %156 : vector<8x128xf32>
    %159 = math.tanh %158 : vector<8x128xf32>
    %cst_51 = arith.constant 5.000000e-01 : f32
    %160 = vector.broadcast %cst_51 : f32 to vector<8x128xf32>
    %161 = arith.mulf %160, %159 : vector<8x128xf32>
    %cst_52 = arith.constant 5.000000e-01 : f32
    %162 = vector.broadcast %cst_52 : f32 to vector<8x128xf32>
    %163 = arith.addf %161, %162 : vector<8x128xf32>
    %164 = vector.extract_strided_slice %140 {offsets = [0, 256], sizes = [8, 128], strides = [1, 1]} : vector<8x384xf32> to vector<8x128xf32>
    %165 = vector.extract_strided_slice %143 {offsets = [0, 256], sizes = [8, 128], strides = [1, 1]} : vector<8x384xf32> to vector<8x128xf32>
    %166 = arith.mulf %153, %165 : vector<8x128xf32>
    %167 = arith.addf %164, %166 : vector<8x128xf32>
    %168 = math.tanh %167 : vector<8x128xf32>
    %169 = arith.subf %139, %168 : vector<8x128xf32>
    %170 = arith.mulf %163, %169 : vector<8x128xf32>
    %171 = arith.addf %168, %170 : vector<8x128xf32>
    %c40 = arith.constant 40 : index
    %c0_53 = arith.constant 0 : index
    %172 = vector.load %arg8[%c40, %c0_53] : memref<224x384xf32, #tpu.memory_space<vmem>>, vector<8x384xf32>
    %173 = arith.truncf %171 : vector<8x128xf32> to vector<8x128xbf16>
    %cst_54 = arith.constant dense<0.000000e+00> : vector<8x384xf32>
    %174 = tpu.matmul %173, %7, %cst_54 {dimension_numbers = #tpu.dot_dimension_numbers<[1], [0], [0], [1], [0, 0, 1, 1], [], []>} : vector<8x128xbf16>, vector<128x384xbf16>, vector<8x384xf32> -> vector<8x384xf32>
    %175 = arith.addf %174, %10 : vector<8x384xf32>
    %176 = vector.extract_strided_slice %172 {offsets = [0, 0], sizes = [8, 128], strides = [1, 1]} : vector<8x384xf32> to vector<8x128xf32>
    %177 = vector.extract_strided_slice %175 {offsets = [0, 0], sizes = [8, 128], strides = [1, 1]} : vector<8x384xf32> to vector<8x128xf32>
    %178 = arith.addf %176, %177 : vector<8x128xf32>
    %cst_55 = arith.constant 5.000000e-01 : f32
    %179 = vector.broadcast %cst_55 : f32 to vector<8x128xf32>
    %180 = arith.mulf %179, %178 : vector<8x128xf32>
    %181 = math.tanh %180 : vector<8x128xf32>
    %cst_56 = arith.constant 5.000000e-01 : f32
    %182 = vector.broadcast %cst_56 : f32 to vector<8x128xf32>
    %183 = arith.mulf %182, %181 : vector<8x128xf32>
    %cst_57 = arith.constant 5.000000e-01 : f32
    %184 = vector.broadcast %cst_57 : f32 to vector<8x128xf32>
    %185 = arith.addf %183, %184 : vector<8x128xf32>
    %186 = vector.extract_strided_slice %172 {offsets = [0, 128], sizes = [8, 128], strides = [1, 1]} : vector<8x384xf32> to vector<8x128xf32>
    %187 = vector.extract_strided_slice %175 {offsets = [0, 128], sizes = [8, 128], strides = [1, 1]} : vector<8x384xf32> to vector<8x128xf32>
    %188 = arith.addf %186, %187 : vector<8x128xf32>
    %cst_58 = arith.constant 5.000000e-01 : f32
    %189 = vector.broadcast %cst_58 : f32 to vector<8x128xf32>
    %190 = arith.mulf %189, %188 : vector<8x128xf32>
    %191 = math.tanh %190 : vector<8x128xf32>
    %cst_59 = arith.constant 5.000000e-01 : f32
    %192 = vector.broadcast %cst_59 : f32 to vector<8x128xf32>
    %193 = arith.mulf %192, %191 : vector<8x128xf32>
    %cst_60 = arith.constant 5.000000e-01 : f32
    %194 = vector.broadcast %cst_60 : f32 to vector<8x128xf32>
    %195 = arith.addf %193, %194 : vector<8x128xf32>
    %196 = vector.extract_strided_slice %172 {offsets = [0, 256], sizes = [8, 128], strides = [1, 1]} : vector<8x384xf32> to vector<8x128xf32>
    %197 = vector.extract_strided_slice %175 {offsets = [0, 256], sizes = [8, 128], strides = [1, 1]} : vector<8x384xf32> to vector<8x128xf32>
    %198 = arith.mulf %185, %197 : vector<8x128xf32>
    %199 = arith.addf %196, %198 : vector<8x128xf32>
    %200 = math.tanh %199 : vector<8x128xf32>
    %201 = arith.subf %171, %200 : vector<8x128xf32>
    %202 = arith.mulf %195, %201 : vector<8x128xf32>
    %203 = arith.addf %200, %202 : vector<8x128xf32>
    %c48 = arith.constant 48 : index
    %c0_61 = arith.constant 0 : index
    %204 = vector.load %arg8[%c48, %c0_61] : memref<224x384xf32, #tpu.memory_space<vmem>>, vector<8x384xf32>
    %205 = arith.truncf %203 : vector<8x128xf32> to vector<8x128xbf16>
    %cst_62 = arith.constant dense<0.000000e+00> : vector<8x384xf32>
    %206 = tpu.matmul %205, %7, %cst_62 {dimension_numbers = #tpu.dot_dimension_numbers<[1], [0], [0], [1], [0, 0, 1, 1], [], []>} : vector<8x128xbf16>, vector<128x384xbf16>, vector<8x384xf32> -> vector<8x384xf32>
    %207 = arith.addf %206, %10 : vector<8x384xf32>
    %208 = vector.extract_strided_slice %204 {offsets = [0, 0], sizes = [8, 128], strides = [1, 1]} : vector<8x384xf32> to vector<8x128xf32>
    %209 = vector.extract_strided_slice %207 {offsets = [0, 0], sizes = [8, 128], strides = [1, 1]} : vector<8x384xf32> to vector<8x128xf32>
    %210 = arith.addf %208, %209 : vector<8x128xf32>
    %cst_63 = arith.constant 5.000000e-01 : f32
    %211 = vector.broadcast %cst_63 : f32 to vector<8x128xf32>
    %212 = arith.mulf %211, %210 : vector<8x128xf32>
    %213 = math.tanh %212 : vector<8x128xf32>
    %cst_64 = arith.constant 5.000000e-01 : f32
    %214 = vector.broadcast %cst_64 : f32 to vector<8x128xf32>
    %215 = arith.mulf %214, %213 : vector<8x128xf32>
    %cst_65 = arith.constant 5.000000e-01 : f32
    %216 = vector.broadcast %cst_65 : f32 to vector<8x128xf32>
    %217 = arith.addf %215, %216 : vector<8x128xf32>
    %218 = vector.extract_strided_slice %204 {offsets = [0, 128], sizes = [8, 128], strides = [1, 1]} : vector<8x384xf32> to vector<8x128xf32>
    %219 = vector.extract_strided_slice %207 {offsets = [0, 128], sizes = [8, 128], strides = [1, 1]} : vector<8x384xf32> to vector<8x128xf32>
    %220 = arith.addf %218, %219 : vector<8x128xf32>
    %cst_66 = arith.constant 5.000000e-01 : f32
    %221 = vector.broadcast %cst_66 : f32 to vector<8x128xf32>
    %222 = arith.mulf %221, %220 : vector<8x128xf32>
    %223 = math.tanh %222 : vector<8x128xf32>
    %cst_67 = arith.constant 5.000000e-01 : f32
    %224 = vector.broadcast %cst_67 : f32 to vector<8x128xf32>
    %225 = arith.mulf %224, %223 : vector<8x128xf32>
    %cst_68 = arith.constant 5.000000e-01 : f32
    %226 = vector.broadcast %cst_68 : f32 to vector<8x128xf32>
    %227 = arith.addf %225, %226 : vector<8x128xf32>
    %228 = vector.extract_strided_slice %204 {offsets = [0, 256], sizes = [8, 128], strides = [1, 1]} : vector<8x384xf32> to vector<8x128xf32>
    %229 = vector.extract_strided_slice %207 {offsets = [0, 256], sizes = [8, 128], strides = [1, 1]} : vector<8x384xf32> to vector<8x128xf32>
    %230 = arith.mulf %217, %229 : vector<8x128xf32>
    %231 = arith.addf %228, %230 : vector<8x128xf32>
    %232 = math.tanh %231 : vector<8x128xf32>
    %233 = arith.subf %203, %232 : vector<8x128xf32>
    %234 = arith.mulf %227, %233 : vector<8x128xf32>
    %235 = arith.addf %232, %234 : vector<8x128xf32>
    %c56 = arith.constant 56 : index
    %c0_69 = arith.constant 0 : index
    %236 = vector.load %arg8[%c56, %c0_69] : memref<224x384xf32, #tpu.memory_space<vmem>>, vector<8x384xf32>
    %237 = arith.truncf %235 : vector<8x128xf32> to vector<8x128xbf16>
    %cst_70 = arith.constant dense<0.000000e+00> : vector<8x384xf32>
    %238 = tpu.matmul %237, %7, %cst_70 {dimension_numbers = #tpu.dot_dimension_numbers<[1], [0], [0], [1], [0, 0, 1, 1], [], []>} : vector<8x128xbf16>, vector<128x384xbf16>, vector<8x384xf32> -> vector<8x384xf32>
    %239 = arith.addf %238, %10 : vector<8x384xf32>
    %240 = vector.extract_strided_slice %236 {offsets = [0, 0], sizes = [8, 128], strides = [1, 1]} : vector<8x384xf32> to vector<8x128xf32>
    %241 = vector.extract_strided_slice %239 {offsets = [0, 0], sizes = [8, 128], strides = [1, 1]} : vector<8x384xf32> to vector<8x128xf32>
    %242 = arith.addf %240, %241 : vector<8x128xf32>
    %cst_71 = arith.constant 5.000000e-01 : f32
    %243 = vector.broadcast %cst_71 : f32 to vector<8x128xf32>
    %244 = arith.mulf %243, %242 : vector<8x128xf32>
    %245 = math.tanh %244 : vector<8x128xf32>
    %cst_72 = arith.constant 5.000000e-01 : f32
    %246 = vector.broadcast %cst_72 : f32 to vector<8x128xf32>
    %247 = arith.mulf %246, %245 : vector<8x128xf32>
    %cst_73 = arith.constant 5.000000e-01 : f32
    %248 = vector.broadcast %cst_73 : f32 to vector<8x128xf32>
    %249 = arith.addf %247, %248 : vector<8x128xf32>
    %250 = vector.extract_strided_slice %236 {offsets = [0, 128], sizes = [8, 128], strides = [1, 1]} : vector<8x384xf32> to vector<8x128xf32>
    %251 = vector.extract_strided_slice %239 {offsets = [0, 128], sizes = [8, 128], strides = [1, 1]} : vector<8x384xf32> to vector<8x128xf32>
    %252 = arith.addf %250, %251 : vector<8x128xf32>
    %cst_74 = arith.constant 5.000000e-01 : f32
    %253 = vector.broadcast %cst_74 : f32 to vector<8x128xf32>
    %254 = arith.mulf %253, %252 : vector<8x128xf32>
    %255 = math.tanh %254 : vector<8x128xf32>
    %cst_75 = arith.constant 5.000000e-01 : f32
    %256 = vector.broadcast %cst_75 : f32 to vector<8x128xf32>
    %257 = arith.mulf %256, %255 : vector<8x128xf32>
    %cst_76 = arith.constant 5.000000e-01 : f32
    %258 = vector.broadcast %cst_76 : f32 to vector<8x128xf32>
    %259 = arith.addf %257, %258 : vector<8x128xf32>
    %260 = vector.extract_strided_slice %236 {offsets = [0, 256], sizes = [8, 128], strides = [1, 1]} : vector<8x384xf32> to vector<8x128xf32>
    %261 = vector.extract_strided_slice %239 {offsets = [0, 256], sizes = [8, 128], strides = [1, 1]} : vector<8x384xf32> to vector<8x128xf32>
    %262 = arith.mulf %249, %261 : vector<8x128xf32>
    %263 = arith.addf %260, %262 : vector<8x128xf32>
    %264 = math.tanh %263 : vector<8x128xf32>
    %265 = arith.subf %235, %264 : vector<8x128xf32>
    %266 = arith.mulf %259, %265 : vector<8x128xf32>
    %267 = arith.addf %264, %266 : vector<8x128xf32>
    %c64 = arith.constant 64 : index
    %c0_77 = arith.constant 0 : index
    %268 = vector.load %arg8[%c64, %c0_77] : memref<224x384xf32, #tpu.memory_space<vmem>>, vector<8x384xf32>
    %269 = arith.truncf %267 : vector<8x128xf32> to vector<8x128xbf16>
    %cst_78 = arith.constant dense<0.000000e+00> : vector<8x384xf32>
    %270 = tpu.matmul %269, %7, %cst_78 {dimension_numbers = #tpu.dot_dimension_numbers<[1], [0], [0], [1], [0, 0, 1, 1], [], []>} : vector<8x128xbf16>, vector<128x384xbf16>, vector<8x384xf32> -> vector<8x384xf32>
    %271 = arith.addf %270, %10 : vector<8x384xf32>
    %272 = vector.extract_strided_slice %268 {offsets = [0, 0], sizes = [8, 128], strides = [1, 1]} : vector<8x384xf32> to vector<8x128xf32>
    %273 = vector.extract_strided_slice %271 {offsets = [0, 0], sizes = [8, 128], strides = [1, 1]} : vector<8x384xf32> to vector<8x128xf32>
    %274 = arith.addf %272, %273 : vector<8x128xf32>
    %cst_79 = arith.constant 5.000000e-01 : f32
    %275 = vector.broadcast %cst_79 : f32 to vector<8x128xf32>
    %276 = arith.mulf %275, %274 : vector<8x128xf32>
    %277 = math.tanh %276 : vector<8x128xf32>
    %cst_80 = arith.constant 5.000000e-01 : f32
    %278 = vector.broadcast %cst_80 : f32 to vector<8x128xf32>
    %279 = arith.mulf %278, %277 : vector<8x128xf32>
    %cst_81 = arith.constant 5.000000e-01 : f32
    %280 = vector.broadcast %cst_81 : f32 to vector<8x128xf32>
    %281 = arith.addf %279, %280 : vector<8x128xf32>
    %282 = vector.extract_strided_slice %268 {offsets = [0, 128], sizes = [8, 128], strides = [1, 1]} : vector<8x384xf32> to vector<8x128xf32>
    %283 = vector.extract_strided_slice %271 {offsets = [0, 128], sizes = [8, 128], strides = [1, 1]} : vector<8x384xf32> to vector<8x128xf32>
    %284 = arith.addf %282, %283 : vector<8x128xf32>
    %cst_82 = arith.constant 5.000000e-01 : f32
    %285 = vector.broadcast %cst_82 : f32 to vector<8x128xf32>
    %286 = arith.mulf %285, %284 : vector<8x128xf32>
    %287 = math.tanh %286 : vector<8x128xf32>
    %cst_83 = arith.constant 5.000000e-01 : f32
    %288 = vector.broadcast %cst_83 : f32 to vector<8x128xf32>
    %289 = arith.mulf %288, %287 : vector<8x128xf32>
    %cst_84 = arith.constant 5.000000e-01 : f32
    %290 = vector.broadcast %cst_84 : f32 to vector<8x128xf32>
    %291 = arith.addf %289, %290 : vector<8x128xf32>
    %292 = vector.extract_strided_slice %268 {offsets = [0, 256], sizes = [8, 128], strides = [1, 1]} : vector<8x384xf32> to vector<8x128xf32>
    %293 = vector.extract_strided_slice %271 {offsets = [0, 256], sizes = [8, 128], strides = [1, 1]} : vector<8x384xf32> to vector<8x128xf32>
    %294 = arith.mulf %281, %293 : vector<8x128xf32>
    %295 = arith.addf %292, %294 : vector<8x128xf32>
    %296 = math.tanh %295 : vector<8x128xf32>
    %297 = arith.subf %267, %296 : vector<8x128xf32>
    %298 = arith.mulf %291, %297 : vector<8x128xf32>
    %299 = arith.addf %296, %298 : vector<8x128xf32>
    %c72 = arith.constant 72 : index
    %c0_85 = arith.constant 0 : index
    %300 = vector.load %arg8[%c72, %c0_85] : memref<224x384xf32, #tpu.memory_space<vmem>>, vector<8x384xf32>
    %301 = arith.truncf %299 : vector<8x128xf32> to vector<8x128xbf16>
    %cst_86 = arith.constant dense<0.000000e+00> : vector<8x384xf32>
    %302 = tpu.matmul %301, %7, %cst_86 {dimension_numbers = #tpu.dot_dimension_numbers<[1], [0], [0], [1], [0, 0, 1, 1], [], []>} : vector<8x128xbf16>, vector<128x384xbf16>, vector<8x384xf32> -> vector<8x384xf32>
    %303 = arith.addf %302, %10 : vector<8x384xf32>
    %304 = vector.extract_strided_slice %300 {offsets = [0, 0], sizes = [8, 128], strides = [1, 1]} : vector<8x384xf32> to vector<8x128xf32>
    %305 = vector.extract_strided_slice %303 {offsets = [0, 0], sizes = [8, 128], strides = [1, 1]} : vector<8x384xf32> to vector<8x128xf32>
    %306 = arith.addf %304, %305 : vector<8x128xf32>
    %cst_87 = arith.constant 5.000000e-01 : f32
    %307 = vector.broadcast %cst_87 : f32 to vector<8x128xf32>
    %308 = arith.mulf %307, %306 : vector<8x128xf32>
    %309 = math.tanh %308 : vector<8x128xf32>
    %cst_88 = arith.constant 5.000000e-01 : f32
    %310 = vector.broadcast %cst_88 : f32 to vector<8x128xf32>
    %311 = arith.mulf %310, %309 : vector<8x128xf32>
    %cst_89 = arith.constant 5.000000e-01 : f32
    %312 = vector.broadcast %cst_89 : f32 to vector<8x128xf32>
    %313 = arith.addf %311, %312 : vector<8x128xf32>
    %314 = vector.extract_strided_slice %300 {offsets = [0, 128], sizes = [8, 128], strides = [1, 1]} : vector<8x384xf32> to vector<8x128xf32>
    %315 = vector.extract_strided_slice %303 {offsets = [0, 128], sizes = [8, 128], strides = [1, 1]} : vector<8x384xf32> to vector<8x128xf32>
    %316 = arith.addf %314, %315 : vector<8x128xf32>
    %cst_90 = arith.constant 5.000000e-01 : f32
    %317 = vector.broadcast %cst_90 : f32 to vector<8x128xf32>
    %318 = arith.mulf %317, %316 : vector<8x128xf32>
    %319 = math.tanh %318 : vector<8x128xf32>
    %cst_91 = arith.constant 5.000000e-01 : f32
    %320 = vector.broadcast %cst_91 : f32 to vector<8x128xf32>
    %321 = arith.mulf %320, %319 : vector<8x128xf32>
    %cst_92 = arith.constant 5.000000e-01 : f32
    %322 = vector.broadcast %cst_92 : f32 to vector<8x128xf32>
    %323 = arith.addf %321, %322 : vector<8x128xf32>
    %324 = vector.extract_strided_slice %300 {offsets = [0, 256], sizes = [8, 128], strides = [1, 1]} : vector<8x384xf32> to vector<8x128xf32>
    %325 = vector.extract_strided_slice %303 {offsets = [0, 256], sizes = [8, 128], strides = [1, 1]} : vector<8x384xf32> to vector<8x128xf32>
    %326 = arith.mulf %313, %325 : vector<8x128xf32>
    %327 = arith.addf %324, %326 : vector<8x128xf32>
    %328 = math.tanh %327 : vector<8x128xf32>
    %329 = arith.subf %299, %328 : vector<8x128xf32>
    %330 = arith.mulf %323, %329 : vector<8x128xf32>
    %331 = arith.addf %328, %330 : vector<8x128xf32>
    %c80 = arith.constant 80 : index
    %c0_93 = arith.constant 0 : index
    %332 = vector.load %arg8[%c80, %c0_93] : memref<224x384xf32, #tpu.memory_space<vmem>>, vector<8x384xf32>
    %333 = arith.truncf %331 : vector<8x128xf32> to vector<8x128xbf16>
    %cst_94 = arith.constant dense<0.000000e+00> : vector<8x384xf32>
    %334 = tpu.matmul %333, %7, %cst_94 {dimension_numbers = #tpu.dot_dimension_numbers<[1], [0], [0], [1], [0, 0, 1, 1], [], []>} : vector<8x128xbf16>, vector<128x384xbf16>, vector<8x384xf32> -> vector<8x384xf32>
    %335 = arith.addf %334, %10 : vector<8x384xf32>
    %336 = vector.extract_strided_slice %332 {offsets = [0, 0], sizes = [8, 128], strides = [1, 1]} : vector<8x384xf32> to vector<8x128xf32>
    %337 = vector.extract_strided_slice %335 {offsets = [0, 0], sizes = [8, 128], strides = [1, 1]} : vector<8x384xf32> to vector<8x128xf32>
    %338 = arith.addf %336, %337 : vector<8x128xf32>
    %cst_95 = arith.constant 5.000000e-01 : f32
    %339 = vector.broadcast %cst_95 : f32 to vector<8x128xf32>
    %340 = arith.mulf %339, %338 : vector<8x128xf32>
    %341 = math.tanh %340 : vector<8x128xf32>
    %cst_96 = arith.constant 5.000000e-01 : f32
    %342 = vector.broadcast %cst_96 : f32 to vector<8x128xf32>
    %343 = arith.mulf %342, %341 : vector<8x128xf32>
    %cst_97 = arith.constant 5.000000e-01 : f32
    %344 = vector.broadcast %cst_97 : f32 to vector<8x128xf32>
    %345 = arith.addf %343, %344 : vector<8x128xf32>
    %346 = vector.extract_strided_slice %332 {offsets = [0, 128], sizes = [8, 128], strides = [1, 1]} : vector<8x384xf32> to vector<8x128xf32>
    %347 = vector.extract_strided_slice %335 {offsets = [0, 128], sizes = [8, 128], strides = [1, 1]} : vector<8x384xf32> to vector<8x128xf32>
    %348 = arith.addf %346, %347 : vector<8x128xf32>
    %cst_98 = arith.constant 5.000000e-01 : f32
    %349 = vector.broadcast %cst_98 : f32 to vector<8x128xf32>
    %350 = arith.mulf %349, %348 : vector<8x128xf32>
    %351 = math.tanh %350 : vector<8x128xf32>
    %cst_99 = arith.constant 5.000000e-01 : f32
    %352 = vector.broadcast %cst_99 : f32 to vector<8x128xf32>
    %353 = arith.mulf %352, %351 : vector<8x128xf32>
    %cst_100 = arith.constant 5.000000e-01 : f32
    %354 = vector.broadcast %cst_100 : f32 to vector<8x128xf32>
    %355 = arith.addf %353, %354 : vector<8x128xf32>
    %356 = vector.extract_strided_slice %332 {offsets = [0, 256], sizes = [8, 128], strides = [1, 1]} : vector<8x384xf32> to vector<8x128xf32>
    %357 = vector.extract_strided_slice %335 {offsets = [0, 256], sizes = [8, 128], strides = [1, 1]} : vector<8x384xf32> to vector<8x128xf32>
    %358 = arith.mulf %345, %357 : vector<8x128xf32>
    %359 = arith.addf %356, %358 : vector<8x128xf32>
    %360 = math.tanh %359 : vector<8x128xf32>
    %361 = arith.subf %331, %360 : vector<8x128xf32>
    %362 = arith.mulf %355, %361 : vector<8x128xf32>
    %363 = arith.addf %360, %362 : vector<8x128xf32>
    %c88 = arith.constant 88 : index
    %c0_101 = arith.constant 0 : index
    %364 = vector.load %arg8[%c88, %c0_101] : memref<224x384xf32, #tpu.memory_space<vmem>>, vector<8x384xf32>
    %365 = arith.truncf %363 : vector<8x128xf32> to vector<8x128xbf16>
    %cst_102 = arith.constant dense<0.000000e+00> : vector<8x384xf32>
    %366 = tpu.matmul %365, %7, %cst_102 {dimension_numbers = #tpu.dot_dimension_numbers<[1], [0], [0], [1], [0, 0, 1, 1], [], []>} : vector<8x128xbf16>, vector<128x384xbf16>, vector<8x384xf32> -> vector<8x384xf32>
    %367 = arith.addf %366, %10 : vector<8x384xf32>
    %368 = vector.extract_strided_slice %364 {offsets = [0, 0], sizes = [8, 128], strides = [1, 1]} : vector<8x384xf32> to vector<8x128xf32>
    %369 = vector.extract_strided_slice %367 {offsets = [0, 0], sizes = [8, 128], strides = [1, 1]} : vector<8x384xf32> to vector<8x128xf32>
    %370 = arith.addf %368, %369 : vector<8x128xf32>
    %cst_103 = arith.constant 5.000000e-01 : f32
    %371 = vector.broadcast %cst_103 : f32 to vector<8x128xf32>
    %372 = arith.mulf %371, %370 : vector<8x128xf32>
    %373 = math.tanh %372 : vector<8x128xf32>
    %cst_104 = arith.constant 5.000000e-01 : f32
    %374 = vector.broadcast %cst_104 : f32 to vector<8x128xf32>
    %375 = arith.mulf %374, %373 : vector<8x128xf32>
    %cst_105 = arith.constant 5.000000e-01 : f32
    %376 = vector.broadcast %cst_105 : f32 to vector<8x128xf32>
    %377 = arith.addf %375, %376 : vector<8x128xf32>
    %378 = vector.extract_strided_slice %364 {offsets = [0, 128], sizes = [8, 128], strides = [1, 1]} : vector<8x384xf32> to vector<8x128xf32>
    %379 = vector.extract_strided_slice %367 {offsets = [0, 128], sizes = [8, 128], strides = [1, 1]} : vector<8x384xf32> to vector<8x128xf32>
    %380 = arith.addf %378, %379 : vector<8x128xf32>
    %cst_106 = arith.constant 5.000000e-01 : f32
    %381 = vector.broadcast %cst_106 : f32 to vector<8x128xf32>
    %382 = arith.mulf %381, %380 : vector<8x128xf32>
    %383 = math.tanh %382 : vector<8x128xf32>
    %cst_107 = arith.constant 5.000000e-01 : f32
    %384 = vector.broadcast %cst_107 : f32 to vector<8x128xf32>
    %385 = arith.mulf %384, %383 : vector<8x128xf32>
    %cst_108 = arith.constant 5.000000e-01 : f32
    %386 = vector.broadcast %cst_108 : f32 to vector<8x128xf32>
    %387 = arith.addf %385, %386 : vector<8x128xf32>
    %388 = vector.extract_strided_slice %364 {offsets = [0, 256], sizes = [8, 128], strides = [1, 1]} : vector<8x384xf32> to vector<8x128xf32>
    %389 = vector.extract_strided_slice %367 {offsets = [0, 256], sizes = [8, 128], strides = [1, 1]} : vector<8x384xf32> to vector<8x128xf32>
    %390 = arith.mulf %377, %389 : vector<8x128xf32>
    %391 = arith.addf %388, %390 : vector<8x128xf32>
    %392 = math.tanh %391 : vector<8x128xf32>
    %393 = arith.subf %363, %392 : vector<8x128xf32>
    %394 = arith.mulf %387, %393 : vector<8x128xf32>
    %395 = arith.addf %392, %394 : vector<8x128xf32>
    %c96 = arith.constant 96 : index
    %c0_109 = arith.constant 0 : index
    %396 = vector.load %arg8[%c96, %c0_109] : memref<224x384xf32, #tpu.memory_space<vmem>>, vector<8x384xf32>
    %397 = arith.truncf %395 : vector<8x128xf32> to vector<8x128xbf16>
    %cst_110 = arith.constant dense<0.000000e+00> : vector<8x384xf32>
    %398 = tpu.matmul %397, %7, %cst_110 {dimension_numbers = #tpu.dot_dimension_numbers<[1], [0], [0], [1], [0, 0, 1, 1], [], []>} : vector<8x128xbf16>, vector<128x384xbf16>, vector<8x384xf32> -> vector<8x384xf32>
    %399 = arith.addf %398, %10 : vector<8x384xf32>
    %400 = vector.extract_strided_slice %396 {offsets = [0, 0], sizes = [8, 128], strides = [1, 1]} : vector<8x384xf32> to vector<8x128xf32>
    %401 = vector.extract_strided_slice %399 {offsets = [0, 0], sizes = [8, 128], strides = [1, 1]} : vector<8x384xf32> to vector<8x128xf32>
    %402 = arith.addf %400, %401 : vector<8x128xf32>
    %cst_111 = arith.constant 5.000000e-01 : f32
    %403 = vector.broadcast %cst_111 : f32 to vector<8x128xf32>
    %404 = arith.mulf %403, %402 : vector<8x128xf32>
    %405 = math.tanh %404 : vector<8x128xf32>
    %cst_112 = arith.constant 5.000000e-01 : f32
    %406 = vector.broadcast %cst_112 : f32 to vector<8x128xf32>
    %407 = arith.mulf %406, %405 : vector<8x128xf32>
    %cst_113 = arith.constant 5.000000e-01 : f32
    %408 = vector.broadcast %cst_113 : f32 to vector<8x128xf32>
    %409 = arith.addf %407, %408 : vector<8x128xf32>
    %410 = vector.extract_strided_slice %396 {offsets = [0, 128], sizes = [8, 128], strides = [1, 1]} : vector<8x384xf32> to vector<8x128xf32>
    %411 = vector.extract_strided_slice %399 {offsets = [0, 128], sizes = [8, 128], strides = [1, 1]} : vector<8x384xf32> to vector<8x128xf32>
    %412 = arith.addf %410, %411 : vector<8x128xf32>
    %cst_114 = arith.constant 5.000000e-01 : f32
    %413 = vector.broadcast %cst_114 : f32 to vector<8x128xf32>
    %414 = arith.mulf %413, %412 : vector<8x128xf32>
    %415 = math.tanh %414 : vector<8x128xf32>
    %cst_115 = arith.constant 5.000000e-01 : f32
    %416 = vector.broadcast %cst_115 : f32 to vector<8x128xf32>
    %417 = arith.mulf %416, %415 : vector<8x128xf32>
    %cst_116 = arith.constant 5.000000e-01 : f32
    %418 = vector.broadcast %cst_116 : f32 to vector<8x128xf32>
    %419 = arith.addf %417, %418 : vector<8x128xf32>
    %420 = vector.extract_strided_slice %396 {offsets = [0, 256], sizes = [8, 128], strides = [1, 1]} : vector<8x384xf32> to vector<8x128xf32>
    %421 = vector.extract_strided_slice %399 {offsets = [0, 256], sizes = [8, 128], strides = [1, 1]} : vector<8x384xf32> to vector<8x128xf32>
    %422 = arith.mulf %409, %421 : vector<8x128xf32>
    %423 = arith.addf %420, %422 : vector<8x128xf32>
    %424 = math.tanh %423 : vector<8x128xf32>
    %425 = arith.subf %395, %424 : vector<8x128xf32>
    %426 = arith.mulf %419, %425 : vector<8x128xf32>
    %427 = arith.addf %424, %426 : vector<8x128xf32>
    %c104 = arith.constant 104 : index
    %c0_117 = arith.constant 0 : index
    %428 = vector.load %arg8[%c104, %c0_117] : memref<224x384xf32, #tpu.memory_space<vmem>>, vector<8x384xf32>
    %429 = arith.truncf %427 : vector<8x128xf32> to vector<8x128xbf16>
    %cst_118 = arith.constant dense<0.000000e+00> : vector<8x384xf32>
    %430 = tpu.matmul %429, %7, %cst_118 {dimension_numbers = #tpu.dot_dimension_numbers<[1], [0], [0], [1], [0, 0, 1, 1], [], []>} : vector<8x128xbf16>, vector<128x384xbf16>, vector<8x384xf32> -> vector<8x384xf32>
    %431 = arith.addf %430, %10 : vector<8x384xf32>
    %432 = vector.extract_strided_slice %428 {offsets = [0, 0], sizes = [8, 128], strides = [1, 1]} : vector<8x384xf32> to vector<8x128xf32>
    %433 = vector.extract_strided_slice %431 {offsets = [0, 0], sizes = [8, 128], strides = [1, 1]} : vector<8x384xf32> to vector<8x128xf32>
    %434 = arith.addf %432, %433 : vector<8x128xf32>
    %cst_119 = arith.constant 5.000000e-01 : f32
    %435 = vector.broadcast %cst_119 : f32 to vector<8x128xf32>
    %436 = arith.mulf %435, %434 : vector<8x128xf32>
    %437 = math.tanh %436 : vector<8x128xf32>
    %cst_120 = arith.constant 5.000000e-01 : f32
    %438 = vector.broadcast %cst_120 : f32 to vector<8x128xf32>
    %439 = arith.mulf %438, %437 : vector<8x128xf32>
    %cst_121 = arith.constant 5.000000e-01 : f32
    %440 = vector.broadcast %cst_121 : f32 to vector<8x128xf32>
    %441 = arith.addf %439, %440 : vector<8x128xf32>
    %442 = vector.extract_strided_slice %428 {offsets = [0, 128], sizes = [8, 128], strides = [1, 1]} : vector<8x384xf32> to vector<8x128xf32>
    %443 = vector.extract_strided_slice %431 {offsets = [0, 128], sizes = [8, 128], strides = [1, 1]} : vector<8x384xf32> to vector<8x128xf32>
    %444 = arith.addf %442, %443 : vector<8x128xf32>
    %cst_122 = arith.constant 5.000000e-01 : f32
    %445 = vector.broadcast %cst_122 : f32 to vector<8x128xf32>
    %446 = arith.mulf %445, %444 : vector<8x128xf32>
    %447 = math.tanh %446 : vector<8x128xf32>
    %cst_123 = arith.constant 5.000000e-01 : f32
    %448 = vector.broadcast %cst_123 : f32 to vector<8x128xf32>
    %449 = arith.mulf %448, %447 : vector<8x128xf32>
    %cst_124 = arith.constant 5.000000e-01 : f32
    %450 = vector.broadcast %cst_124 : f32 to vector<8x128xf32>
    %451 = arith.addf %449, %450 : vector<8x128xf32>
    %452 = vector.extract_strided_slice %428 {offsets = [0, 256], sizes = [8, 128], strides = [1, 1]} : vector<8x384xf32> to vector<8x128xf32>
    %453 = vector.extract_strided_slice %431 {offsets = [0, 256], sizes = [8, 128], strides = [1, 1]} : vector<8x384xf32> to vector<8x128xf32>
    %454 = arith.mulf %441, %453 : vector<8x128xf32>
    %455 = arith.addf %452, %454 : vector<8x128xf32>
    %456 = math.tanh %455 : vector<8x128xf32>
    %457 = arith.subf %427, %456 : vector<8x128xf32>
    %458 = arith.mulf %451, %457 : vector<8x128xf32>
    %459 = arith.addf %456, %458 : vector<8x128xf32>
    %c112 = arith.constant 112 : index
    %c0_125 = arith.constant 0 : index
    %460 = vector.load %arg8[%c112, %c0_125] : memref<224x384xf32, #tpu.memory_space<vmem>>, vector<8x384xf32>
    %461 = arith.truncf %459 : vector<8x128xf32> to vector<8x128xbf16>
    %cst_126 = arith.constant dense<0.000000e+00> : vector<8x384xf32>
    %462 = tpu.matmul %461, %7, %cst_126 {dimension_numbers = #tpu.dot_dimension_numbers<[1], [0], [0], [1], [0, 0, 1, 1], [], []>} : vector<8x128xbf16>, vector<128x384xbf16>, vector<8x384xf32> -> vector<8x384xf32>
    %463 = arith.addf %462, %10 : vector<8x384xf32>
    %464 = vector.extract_strided_slice %460 {offsets = [0, 0], sizes = [8, 128], strides = [1, 1]} : vector<8x384xf32> to vector<8x128xf32>
    %465 = vector.extract_strided_slice %463 {offsets = [0, 0], sizes = [8, 128], strides = [1, 1]} : vector<8x384xf32> to vector<8x128xf32>
    %466 = arith.addf %464, %465 : vector<8x128xf32>
    %cst_127 = arith.constant 5.000000e-01 : f32
    %467 = vector.broadcast %cst_127 : f32 to vector<8x128xf32>
    %468 = arith.mulf %467, %466 : vector<8x128xf32>
    %469 = math.tanh %468 : vector<8x128xf32>
    %cst_128 = arith.constant 5.000000e-01 : f32
    %470 = vector.broadcast %cst_128 : f32 to vector<8x128xf32>
    %471 = arith.mulf %470, %469 : vector<8x128xf32>
    %cst_129 = arith.constant 5.000000e-01 : f32
    %472 = vector.broadcast %cst_129 : f32 to vector<8x128xf32>
    %473 = arith.addf %471, %472 : vector<8x128xf32>
    %474 = vector.extract_strided_slice %460 {offsets = [0, 128], sizes = [8, 128], strides = [1, 1]} : vector<8x384xf32> to vector<8x128xf32>
    %475 = vector.extract_strided_slice %463 {offsets = [0, 128], sizes = [8, 128], strides = [1, 1]} : vector<8x384xf32> to vector<8x128xf32>
    %476 = arith.addf %474, %475 : vector<8x128xf32>
    %cst_130 = arith.constant 5.000000e-01 : f32
    %477 = vector.broadcast %cst_130 : f32 to vector<8x128xf32>
    %478 = arith.mulf %477, %476 : vector<8x128xf32>
    %479 = math.tanh %478 : vector<8x128xf32>
    %cst_131 = arith.constant 5.000000e-01 : f32
    %480 = vector.broadcast %cst_131 : f32 to vector<8x128xf32>
    %481 = arith.mulf %480, %479 : vector<8x128xf32>
    %cst_132 = arith.constant 5.000000e-01 : f32
    %482 = vector.broadcast %cst_132 : f32 to vector<8x128xf32>
    %483 = arith.addf %481, %482 : vector<8x128xf32>
    %484 = vector.extract_strided_slice %460 {offsets = [0, 256], sizes = [8, 128], strides = [1, 1]} : vector<8x384xf32> to vector<8x128xf32>
    %485 = vector.extract_strided_slice %463 {offsets = [0, 256], sizes = [8, 128], strides = [1, 1]} : vector<8x384xf32> to vector<8x128xf32>
    %486 = arith.mulf %473, %485 : vector<8x128xf32>
    %487 = arith.addf %484, %486 : vector<8x128xf32>
    %488 = math.tanh %487 : vector<8x128xf32>
    %489 = arith.subf %459, %488 : vector<8x128xf32>
    %490 = arith.mulf %483, %489 : vector<8x128xf32>
    %491 = arith.addf %488, %490 : vector<8x128xf32>
    %c120 = arith.constant 120 : index
    %c0_133 = arith.constant 0 : index
    %492 = vector.load %arg8[%c120, %c0_133] : memref<224x384xf32, #tpu.memory_space<vmem>>, vector<8x384xf32>
    %493 = arith.truncf %491 : vector<8x128xf32> to vector<8x128xbf16>
    %cst_134 = arith.constant dense<0.000000e+00> : vector<8x384xf32>
    %494 = tpu.matmul %493, %7, %cst_134 {dimension_numbers = #tpu.dot_dimension_numbers<[1], [0], [0], [1], [0, 0, 1, 1], [], []>} : vector<8x128xbf16>, vector<128x384xbf16>, vector<8x384xf32> -> vector<8x384xf32>
    %495 = arith.addf %494, %10 : vector<8x384xf32>
    %496 = vector.extract_strided_slice %492 {offsets = [0, 0], sizes = [8, 128], strides = [1, 1]} : vector<8x384xf32> to vector<8x128xf32>
    %497 = vector.extract_strided_slice %495 {offsets = [0, 0], sizes = [8, 128], strides = [1, 1]} : vector<8x384xf32> to vector<8x128xf32>
    %498 = arith.addf %496, %497 : vector<8x128xf32>
    %cst_135 = arith.constant 5.000000e-01 : f32
    %499 = vector.broadcast %cst_135 : f32 to vector<8x128xf32>
    %500 = arith.mulf %499, %498 : vector<8x128xf32>
    %501 = math.tanh %500 : vector<8x128xf32>
    %cst_136 = arith.constant 5.000000e-01 : f32
    %502 = vector.broadcast %cst_136 : f32 to vector<8x128xf32>
    %503 = arith.mulf %502, %501 : vector<8x128xf32>
    %cst_137 = arith.constant 5.000000e-01 : f32
    %504 = vector.broadcast %cst_137 : f32 to vector<8x128xf32>
    %505 = arith.addf %503, %504 : vector<8x128xf32>
    %506 = vector.extract_strided_slice %492 {offsets = [0, 128], sizes = [8, 128], strides = [1, 1]} : vector<8x384xf32> to vector<8x128xf32>
    %507 = vector.extract_strided_slice %495 {offsets = [0, 128], sizes = [8, 128], strides = [1, 1]} : vector<8x384xf32> to vector<8x128xf32>
    %508 = arith.addf %506, %507 : vector<8x128xf32>
    %cst_138 = arith.constant 5.000000e-01 : f32
    %509 = vector.broadcast %cst_138 : f32 to vector<8x128xf32>
    %510 = arith.mulf %509, %508 : vector<8x128xf32>
    %511 = math.tanh %510 : vector<8x128xf32>
    %cst_139 = arith.constant 5.000000e-01 : f32
    %512 = vector.broadcast %cst_139 : f32 to vector<8x128xf32>
    %513 = arith.mulf %512, %511 : vector<8x128xf32>
    %cst_140 = arith.constant 5.000000e-01 : f32
    %514 = vector.broadcast %cst_140 : f32 to vector<8x128xf32>
    %515 = arith.addf %513, %514 : vector<8x128xf32>
    %516 = vector.extract_strided_slice %492 {offsets = [0, 256], sizes = [8, 128], strides = [1, 1]} : vector<8x384xf32> to vector<8x128xf32>
    %517 = vector.extract_strided_slice %495 {offsets = [0, 256], sizes = [8, 128], strides = [1, 1]} : vector<8x384xf32> to vector<8x128xf32>
    %518 = arith.mulf %505, %517 : vector<8x128xf32>
    %519 = arith.addf %516, %518 : vector<8x128xf32>
    %520 = math.tanh %519 : vector<8x128xf32>
    %521 = arith.subf %491, %520 : vector<8x128xf32>
    %522 = arith.mulf %515, %521 : vector<8x128xf32>
    %523 = arith.addf %520, %522 : vector<8x128xf32>
    %c128 = arith.constant 128 : index
    %c0_141 = arith.constant 0 : index
    %524 = vector.load %arg8[%c128, %c0_141] : memref<224x384xf32, #tpu.memory_space<vmem>>, vector<8x384xf32>
    %525 = arith.truncf %523 : vector<8x128xf32> to vector<8x128xbf16>
    %cst_142 = arith.constant dense<0.000000e+00> : vector<8x384xf32>
    %526 = tpu.matmul %525, %7, %cst_142 {dimension_numbers = #tpu.dot_dimension_numbers<[1], [0], [0], [1], [0, 0, 1, 1], [], []>} : vector<8x128xbf16>, vector<128x384xbf16>, vector<8x384xf32> -> vector<8x384xf32>
    %527 = arith.addf %526, %10 : vector<8x384xf32>
    %528 = vector.extract_strided_slice %524 {offsets = [0, 0], sizes = [8, 128], strides = [1, 1]} : vector<8x384xf32> to vector<8x128xf32>
    %529 = vector.extract_strided_slice %527 {offsets = [0, 0], sizes = [8, 128], strides = [1, 1]} : vector<8x384xf32> to vector<8x128xf32>
    %530 = arith.addf %528, %529 : vector<8x128xf32>
    %cst_143 = arith.constant 5.000000e-01 : f32
    %531 = vector.broadcast %cst_143 : f32 to vector<8x128xf32>
    %532 = arith.mulf %531, %530 : vector<8x128xf32>
    %533 = math.tanh %532 : vector<8x128xf32>
    %cst_144 = arith.constant 5.000000e-01 : f32
    %534 = vector.broadcast %cst_144 : f32 to vector<8x128xf32>
    %535 = arith.mulf %534, %533 : vector<8x128xf32>
    %cst_145 = arith.constant 5.000000e-01 : f32
    %536 = vector.broadcast %cst_145 : f32 to vector<8x128xf32>
    %537 = arith.addf %535, %536 : vector<8x128xf32>
    %538 = vector.extract_strided_slice %524 {offsets = [0, 128], sizes = [8, 128], strides = [1, 1]} : vector<8x384xf32> to vector<8x128xf32>
    %539 = vector.extract_strided_slice %527 {offsets = [0, 128], sizes = [8, 128], strides = [1, 1]} : vector<8x384xf32> to vector<8x128xf32>
    %540 = arith.addf %538, %539 : vector<8x128xf32>
    %cst_146 = arith.constant 5.000000e-01 : f32
    %541 = vector.broadcast %cst_146 : f32 to vector<8x128xf32>
    %542 = arith.mulf %541, %540 : vector<8x128xf32>
    %543 = math.tanh %542 : vector<8x128xf32>
    %cst_147 = arith.constant 5.000000e-01 : f32
    %544 = vector.broadcast %cst_147 : f32 to vector<8x128xf32>
    %545 = arith.mulf %544, %543 : vector<8x128xf32>
    %cst_148 = arith.constant 5.000000e-01 : f32
    %546 = vector.broadcast %cst_148 : f32 to vector<8x128xf32>
    %547 = arith.addf %545, %546 : vector<8x128xf32>
    %548 = vector.extract_strided_slice %524 {offsets = [0, 256], sizes = [8, 128], strides = [1, 1]} : vector<8x384xf32> to vector<8x128xf32>
    %549 = vector.extract_strided_slice %527 {offsets = [0, 256], sizes = [8, 128], strides = [1, 1]} : vector<8x384xf32> to vector<8x128xf32>
    %550 = arith.mulf %537, %549 : vector<8x128xf32>
    %551 = arith.addf %548, %550 : vector<8x128xf32>
    %552 = math.tanh %551 : vector<8x128xf32>
    %553 = arith.subf %523, %552 : vector<8x128xf32>
    %554 = arith.mulf %547, %553 : vector<8x128xf32>
    %555 = arith.addf %552, %554 : vector<8x128xf32>
    %c136 = arith.constant 136 : index
    %c0_149 = arith.constant 0 : index
    %556 = vector.load %arg8[%c136, %c0_149] : memref<224x384xf32, #tpu.memory_space<vmem>>, vector<8x384xf32>
    %557 = arith.truncf %555 : vector<8x128xf32> to vector<8x128xbf16>
    %cst_150 = arith.constant dense<0.000000e+00> : vector<8x384xf32>
    %558 = tpu.matmul %557, %7, %cst_150 {dimension_numbers = #tpu.dot_dimension_numbers<[1], [0], [0], [1], [0, 0, 1, 1], [], []>} : vector<8x128xbf16>, vector<128x384xbf16>, vector<8x384xf32> -> vector<8x384xf32>
    %559 = arith.addf %558, %10 : vector<8x384xf32>
    %560 = vector.extract_strided_slice %556 {offsets = [0, 0], sizes = [8, 128], strides = [1, 1]} : vector<8x384xf32> to vector<8x128xf32>
    %561 = vector.extract_strided_slice %559 {offsets = [0, 0], sizes = [8, 128], strides = [1, 1]} : vector<8x384xf32> to vector<8x128xf32>
    %562 = arith.addf %560, %561 : vector<8x128xf32>
    %cst_151 = arith.constant 5.000000e-01 : f32
    %563 = vector.broadcast %cst_151 : f32 to vector<8x128xf32>
    %564 = arith.mulf %563, %562 : vector<8x128xf32>
    %565 = math.tanh %564 : vector<8x128xf32>
    %cst_152 = arith.constant 5.000000e-01 : f32
    %566 = vector.broadcast %cst_152 : f32 to vector<8x128xf32>
    %567 = arith.mulf %566, %565 : vector<8x128xf32>
    %cst_153 = arith.constant 5.000000e-01 : f32
    %568 = vector.broadcast %cst_153 : f32 to vector<8x128xf32>
    %569 = arith.addf %567, %568 : vector<8x128xf32>
    %570 = vector.extract_strided_slice %556 {offsets = [0, 128], sizes = [8, 128], strides = [1, 1]} : vector<8x384xf32> to vector<8x128xf32>
    %571 = vector.extract_strided_slice %559 {offsets = [0, 128], sizes = [8, 128], strides = [1, 1]} : vector<8x384xf32> to vector<8x128xf32>
    %572 = arith.addf %570, %571 : vector<8x128xf32>
    %cst_154 = arith.constant 5.000000e-01 : f32
    %573 = vector.broadcast %cst_154 : f32 to vector<8x128xf32>
    %574 = arith.mulf %573, %572 : vector<8x128xf32>
    %575 = math.tanh %574 : vector<8x128xf32>
    %cst_155 = arith.constant 5.000000e-01 : f32
    %576 = vector.broadcast %cst_155 : f32 to vector<8x128xf32>
    %577 = arith.mulf %576, %575 : vector<8x128xf32>
    %cst_156 = arith.constant 5.000000e-01 : f32
    %578 = vector.broadcast %cst_156 : f32 to vector<8x128xf32>
    %579 = arith.addf %577, %578 : vector<8x128xf32>
    %580 = vector.extract_strided_slice %556 {offsets = [0, 256], sizes = [8, 128], strides = [1, 1]} : vector<8x384xf32> to vector<8x128xf32>
    %581 = vector.extract_strided_slice %559 {offsets = [0, 256], sizes = [8, 128], strides = [1, 1]} : vector<8x384xf32> to vector<8x128xf32>
    %582 = arith.mulf %569, %581 : vector<8x128xf32>
    %583 = arith.addf %580, %582 : vector<8x128xf32>
    %584 = math.tanh %583 : vector<8x128xf32>
    %585 = arith.subf %555, %584 : vector<8x128xf32>
    %586 = arith.mulf %579, %585 : vector<8x128xf32>
    %587 = arith.addf %584, %586 : vector<8x128xf32>
    %c144 = arith.constant 144 : index
    %c0_157 = arith.constant 0 : index
    %588 = vector.load %arg8[%c144, %c0_157] : memref<224x384xf32, #tpu.memory_space<vmem>>, vector<8x384xf32>
    %589 = arith.truncf %587 : vector<8x128xf32> to vector<8x128xbf16>
    %cst_158 = arith.constant dense<0.000000e+00> : vector<8x384xf32>
    %590 = tpu.matmul %589, %7, %cst_158 {dimension_numbers = #tpu.dot_dimension_numbers<[1], [0], [0], [1], [0, 0, 1, 1], [], []>} : vector<8x128xbf16>, vector<128x384xbf16>, vector<8x384xf32> -> vector<8x384xf32>
    %591 = arith.addf %590, %10 : vector<8x384xf32>
    %592 = vector.extract_strided_slice %588 {offsets = [0, 0], sizes = [8, 128], strides = [1, 1]} : vector<8x384xf32> to vector<8x128xf32>
    %593 = vector.extract_strided_slice %591 {offsets = [0, 0], sizes = [8, 128], strides = [1, 1]} : vector<8x384xf32> to vector<8x128xf32>
    %594 = arith.addf %592, %593 : vector<8x128xf32>
    %cst_159 = arith.constant 5.000000e-01 : f32
    %595 = vector.broadcast %cst_159 : f32 to vector<8x128xf32>
    %596 = arith.mulf %595, %594 : vector<8x128xf32>
    %597 = math.tanh %596 : vector<8x128xf32>
    %cst_160 = arith.constant 5.000000e-01 : f32
    %598 = vector.broadcast %cst_160 : f32 to vector<8x128xf32>
    %599 = arith.mulf %598, %597 : vector<8x128xf32>
    %cst_161 = arith.constant 5.000000e-01 : f32
    %600 = vector.broadcast %cst_161 : f32 to vector<8x128xf32>
    %601 = arith.addf %599, %600 : vector<8x128xf32>
    %602 = vector.extract_strided_slice %588 {offsets = [0, 128], sizes = [8, 128], strides = [1, 1]} : vector<8x384xf32> to vector<8x128xf32>
    %603 = vector.extract_strided_slice %591 {offsets = [0, 128], sizes = [8, 128], strides = [1, 1]} : vector<8x384xf32> to vector<8x128xf32>
    %604 = arith.addf %602, %603 : vector<8x128xf32>
    %cst_162 = arith.constant 5.000000e-01 : f32
    %605 = vector.broadcast %cst_162 : f32 to vector<8x128xf32>
    %606 = arith.mulf %605, %604 : vector<8x128xf32>
    %607 = math.tanh %606 : vector<8x128xf32>
    %cst_163 = arith.constant 5.000000e-01 : f32
    %608 = vector.broadcast %cst_163 : f32 to vector<8x128xf32>
    %609 = arith.mulf %608, %607 : vector<8x128xf32>
    %cst_164 = arith.constant 5.000000e-01 : f32
    %610 = vector.broadcast %cst_164 : f32 to vector<8x128xf32>
    %611 = arith.addf %609, %610 : vector<8x128xf32>
    %612 = vector.extract_strided_slice %588 {offsets = [0, 256], sizes = [8, 128], strides = [1, 1]} : vector<8x384xf32> to vector<8x128xf32>
    %613 = vector.extract_strided_slice %591 {offsets = [0, 256], sizes = [8, 128], strides = [1, 1]} : vector<8x384xf32> to vector<8x128xf32>
    %614 = arith.mulf %601, %613 : vector<8x128xf32>
    %615 = arith.addf %612, %614 : vector<8x128xf32>
    %616 = math.tanh %615 : vector<8x128xf32>
    %617 = arith.subf %587, %616 : vector<8x128xf32>
    %618 = arith.mulf %611, %617 : vector<8x128xf32>
    %619 = arith.addf %616, %618 : vector<8x128xf32>
    %c152 = arith.constant 152 : index
    %c0_165 = arith.constant 0 : index
    %620 = vector.load %arg8[%c152, %c0_165] : memref<224x384xf32, #tpu.memory_space<vmem>>, vector<8x384xf32>
    %621 = arith.truncf %619 : vector<8x128xf32> to vector<8x128xbf16>
    %cst_166 = arith.constant dense<0.000000e+00> : vector<8x384xf32>
    %622 = tpu.matmul %621, %7, %cst_166 {dimension_numbers = #tpu.dot_dimension_numbers<[1], [0], [0], [1], [0, 0, 1, 1], [], []>} : vector<8x128xbf16>, vector<128x384xbf16>, vector<8x384xf32> -> vector<8x384xf32>
    %623 = arith.addf %622, %10 : vector<8x384xf32>
    %624 = vector.extract_strided_slice %620 {offsets = [0, 0], sizes = [8, 128], strides = [1, 1]} : vector<8x384xf32> to vector<8x128xf32>
    %625 = vector.extract_strided_slice %623 {offsets = [0, 0], sizes = [8, 128], strides = [1, 1]} : vector<8x384xf32> to vector<8x128xf32>
    %626 = arith.addf %624, %625 : vector<8x128xf32>
    %cst_167 = arith.constant 5.000000e-01 : f32
    %627 = vector.broadcast %cst_167 : f32 to vector<8x128xf32>
    %628 = arith.mulf %627, %626 : vector<8x128xf32>
    %629 = math.tanh %628 : vector<8x128xf32>
    %cst_168 = arith.constant 5.000000e-01 : f32
    %630 = vector.broadcast %cst_168 : f32 to vector<8x128xf32>
    %631 = arith.mulf %630, %629 : vector<8x128xf32>
    %cst_169 = arith.constant 5.000000e-01 : f32
    %632 = vector.broadcast %cst_169 : f32 to vector<8x128xf32>
    %633 = arith.addf %631, %632 : vector<8x128xf32>
    %634 = vector.extract_strided_slice %620 {offsets = [0, 128], sizes = [8, 128], strides = [1, 1]} : vector<8x384xf32> to vector<8x128xf32>
    %635 = vector.extract_strided_slice %623 {offsets = [0, 128], sizes = [8, 128], strides = [1, 1]} : vector<8x384xf32> to vector<8x128xf32>
    %636 = arith.addf %634, %635 : vector<8x128xf32>
    %cst_170 = arith.constant 5.000000e-01 : f32
    %637 = vector.broadcast %cst_170 : f32 to vector<8x128xf32>
    %638 = arith.mulf %637, %636 : vector<8x128xf32>
    %639 = math.tanh %638 : vector<8x128xf32>
    %cst_171 = arith.constant 5.000000e-01 : f32
    %640 = vector.broadcast %cst_171 : f32 to vector<8x128xf32>
    %641 = arith.mulf %640, %639 : vector<8x128xf32>
    %cst_172 = arith.constant 5.000000e-01 : f32
    %642 = vector.broadcast %cst_172 : f32 to vector<8x128xf32>
    %643 = arith.addf %641, %642 : vector<8x128xf32>
    %644 = vector.extract_strided_slice %620 {offsets = [0, 256], sizes = [8, 128], strides = [1, 1]} : vector<8x384xf32> to vector<8x128xf32>
    %645 = vector.extract_strided_slice %623 {offsets = [0, 256], sizes = [8, 128], strides = [1, 1]} : vector<8x384xf32> to vector<8x128xf32>
    %646 = arith.mulf %633, %645 : vector<8x128xf32>
    %647 = arith.addf %644, %646 : vector<8x128xf32>
    %648 = math.tanh %647 : vector<8x128xf32>
    %649 = arith.subf %619, %648 : vector<8x128xf32>
    %650 = arith.mulf %643, %649 : vector<8x128xf32>
    %651 = arith.addf %648, %650 : vector<8x128xf32>
    %c160 = arith.constant 160 : index
    %c0_173 = arith.constant 0 : index
    %652 = vector.load %arg8[%c160, %c0_173] : memref<224x384xf32, #tpu.memory_space<vmem>>, vector<8x384xf32>
    %653 = arith.truncf %651 : vector<8x128xf32> to vector<8x128xbf16>
    %cst_174 = arith.constant dense<0.000000e+00> : vector<8x384xf32>
    %654 = tpu.matmul %653, %7, %cst_174 {dimension_numbers = #tpu.dot_dimension_numbers<[1], [0], [0], [1], [0, 0, 1, 1], [], []>} : vector<8x128xbf16>, vector<128x384xbf16>, vector<8x384xf32> -> vector<8x384xf32>
    %655 = arith.addf %654, %10 : vector<8x384xf32>
    %656 = vector.extract_strided_slice %652 {offsets = [0, 0], sizes = [8, 128], strides = [1, 1]} : vector<8x384xf32> to vector<8x128xf32>
    %657 = vector.extract_strided_slice %655 {offsets = [0, 0], sizes = [8, 128], strides = [1, 1]} : vector<8x384xf32> to vector<8x128xf32>
    %658 = arith.addf %656, %657 : vector<8x128xf32>
    %cst_175 = arith.constant 5.000000e-01 : f32
    %659 = vector.broadcast %cst_175 : f32 to vector<8x128xf32>
    %660 = arith.mulf %659, %658 : vector<8x128xf32>
    %661 = math.tanh %660 : vector<8x128xf32>
    %cst_176 = arith.constant 5.000000e-01 : f32
    %662 = vector.broadcast %cst_176 : f32 to vector<8x128xf32>
    %663 = arith.mulf %662, %661 : vector<8x128xf32>
    %cst_177 = arith.constant 5.000000e-01 : f32
    %664 = vector.broadcast %cst_177 : f32 to vector<8x128xf32>
    %665 = arith.addf %663, %664 : vector<8x128xf32>
    %666 = vector.extract_strided_slice %652 {offsets = [0, 128], sizes = [8, 128], strides = [1, 1]} : vector<8x384xf32> to vector<8x128xf32>
    %667 = vector.extract_strided_slice %655 {offsets = [0, 128], sizes = [8, 128], strides = [1, 1]} : vector<8x384xf32> to vector<8x128xf32>
    %668 = arith.addf %666, %667 : vector<8x128xf32>
    %cst_178 = arith.constant 5.000000e-01 : f32
    %669 = vector.broadcast %cst_178 : f32 to vector<8x128xf32>
    %670 = arith.mulf %669, %668 : vector<8x128xf32>
    %671 = math.tanh %670 : vector<8x128xf32>
    %cst_179 = arith.constant 5.000000e-01 : f32
    %672 = vector.broadcast %cst_179 : f32 to vector<8x128xf32>
    %673 = arith.mulf %672, %671 : vector<8x128xf32>
    %cst_180 = arith.constant 5.000000e-01 : f32
    %674 = vector.broadcast %cst_180 : f32 to vector<8x128xf32>
    %675 = arith.addf %673, %674 : vector<8x128xf32>
    %676 = vector.extract_strided_slice %652 {offsets = [0, 256], sizes = [8, 128], strides = [1, 1]} : vector<8x384xf32> to vector<8x128xf32>
    %677 = vector.extract_strided_slice %655 {offsets = [0, 256], sizes = [8, 128], strides = [1, 1]} : vector<8x384xf32> to vector<8x128xf32>
    %678 = arith.mulf %665, %677 : vector<8x128xf32>
    %679 = arith.addf %676, %678 : vector<8x128xf32>
    %680 = math.tanh %679 : vector<8x128xf32>
    %681 = arith.subf %651, %680 : vector<8x128xf32>
    %682 = arith.mulf %675, %681 : vector<8x128xf32>
    %683 = arith.addf %680, %682 : vector<8x128xf32>
    %c168 = arith.constant 168 : index
    %c0_181 = arith.constant 0 : index
    %684 = vector.load %arg8[%c168, %c0_181] : memref<224x384xf32, #tpu.memory_space<vmem>>, vector<8x384xf32>
    %685 = arith.truncf %683 : vector<8x128xf32> to vector<8x128xbf16>
    %cst_182 = arith.constant dense<0.000000e+00> : vector<8x384xf32>
    %686 = tpu.matmul %685, %7, %cst_182 {dimension_numbers = #tpu.dot_dimension_numbers<[1], [0], [0], [1], [0, 0, 1, 1], [], []>} : vector<8x128xbf16>, vector<128x384xbf16>, vector<8x384xf32> -> vector<8x384xf32>
    %687 = arith.addf %686, %10 : vector<8x384xf32>
    %688 = vector.extract_strided_slice %684 {offsets = [0, 0], sizes = [8, 128], strides = [1, 1]} : vector<8x384xf32> to vector<8x128xf32>
    %689 = vector.extract_strided_slice %687 {offsets = [0, 0], sizes = [8, 128], strides = [1, 1]} : vector<8x384xf32> to vector<8x128xf32>
    %690 = arith.addf %688, %689 : vector<8x128xf32>
    %cst_183 = arith.constant 5.000000e-01 : f32
    %691 = vector.broadcast %cst_183 : f32 to vector<8x128xf32>
    %692 = arith.mulf %691, %690 : vector<8x128xf32>
    %693 = math.tanh %692 : vector<8x128xf32>
    %cst_184 = arith.constant 5.000000e-01 : f32
    %694 = vector.broadcast %cst_184 : f32 to vector<8x128xf32>
    %695 = arith.mulf %694, %693 : vector<8x128xf32>
    %cst_185 = arith.constant 5.000000e-01 : f32
    %696 = vector.broadcast %cst_185 : f32 to vector<8x128xf32>
    %697 = arith.addf %695, %696 : vector<8x128xf32>
    %698 = vector.extract_strided_slice %684 {offsets = [0, 128], sizes = [8, 128], strides = [1, 1]} : vector<8x384xf32> to vector<8x128xf32>
    %699 = vector.extract_strided_slice %687 {offsets = [0, 128], sizes = [8, 128], strides = [1, 1]} : vector<8x384xf32> to vector<8x128xf32>
    %700 = arith.addf %698, %699 : vector<8x128xf32>
    %cst_186 = arith.constant 5.000000e-01 : f32
    %701 = vector.broadcast %cst_186 : f32 to vector<8x128xf32>
    %702 = arith.mulf %701, %700 : vector<8x128xf32>
    %703 = math.tanh %702 : vector<8x128xf32>
    %cst_187 = arith.constant 5.000000e-01 : f32
    %704 = vector.broadcast %cst_187 : f32 to vector<8x128xf32>
    %705 = arith.mulf %704, %703 : vector<8x128xf32>
    %cst_188 = arith.constant 5.000000e-01 : f32
    %706 = vector.broadcast %cst_188 : f32 to vector<8x128xf32>
    %707 = arith.addf %705, %706 : vector<8x128xf32>
    %708 = vector.extract_strided_slice %684 {offsets = [0, 256], sizes = [8, 128], strides = [1, 1]} : vector<8x384xf32> to vector<8x128xf32>
    %709 = vector.extract_strided_slice %687 {offsets = [0, 256], sizes = [8, 128], strides = [1, 1]} : vector<8x384xf32> to vector<8x128xf32>
    %710 = arith.mulf %697, %709 : vector<8x128xf32>
    %711 = arith.addf %708, %710 : vector<8x128xf32>
    %712 = math.tanh %711 : vector<8x128xf32>
    %713 = arith.subf %683, %712 : vector<8x128xf32>
    %714 = arith.mulf %707, %713 : vector<8x128xf32>
    %715 = arith.addf %712, %714 : vector<8x128xf32>
    %c176 = arith.constant 176 : index
    %c0_189 = arith.constant 0 : index
    %716 = vector.load %arg8[%c176, %c0_189] : memref<224x384xf32, #tpu.memory_space<vmem>>, vector<8x384xf32>
    %717 = arith.truncf %715 : vector<8x128xf32> to vector<8x128xbf16>
    %cst_190 = arith.constant dense<0.000000e+00> : vector<8x384xf32>
    %718 = tpu.matmul %717, %7, %cst_190 {dimension_numbers = #tpu.dot_dimension_numbers<[1], [0], [0], [1], [0, 0, 1, 1], [], []>} : vector<8x128xbf16>, vector<128x384xbf16>, vector<8x384xf32> -> vector<8x384xf32>
    %719 = arith.addf %718, %10 : vector<8x384xf32>
    %720 = vector.extract_strided_slice %716 {offsets = [0, 0], sizes = [8, 128], strides = [1, 1]} : vector<8x384xf32> to vector<8x128xf32>
    %721 = vector.extract_strided_slice %719 {offsets = [0, 0], sizes = [8, 128], strides = [1, 1]} : vector<8x384xf32> to vector<8x128xf32>
    %722 = arith.addf %720, %721 : vector<8x128xf32>
    %cst_191 = arith.constant 5.000000e-01 : f32
    %723 = vector.broadcast %cst_191 : f32 to vector<8x128xf32>
    %724 = arith.mulf %723, %722 : vector<8x128xf32>
    %725 = math.tanh %724 : vector<8x128xf32>
    %cst_192 = arith.constant 5.000000e-01 : f32
    %726 = vector.broadcast %cst_192 : f32 to vector<8x128xf32>
    %727 = arith.mulf %726, %725 : vector<8x128xf32>
    %cst_193 = arith.constant 5.000000e-01 : f32
    %728 = vector.broadcast %cst_193 : f32 to vector<8x128xf32>
    %729 = arith.addf %727, %728 : vector<8x128xf32>
    %730 = vector.extract_strided_slice %716 {offsets = [0, 128], sizes = [8, 128], strides = [1, 1]} : vector<8x384xf32> to vector<8x128xf32>
    %731 = vector.extract_strided_slice %719 {offsets = [0, 128], sizes = [8, 128], strides = [1, 1]} : vector<8x384xf32> to vector<8x128xf32>
    %732 = arith.addf %730, %731 : vector<8x128xf32>
    %cst_194 = arith.constant 5.000000e-01 : f32
    %733 = vector.broadcast %cst_194 : f32 to vector<8x128xf32>
    %734 = arith.mulf %733, %732 : vector<8x128xf32>
    %735 = math.tanh %734 : vector<8x128xf32>
    %cst_195 = arith.constant 5.000000e-01 : f32
    %736 = vector.broadcast %cst_195 : f32 to vector<8x128xf32>
    %737 = arith.mulf %736, %735 : vector<8x128xf32>
    %cst_196 = arith.constant 5.000000e-01 : f32
    %738 = vector.broadcast %cst_196 : f32 to vector<8x128xf32>
    %739 = arith.addf %737, %738 : vector<8x128xf32>
    %740 = vector.extract_strided_slice %716 {offsets = [0, 256], sizes = [8, 128], strides = [1, 1]} : vector<8x384xf32> to vector<8x128xf32>
    %741 = vector.extract_strided_slice %719 {offsets = [0, 256], sizes = [8, 128], strides = [1, 1]} : vector<8x384xf32> to vector<8x128xf32>
    %742 = arith.mulf %729, %741 : vector<8x128xf32>
    %743 = arith.addf %740, %742 : vector<8x128xf32>
    %744 = math.tanh %743 : vector<8x128xf32>
    %745 = arith.subf %715, %744 : vector<8x128xf32>
    %746 = arith.mulf %739, %745 : vector<8x128xf32>
    %747 = arith.addf %744, %746 : vector<8x128xf32>
    %c184 = arith.constant 184 : index
    %c0_197 = arith.constant 0 : index
    %748 = vector.load %arg8[%c184, %c0_197] : memref<224x384xf32, #tpu.memory_space<vmem>>, vector<8x384xf32>
    %749 = arith.truncf %747 : vector<8x128xf32> to vector<8x128xbf16>
    %cst_198 = arith.constant dense<0.000000e+00> : vector<8x384xf32>
    %750 = tpu.matmul %749, %7, %cst_198 {dimension_numbers = #tpu.dot_dimension_numbers<[1], [0], [0], [1], [0, 0, 1, 1], [], []>} : vector<8x128xbf16>, vector<128x384xbf16>, vector<8x384xf32> -> vector<8x384xf32>
    %751 = arith.addf %750, %10 : vector<8x384xf32>
    %752 = vector.extract_strided_slice %748 {offsets = [0, 0], sizes = [8, 128], strides = [1, 1]} : vector<8x384xf32> to vector<8x128xf32>
    %753 = vector.extract_strided_slice %751 {offsets = [0, 0], sizes = [8, 128], strides = [1, 1]} : vector<8x384xf32> to vector<8x128xf32>
    %754 = arith.addf %752, %753 : vector<8x128xf32>
    %cst_199 = arith.constant 5.000000e-01 : f32
    %755 = vector.broadcast %cst_199 : f32 to vector<8x128xf32>
    %756 = arith.mulf %755, %754 : vector<8x128xf32>
    %757 = math.tanh %756 : vector<8x128xf32>
    %cst_200 = arith.constant 5.000000e-01 : f32
    %758 = vector.broadcast %cst_200 : f32 to vector<8x128xf32>
    %759 = arith.mulf %758, %757 : vector<8x128xf32>
    %cst_201 = arith.constant 5.000000e-01 : f32
    %760 = vector.broadcast %cst_201 : f32 to vector<8x128xf32>
    %761 = arith.addf %759, %760 : vector<8x128xf32>
    %762 = vector.extract_strided_slice %748 {offsets = [0, 128], sizes = [8, 128], strides = [1, 1]} : vector<8x384xf32> to vector<8x128xf32>
    %763 = vector.extract_strided_slice %751 {offsets = [0, 128], sizes = [8, 128], strides = [1, 1]} : vector<8x384xf32> to vector<8x128xf32>
    %764 = arith.addf %762, %763 : vector<8x128xf32>
    %cst_202 = arith.constant 5.000000e-01 : f32
    %765 = vector.broadcast %cst_202 : f32 to vector<8x128xf32>
    %766 = arith.mulf %765, %764 : vector<8x128xf32>
    %767 = math.tanh %766 : vector<8x128xf32>
    %cst_203 = arith.constant 5.000000e-01 : f32
    %768 = vector.broadcast %cst_203 : f32 to vector<8x128xf32>
    %769 = arith.mulf %768, %767 : vector<8x128xf32>
    %cst_204 = arith.constant 5.000000e-01 : f32
    %770 = vector.broadcast %cst_204 : f32 to vector<8x128xf32>
    %771 = arith.addf %769, %770 : vector<8x128xf32>
    %772 = vector.extract_strided_slice %748 {offsets = [0, 256], sizes = [8, 128], strides = [1, 1]} : vector<8x384xf32> to vector<8x128xf32>
    %773 = vector.extract_strided_slice %751 {offsets = [0, 256], sizes = [8, 128], strides = [1, 1]} : vector<8x384xf32> to vector<8x128xf32>
    %774 = arith.mulf %761, %773 : vector<8x128xf32>
    %775 = arith.addf %772, %774 : vector<8x128xf32>
    %776 = math.tanh %775 : vector<8x128xf32>
    %777 = arith.subf %747, %776 : vector<8x128xf32>
    %778 = arith.mulf %771, %777 : vector<8x128xf32>
    %779 = arith.addf %776, %778 : vector<8x128xf32>
    %c192 = arith.constant 192 : index
    %c0_205 = arith.constant 0 : index
    %780 = vector.load %arg8[%c192, %c0_205] : memref<224x384xf32, #tpu.memory_space<vmem>>, vector<8x384xf32>
    %781 = arith.truncf %779 : vector<8x128xf32> to vector<8x128xbf16>
    %cst_206 = arith.constant dense<0.000000e+00> : vector<8x384xf32>
    %782 = tpu.matmul %781, %7, %cst_206 {dimension_numbers = #tpu.dot_dimension_numbers<[1], [0], [0], [1], [0, 0, 1, 1], [], []>} : vector<8x128xbf16>, vector<128x384xbf16>, vector<8x384xf32> -> vector<8x384xf32>
    %783 = arith.addf %782, %10 : vector<8x384xf32>
    %784 = vector.extract_strided_slice %780 {offsets = [0, 0], sizes = [8, 128], strides = [1, 1]} : vector<8x384xf32> to vector<8x128xf32>
    %785 = vector.extract_strided_slice %783 {offsets = [0, 0], sizes = [8, 128], strides = [1, 1]} : vector<8x384xf32> to vector<8x128xf32>
    %786 = arith.addf %784, %785 : vector<8x128xf32>
    %cst_207 = arith.constant 5.000000e-01 : f32
    %787 = vector.broadcast %cst_207 : f32 to vector<8x128xf32>
    %788 = arith.mulf %787, %786 : vector<8x128xf32>
    %789 = math.tanh %788 : vector<8x128xf32>
    %cst_208 = arith.constant 5.000000e-01 : f32
    %790 = vector.broadcast %cst_208 : f32 to vector<8x128xf32>
    %791 = arith.mulf %790, %789 : vector<8x128xf32>
    %cst_209 = arith.constant 5.000000e-01 : f32
    %792 = vector.broadcast %cst_209 : f32 to vector<8x128xf32>
    %793 = arith.addf %791, %792 : vector<8x128xf32>
    %794 = vector.extract_strided_slice %780 {offsets = [0, 128], sizes = [8, 128], strides = [1, 1]} : vector<8x384xf32> to vector<8x128xf32>
    %795 = vector.extract_strided_slice %783 {offsets = [0, 128], sizes = [8, 128], strides = [1, 1]} : vector<8x384xf32> to vector<8x128xf32>
    %796 = arith.addf %794, %795 : vector<8x128xf32>
    %cst_210 = arith.constant 5.000000e-01 : f32
    %797 = vector.broadcast %cst_210 : f32 to vector<8x128xf32>
    %798 = arith.mulf %797, %796 : vector<8x128xf32>
    %799 = math.tanh %798 : vector<8x128xf32>
    %cst_211 = arith.constant 5.000000e-01 : f32
    %800 = vector.broadcast %cst_211 : f32 to vector<8x128xf32>
    %801 = arith.mulf %800, %799 : vector<8x128xf32>
    %cst_212 = arith.constant 5.000000e-01 : f32
    %802 = vector.broadcast %cst_212 : f32 to vector<8x128xf32>
    %803 = arith.addf %801, %802 : vector<8x128xf32>
    %804 = vector.extract_strided_slice %780 {offsets = [0, 256], sizes = [8, 128], strides = [1, 1]} : vector<8x384xf32> to vector<8x128xf32>
    %805 = vector.extract_strided_slice %783 {offsets = [0, 256], sizes = [8, 128], strides = [1, 1]} : vector<8x384xf32> to vector<8x128xf32>
    %806 = arith.mulf %793, %805 : vector<8x128xf32>
    %807 = arith.addf %804, %806 : vector<8x128xf32>
    %808 = math.tanh %807 : vector<8x128xf32>
    %809 = arith.subf %779, %808 : vector<8x128xf32>
    %810 = arith.mulf %803, %809 : vector<8x128xf32>
    %811 = arith.addf %808, %810 : vector<8x128xf32>
    %c200 = arith.constant 200 : index
    %c0_213 = arith.constant 0 : index
    %812 = vector.load %arg8[%c200, %c0_213] : memref<224x384xf32, #tpu.memory_space<vmem>>, vector<8x384xf32>
    %813 = arith.truncf %811 : vector<8x128xf32> to vector<8x128xbf16>
    %cst_214 = arith.constant dense<0.000000e+00> : vector<8x384xf32>
    %814 = tpu.matmul %813, %7, %cst_214 {dimension_numbers = #tpu.dot_dimension_numbers<[1], [0], [0], [1], [0, 0, 1, 1], [], []>} : vector<8x128xbf16>, vector<128x384xbf16>, vector<8x384xf32> -> vector<8x384xf32>
    %815 = arith.addf %814, %10 : vector<8x384xf32>
    %816 = vector.extract_strided_slice %812 {offsets = [0, 0], sizes = [8, 128], strides = [1, 1]} : vector<8x384xf32> to vector<8x128xf32>
    %817 = vector.extract_strided_slice %815 {offsets = [0, 0], sizes = [8, 128], strides = [1, 1]} : vector<8x384xf32> to vector<8x128xf32>
    %818 = arith.addf %816, %817 : vector<8x128xf32>
    %cst_215 = arith.constant 5.000000e-01 : f32
    %819 = vector.broadcast %cst_215 : f32 to vector<8x128xf32>
    %820 = arith.mulf %819, %818 : vector<8x128xf32>
    %821 = math.tanh %820 : vector<8x128xf32>
    %cst_216 = arith.constant 5.000000e-01 : f32
    %822 = vector.broadcast %cst_216 : f32 to vector<8x128xf32>
    %823 = arith.mulf %822, %821 : vector<8x128xf32>
    %cst_217 = arith.constant 5.000000e-01 : f32
    %824 = vector.broadcast %cst_217 : f32 to vector<8x128xf32>
    %825 = arith.addf %823, %824 : vector<8x128xf32>
    %826 = vector.extract_strided_slice %812 {offsets = [0, 128], sizes = [8, 128], strides = [1, 1]} : vector<8x384xf32> to vector<8x128xf32>
    %827 = vector.extract_strided_slice %815 {offsets = [0, 128], sizes = [8, 128], strides = [1, 1]} : vector<8x384xf32> to vector<8x128xf32>
    %828 = arith.addf %826, %827 : vector<8x128xf32>
    %cst_218 = arith.constant 5.000000e-01 : f32
    %829 = vector.broadcast %cst_218 : f32 to vector<8x128xf32>
    %830 = arith.mulf %829, %828 : vector<8x128xf32>
    %831 = math.tanh %830 : vector<8x128xf32>
    %cst_219 = arith.constant 5.000000e-01 : f32
    %832 = vector.broadcast %cst_219 : f32 to vector<8x128xf32>
    %833 = arith.mulf %832, %831 : vector<8x128xf32>
    %cst_220 = arith.constant 5.000000e-01 : f32
    %834 = vector.broadcast %cst_220 : f32 to vector<8x128xf32>
    %835 = arith.addf %833, %834 : vector<8x128xf32>
    %836 = vector.extract_strided_slice %812 {offsets = [0, 256], sizes = [8, 128], strides = [1, 1]} : vector<8x384xf32> to vector<8x128xf32>
    %837 = vector.extract_strided_slice %815 {offsets = [0, 256], sizes = [8, 128], strides = [1, 1]} : vector<8x384xf32> to vector<8x128xf32>
    %838 = arith.mulf %825, %837 : vector<8x128xf32>
    %839 = arith.addf %836, %838 : vector<8x128xf32>
    %840 = math.tanh %839 : vector<8x128xf32>
    %841 = arith.subf %811, %840 : vector<8x128xf32>
    %842 = arith.mulf %835, %841 : vector<8x128xf32>
    %843 = arith.addf %840, %842 : vector<8x128xf32>
    %c208 = arith.constant 208 : index
    %c0_221 = arith.constant 0 : index
    %844 = vector.load %arg8[%c208, %c0_221] : memref<224x384xf32, #tpu.memory_space<vmem>>, vector<8x384xf32>
    %845 = arith.truncf %843 : vector<8x128xf32> to vector<8x128xbf16>
    %cst_222 = arith.constant dense<0.000000e+00> : vector<8x384xf32>
    %846 = tpu.matmul %845, %7, %cst_222 {dimension_numbers = #tpu.dot_dimension_numbers<[1], [0], [0], [1], [0, 0, 1, 1], [], []>} : vector<8x128xbf16>, vector<128x384xbf16>, vector<8x384xf32> -> vector<8x384xf32>
    %847 = arith.addf %846, %10 : vector<8x384xf32>
    %848 = vector.extract_strided_slice %844 {offsets = [0, 0], sizes = [8, 128], strides = [1, 1]} : vector<8x384xf32> to vector<8x128xf32>
    %849 = vector.extract_strided_slice %847 {offsets = [0, 0], sizes = [8, 128], strides = [1, 1]} : vector<8x384xf32> to vector<8x128xf32>
    %850 = arith.addf %848, %849 : vector<8x128xf32>
    %cst_223 = arith.constant 5.000000e-01 : f32
    %851 = vector.broadcast %cst_223 : f32 to vector<8x128xf32>
    %852 = arith.mulf %851, %850 : vector<8x128xf32>
    %853 = math.tanh %852 : vector<8x128xf32>
    %cst_224 = arith.constant 5.000000e-01 : f32
    %854 = vector.broadcast %cst_224 : f32 to vector<8x128xf32>
    %855 = arith.mulf %854, %853 : vector<8x128xf32>
    %cst_225 = arith.constant 5.000000e-01 : f32
    %856 = vector.broadcast %cst_225 : f32 to vector<8x128xf32>
    %857 = arith.addf %855, %856 : vector<8x128xf32>
    %858 = vector.extract_strided_slice %844 {offsets = [0, 128], sizes = [8, 128], strides = [1, 1]} : vector<8x384xf32> to vector<8x128xf32>
    %859 = vector.extract_strided_slice %847 {offsets = [0, 128], sizes = [8, 128], strides = [1, 1]} : vector<8x384xf32> to vector<8x128xf32>
    %860 = arith.addf %858, %859 : vector<8x128xf32>
    %cst_226 = arith.constant 5.000000e-01 : f32
    %861 = vector.broadcast %cst_226 : f32 to vector<8x128xf32>
    %862 = arith.mulf %861, %860 : vector<8x128xf32>
    %863 = math.tanh %862 : vector<8x128xf32>
    %cst_227 = arith.constant 5.000000e-01 : f32
    %864 = vector.broadcast %cst_227 : f32 to vector<8x128xf32>
    %865 = arith.mulf %864, %863 : vector<8x128xf32>
    %cst_228 = arith.constant 5.000000e-01 : f32
    %866 = vector.broadcast %cst_228 : f32 to vector<8x128xf32>
    %867 = arith.addf %865, %866 : vector<8x128xf32>
    %868 = vector.extract_strided_slice %844 {offsets = [0, 256], sizes = [8, 128], strides = [1, 1]} : vector<8x384xf32> to vector<8x128xf32>
    %869 = vector.extract_strided_slice %847 {offsets = [0, 256], sizes = [8, 128], strides = [1, 1]} : vector<8x384xf32> to vector<8x128xf32>
    %870 = arith.mulf %857, %869 : vector<8x128xf32>
    %871 = arith.addf %868, %870 : vector<8x128xf32>
    %872 = math.tanh %871 : vector<8x128xf32>
    %873 = arith.subf %843, %872 : vector<8x128xf32>
    %874 = arith.mulf %867, %873 : vector<8x128xf32>
    %875 = arith.addf %872, %874 : vector<8x128xf32>
    %c216 = arith.constant 216 : index
    %c0_229 = arith.constant 0 : index
    %876 = vector.load %arg8[%c216, %c0_229] : memref<224x384xf32, #tpu.memory_space<vmem>>, vector<8x384xf32>
    %877 = arith.truncf %875 : vector<8x128xf32> to vector<8x128xbf16>
    %cst_230 = arith.constant dense<0.000000e+00> : vector<8x384xf32>
    %878 = tpu.matmul %877, %7, %cst_230 {dimension_numbers = #tpu.dot_dimension_numbers<[1], [0], [0], [1], [0, 0, 1, 1], [], []>} : vector<8x128xbf16>, vector<128x384xbf16>, vector<8x384xf32> -> vector<8x384xf32>
    %879 = arith.addf %878, %10 : vector<8x384xf32>
    %880 = vector.extract_strided_slice %876 {offsets = [0, 0], sizes = [8, 128], strides = [1, 1]} : vector<8x384xf32> to vector<8x128xf32>
    %881 = vector.extract_strided_slice %879 {offsets = [0, 0], sizes = [8, 128], strides = [1, 1]} : vector<8x384xf32> to vector<8x128xf32>
    %882 = arith.addf %880, %881 : vector<8x128xf32>
    %cst_231 = arith.constant 5.000000e-01 : f32
    %883 = vector.broadcast %cst_231 : f32 to vector<8x128xf32>
    %884 = arith.mulf %883, %882 : vector<8x128xf32>
    %885 = math.tanh %884 : vector<8x128xf32>
    %cst_232 = arith.constant 5.000000e-01 : f32
    %886 = vector.broadcast %cst_232 : f32 to vector<8x128xf32>
    %887 = arith.mulf %886, %885 : vector<8x128xf32>
    %cst_233 = arith.constant 5.000000e-01 : f32
    %888 = vector.broadcast %cst_233 : f32 to vector<8x128xf32>
    %889 = arith.addf %887, %888 : vector<8x128xf32>
    %890 = vector.extract_strided_slice %876 {offsets = [0, 128], sizes = [8, 128], strides = [1, 1]} : vector<8x384xf32> to vector<8x128xf32>
    %891 = vector.extract_strided_slice %879 {offsets = [0, 128], sizes = [8, 128], strides = [1, 1]} : vector<8x384xf32> to vector<8x128xf32>
    %892 = arith.addf %890, %891 : vector<8x128xf32>
    %cst_234 = arith.constant 5.000000e-01 : f32
    %893 = vector.broadcast %cst_234 : f32 to vector<8x128xf32>
    %894 = arith.mulf %893, %892 : vector<8x128xf32>
    %895 = math.tanh %894 : vector<8x128xf32>
    %cst_235 = arith.constant 5.000000e-01 : f32
    %896 = vector.broadcast %cst_235 : f32 to vector<8x128xf32>
    %897 = arith.mulf %896, %895 : vector<8x128xf32>
    %cst_236 = arith.constant 5.000000e-01 : f32
    %898 = vector.broadcast %cst_236 : f32 to vector<8x128xf32>
    %899 = arith.addf %897, %898 : vector<8x128xf32>
    %900 = vector.extract_strided_slice %876 {offsets = [0, 256], sizes = [8, 128], strides = [1, 1]} : vector<8x384xf32> to vector<8x128xf32>
    %901 = vector.extract_strided_slice %879 {offsets = [0, 256], sizes = [8, 128], strides = [1, 1]} : vector<8x384xf32> to vector<8x128xf32>
    %902 = arith.mulf %889, %901 : vector<8x128xf32>
    %903 = arith.addf %900, %902 : vector<8x128xf32>
    %904 = math.tanh %903 : vector<8x128xf32>
    %905 = arith.subf %875, %904 : vector<8x128xf32>
    %906 = arith.mulf %899, %905 : vector<8x128xf32>
    %907 = arith.addf %904, %906 : vector<8x128xf32>
    %908 = arith.truncf %907 : vector<8x128xf32> to vector<8x128xbf16>
    %c0_237 = arith.constant 0 : index
    %c0_238 = arith.constant 0 : index
    %909 = vector.load %arg5[%c0_237, %c0_238] : memref<128x128xbf16, #tpu.memory_space<vmem>>, vector<128x128xbf16>
    %cst_239 = arith.constant dense<0.000000e+00> : vector<8x128xf32>
    %910 = tpu.matmul %908, %909, %cst_239 {dimension_numbers = #tpu.dot_dimension_numbers<[1], [0], [0], [1], [0, 0, 1, 1], [], []>} : vector<8x128xbf16>, vector<128x128xbf16>, vector<8x128xf32> -> vector<8x128xf32>
    %c0_240 = arith.constant 0 : index
    %c0_241 = arith.constant 0 : index
    %911 = vector.load %arg6[%c0_240, %c0_241] : memref<1x128xf32, #tpu.memory_space<vmem>>, vector<1x128xf32>
    %912 = vector.broadcast %911 : vector<1x128xf32> to vector<8x128xf32>
    %913 = arith.addf %910, %912 : vector<8x128xf32>
    %c0_242 = arith.constant 0 : index
    %c0_243 = arith.constant 0 : index
    %914 = vector.load %arg7[%c0_242, %c0_243] : memref<8x128xf32, #tpu.memory_space<vmem>>, vector<8x128xf32>
    tpu.vector_store %arg7[%c0_242, %c0_243], %913 {strides = array<i32>} : memref<8x128xf32, #tpu.memory_space<vmem>>, vector<8x128xf32>,
    return
  }
}

</mosaic_0001>

<llo_original>
// kernel: rnn_net_forward.1
$region0: #{rnn_net_forward.1}
  #allocation0 [shape = 'u32[]', space=smem, size = 0x4, offset = 0x4, fixed_abs, tag = 'smem constant byte address 0x4 - core index']
  #allocation1 [shape = 'u32[144,128]{1,0:T(1,128)}', space=vmem, size = 0x12000, scoped, tag = 'internal scratch']
  #allocation2 [shape = 'f32[224,384]{1,0:T(8,128)}', space=vmem, size = 0x54000, scoped, tag = 'scratch operand']
  %s0 = inlined_call_operand.vmem [shape: bf16[224,28], index: 0, kind: input, shape index: {}]
  %s1 = inlined_call_operand.vmem [shape: bf16[28,384], index: 1, kind: input, shape index: {}]
  %s2 = inlined_call_operand.vmem [shape: bf16[128,384], index: 2, kind: input, shape index: {}]
  %s3 = inlined_call_operand.vmem [shape: f32[1,384], index: 3, kind: input, shape index: {}]
  %s4 = inlined_call_operand.vmem [shape: f32[1,384], index: 4, kind: input, shape index: {}]
  %s5 = inlined_call_operand.vmem [shape: bf16[128,128], index: 5, kind: input, shape index: {}]
  %s6 = inlined_call_operand.vmem [shape: f32[1,128], index: 6, kind: input, shape index: {}]
  %s7 = inlined_call_operand.hbm [shape: f32[8,128], index: 7, kind: output, shape index: {}]
  %s8 = sld [smem:[#allocation0]]
  $region38: #{rnn_net_forward.1} parent=0
    _
  %s10 = ssub.s32 1, %s8
  %s11 = scalar_select 0, %s10, %s8
  $region1: #{rnn_net_forward.1} parent=0
    #allocation3 [shape = 'u8[4096]{0}', space=vmem, size = 0x1000, scoped, tag = 'output window, operand 0, single buffered']
    #allocation4 [shape = 's32[1]{0}', space=sflag, size = 0x4, scoped, tag = 'scoped memory for rnn_net_forward.1']
    %12 = vsyncpa [#allocation4], 0
    // Predicated region
    $region2: #{rnn_net_forward.1} parent=1 // pred_check
      _
    $region3: #{rnn_net_forward.1} parent=1 // pred_check_branch
      %14 = sbr.rel (0) target = $region5
    $region4: #{rnn_net_forward.1} parent=1 // pred_region
      _
    $region5: #{rnn_net_forward.1} parent=1 // pred_fallthru
      _
    // Predicated region
    $region6: #{rnn_net_forward.1} parent=1 // pred_check
      _
    $region7: #{rnn_net_forward.1} parent=1 // pred_check_branch
      %16 = sbr.rel (0) target = $region9
    $region8: #{rnn_net_forward.1} parent=1 // pred_region
      _
    $region9: #{rnn_net_forward.1} parent=1 // pred_fallthru
      _
    // Predicated region
    $region10: #{rnn_net_forward.1} parent=1 // pred_check
      _
    $region11: #{rnn_net_forward.1} parent=1 // pred_check_branch
      %18 = sbr.rel (0) target = $region13
    $region12: #{rnn_net_forward.1} parent=1 // pred_region
      _
    $region13: #{rnn_net_forward.1} parent=1 // pred_fallthru
      _
    // Predicated region
    $region14: #{rnn_net_forward.1} parent=1 // pred_check
      _
    $region15: #{rnn_net_forward.1} parent=1 // pred_check_branch
      %20 = sbr.rel (0) target = $region17
    $region16: #{rnn_net_forward.1} parent=1 // pred_region
      _
    $region17: #{rnn_net_forward.1} parent=1 // pred_fallthru
      _
    // Predicated region
    $region18: #{rnn_net_forward.1} parent=1 // pred_check
      _
    $region19: #{rnn_net_forward.1} parent=1 // pred_check_branch
      %22 = sbr.rel (0) target = $region21
    $region20: #{rnn_net_forward.1} parent=1 // pred_region
      _
    $region21: #{rnn_net_forward.1} parent=1 // pred_fallthru
      _
    // Predicated region
    $region22: #{rnn_net_forward.1} parent=1 // pred_check
      _
    $region23: #{rnn_net_forward.1} parent=1 // pred_check_branch
      %24 = sbr.rel (0) target = $region25
    $region24: #{rnn_net_forward.1} parent=1 // pred_region
      _
    $region25: #{rnn_net_forward.1} parent=1 // pred_fallthru
      _
    // Predicated region
    $region26: #{rnn_net_forward.1} parent=1 // pred_check
      _
    $region27: #{rnn_net_forward.1} parent=1 // pred_check_branch
      %26 = sbr.rel (0) target = $region29
    $region28: #{rnn_net_forward.1} parent=1 // pred_region
      _
    $region29: #{rnn_net_forward.1} parent=1 // pred_fallthru
      _
    %v28 = vld [vmem:[%s0] sm:$0xf]
    %v29 = vld [vmem:[%s0 + $0x4] sm:$0xf]
    %v30 = vld [vmem:[%s0 + $0x8] sm:$0xf]
    %v31 = vld [vmem:[%s0 + $0xc] sm:$0xf]
    %v32 = vld [vmem:[%s0 + $0x10] sm:$0xf]
    %v33 = vld [vmem:[%s0 + $0x14] sm:$0xf]
    %v34 = vld [vmem:[%s0 + $0x18] sm:$0xf]
    %v35 = vld [vmem:[%s0 + $0x1c] sm:$0xf]
    %v36 = vld [vmem:[%s0 + $0x20] sm:$0xf]
    %v37 = vld [vmem:[%s0 + $0x24] sm:$0xf]
    %v38 = vld [vmem:[%s0 + $0x28] sm:$0xf]
    %v39 = vld [vmem:[%s0 + $0x2c] sm:$0xf]
    %v40 = vld [vmem:[%s0 + $0x30] sm:$0xf]
    %v41 = vld [vmem:[%s0 + $0x34] sm:$0xf]
    %v42 = vld [vmem:[%s0 + $0x38] sm:$0xf]
    %v43 = vld [vmem:[%s0 + $0x3c] sm:$0xf]
    %v44 = vld [vmem:[%s0 + $0x40] sm:$0xf]
    %v45 = vld [vmem:[%s0 + $0x44] sm:$0xf]
    %v46 = vld [vmem:[%s0 + $0x48] sm:$0xf]
    %v47 = vld [vmem:[%s0 + $0x4c] sm:$0xf]
    %v48 = vld [vmem:[%s0 + $0x50] sm:$0xf]
    %v49 = vld [vmem:[%s0 + $0x54] sm:$0xf]
    %v50 = vld [vmem:[%s0 + $0x58] sm:$0xf]
    %v51 = vld [vmem:[%s0 + $0x5c] sm:$0xf]
    %v52 = vld [vmem:[%s0 + $0x60] sm:$0xf]
    %v53 = vld [vmem:[%s0 + $0x64] sm:$0xf]
    %v54 = vld [vmem:[%s0 + $0x68] sm:$0xf]
    %v55 = vld [vmem:[%s0 + $0x6c] sm:$0xf]
    %v56 = vld [vmem:[%s1] sm:$0xff]
    %v57 = vld [vmem:[%s1 + $0x8] sm:$0xf]
    %v58 = vld [vmem:[%s1 + $0xc] sm:$0xff]
    %v59 = vld [vmem:[%s1 + $0x14] sm:$0xf]
    %v60 = vld [vmem:[%s1 + $0x18] sm:$0xff]
    %v61 = vld [vmem:[%s1 + $0x20] sm:$0xf]
    %v62 = vld [vmem:[%s1 + $0x24] sm:$0x33]
    %v63 = vld [vmem:[%s1 + $0x2c] sm:$0x3]
    %v64 = vld [vmem:[%s3] sm:$0x7]
    %v66 = vlaneseq
    %v67 = vshrl.u32 %v66, 7
    %v68 = vsub.s32 0, %v67
    %v69 = vrot.slane %v64, %v68
    %v70 = vlaneseq
    %v71 = vshrl.u32 %v70, 7
    %v72 = vsub.s32 1, %v71
    %v73 = vrot.slane %v64, %v72
    %v74 = vlaneseq
    %v75 = vshrl.u32 %v74, 7
    %v76 = vsub.s32 2, %v75
    %v77 = vrot.slane %v64, %v76
    %v109 = vunpack.c.l.b16 %v28
    %v110 = vunpack.c.l.b16 %v29
    %v111 = vunpack.c.l.b16 %v30
    %v112 = vunpack.c.l.b16 %v31
    %v113 = vunpack.c.l.b16 %v32
    %v114 = vunpack.c.l.b16 %v33
    %v115 = vunpack.c.l.b16 %v34
    %v116 = vunpack.c.l.b16 %v35
    %v117 = vunpack.c.l.b16 %v36
    %v118 = vunpack.c.l.b16 %v37
    %v119 = vunpack.c.l.b16 %v38
    %v120 = vunpack.c.l.b16 %v39
    %v121 = vunpack.c.l.b16 %v40
    %v122 = vunpack.c.l.b16 %v41
    %v123 = vunpack.c.l.b16 %v42
    %v124 = vunpack.c.l.b16 %v43
    %v125 = vunpack.c.l.b16 %v44
    %v126 = vunpack.c.l.b16 %v45
    %v127 = vunpack.c.l.b16 %v46
    %v128 = vunpack.c.l.b16 %v47
    %v129 = vunpack.c.l.b16 %v48
    %v130 = vunpack.c.l.b16 %v49
    %v131 = vunpack.c.l.b16 %v50
    %v132 = vunpack.c.l.b16 %v51
    %v133 = vunpack.c.l.b16 %v52
    %v134 = vunpack.c.l.b16 %v53
    %v135 = vunpack.c.l.b16 %v54
    %v136 = vunpack.c.l.b16 %v55
    %v137 = vpack.c.b16 %v110, %v109
    %v138 = vpack.c.b16 %v112, %v111
    %v139 = vpack.c.b16 %v114, %v113
    %v140 = vpack.c.b16 %v116, %v115
    %v141 = vpack.c.b16 %v118, %v117
    %v142 = vpack.c.b16 %v120, %v119
    %v143 = vpack.c.b16 %v122, %v121
    %v144 = vpack.c.b16 %v124, %v123
    %v145 = vpack.c.b16 %v126, %v125
    %v146 = vpack.c.b16 %v128, %v127
    %v147 = vpack.c.b16 %v130, %v129
    %v148 = vpack.c.b16 %v132, %v131
    %v149 = vpack.c.b16 %v134, %v133
    %v150 = vpack.c.b16 %v136, %v135
    %v159 = vunpack.c.l.b16 %v56
    %v160 = vunpack.c.h.b16 %v56
    %v161 = vunpack.c.l.b16 %v57
    %v162 = vunpack.c.l.b16 %v58
    %v163 = vunpack.c.h.b16 %v58
    %v164 = vunpack.c.l.b16 %v59
    %v165 = vunpack.c.l.b16 %v60
    %v166 = vunpack.c.h.b16 %v60
    %v167 = vunpack.c.l.b16 %v61
    %v168 = vunpack.c.l.b16 %v62
    %v169 = vunpack.c.h.b16 %v62
    %v170 = vunpack.c.l.b16 %v63
    %v171 = vpack.c.b16 %v162, %v159
    %v172 = vpack.c.b16 %v163, %v160
    %v173 = vpack.c.b16 %v164, %v161
    %v174 = vpack.c.b16 %v168, %v165
    %v175 = vpack.c.b16 %v169, %v166
    %v176 = vpack.c.b16 %v170, %v167
    %vm180 = vcmask 228352
    %v182 = vsel %vm180, %v137, 0
    %v185 = vsel %vm180, %v138, 0
    %v188 = vsel %vm180, %v139, 0
    %v191 = vsel %vm180, %v140, 0
    %v194 = vsel %vm180, %v141, 0
    %v197 = vsel %vm180, %v142, 0
    %v200 = vsel %vm180, %v143, 0
    %v203 = vsel %vm180, %v144, 0
    %v206 = vsel %vm180, %v145, 0
    %v209 = vsel %vm180, %v146, 0
    %v212 = vsel %vm180, %v147, 0
    %v215 = vsel %vm180, %v148, 0
    %v218 = vsel %vm180, %v149, 0
    %v221 = vsel %vm180, %v150, 0
    %vm223 = vcmask 1045504
    %v225 = vsel %vm223, %v174, 0
    %v228 = vsel %vm223, %v175, 0
    %v231 = vsel %vm223, %v176, 0
    %233 = vmatprep.subr.bf16.mxu0 %v172
    %234 = vmatpush1.bf16.msra.mxu0 %v171
    %235 = vmatprep.subr.bf16.mxu0 %v228
    %236 = vmatpush1.bf16.msra.mxu0 %v225
    %237 = vmatprep.subr.bf16.mxu0 0
    %238 = vmatpush1.bf16.msra.mxu0 0
    %239 = vmatprep.subr.bf16.mxu0 0
    %240 = vmatpush1.bf16.msra.mxu0 0
    %241 = vmatprep.subr.bf16.mxu0 0
    %242 = vmatpush1.bf16.msra.mxu0 0
    %243 = vmatprep.subr.bf16.mxu0 0
    %244 = vmatpush1.bf16.msra.mxu0 0
    %245 = vmatprep.subr.bf16.mxu0 0
    %246 = vmatpush1.bf16.msra.mxu0 0
    %247 = vmatprep.subr.bf16.mxu0 0
    %248 = vmatpush1.bf16.msra.mxu0 0
    %249 = vmatprep.subr.bf16.mxu0 0
    %250 = vmatpush1.bf16.msra.mxu0 0
    %251 = vmatprep.subr.bf16.mxu0 0
    %252 = vmatpush1.bf16.msra.mxu0 0
    %253 = vmatprep.subr.bf16.mxu0 0
    %254 = vmatpush1.bf16.msra.mxu0 0
    %255 = vmatprep.subr.bf16.mxu0 0
    %256 = vmatpush1.bf16.msra.mxu0 0
    %257 = vmatprep.subr.bf16.mxu0 0
    %258 = vmatpush1.bf16.msra.mxu0 0
    %259 = vmatprep.subr.bf16.mxu0 0
    %260 = vmatpush1.bf16.msra.mxu0 0
    %261 = vmatprep.subr.bf16.mxu0 0
    %262 = vmatpush1.bf16.msra.mxu0 0
    %263 = vmatprep.subr.bf16.mxu0 0
    %264 = vmatpush1.bf16.msra.mxu0 0
    %265 = vmatprep.mubr.bf16.mxu0 0
    %266 = vmatmul.mubr.bf16.gmra.mrb[0].mxu0 %v182
    %v267 = vpop.f32.mrb[0].mxu0
    %v268 = vadd.f32 %v69, %v267
    %v269 = vpop.f32.mrb[0].mxu0
    %v270 = vadd.f32 %v73, %v269
    %v271 = vpop.f32.mrb[0].mxu0
    %v272 = vadd.f32 %v69, %v271
    %v273 = vpop.f32.mrb[0].mxu0
    %v274 = vadd.f32 %v73, %v273
    %275 = vmatprep.mubr.bf16.mxu0 0
    %276 = vmatmul.mubr.bf16.gmra.mrb[0].mxu0 %v185
    %v277 = vpop.f32.mrb[0].mxu0
    %v278 = vadd.f32 %v69, %v277
    %v279 = vpop.f32.mrb[0].mxu0
    %v280 = vadd.f32 %v73, %v279
    %v281 = vpop.f32.mrb[0].mxu0
    %v282 = vadd.f32 %v69, %v281
    %v283 = vpop.f32.mrb[0].mxu0
    %v284 = vadd.f32 %v73, %v283
    %285 = vmatprep.mubr.bf16.mxu0 0
    %286 = vmatmul.mubr.bf16.gmra.mrb[0].mxu0 %v188
    %v287 = vpop.f32.mrb[0].mxu0
    %v288 = vadd.f32 %v69, %v287
    %v289 = vpop.f32.mrb[0].mxu0
    %v290 = vadd.f32 %v73, %v289
    %v291 = vpop.f32.mrb[0].mxu0
    %v292 = vadd.f32 %v69, %v291
    %v293 = vpop.f32.mrb[0].mxu0
    %v294 = vadd.f32 %v73, %v293
    %295 = vmatprep.mubr.bf16.mxu0 0
    %296 = vmatmul.mubr.bf16.gmra.mrb[0].mxu0 %v191
    %v297 = vpop.f32.mrb[0].mxu0
    %v298 = vadd.f32 %v69, %v297
    %v299 = vpop.f32.mrb[0].mxu0
    %v300 = vadd.f32 %v73, %v299
    %v301 = vpop.f32.mrb[0].mxu0
    %v302 = vadd.f32 %v69, %v301
    %v303 = vpop.f32.mrb[0].mxu0
    %v304 = vadd.f32 %v73, %v303
    %305 = vmatprep.mubr.bf16.mxu0 0
    %306 = vmatmul.mubr.bf16.gmra.mrb[0].mxu0 %v194
    %v307 = vpop.f32.mrb[0].mxu0
    %v308 = vadd.f32 %v69, %v307
    %v309 = vpop.f32.mrb[0].mxu0
    %v310 = vadd.f32 %v73, %v309
    %v311 = vpop.f32.mrb[0].mxu0
    %v312 = vadd.f32 %v69, %v311
    %v313 = vpop.f32.mrb[0].mxu0
    %v314 = vadd.f32 %v73, %v313
    %315 = vmatprep.mubr.bf16.mxu0 0
    %316 = vmatmul.mubr.bf16.gmra.mrb[0].mxu0 %v197
    %v317 = vpop.f32.mrb[0].mxu0
    %v318 = vadd.f32 %v69, %v317
    %v319 = vpop.f32.mrb[0].mxu0
    %v320 = vadd.f32 %v73, %v319
    %v321 = vpop.f32.mrb[0].mxu0
    %v322 = vadd.f32 %v69, %v321
    %v323 = vpop.f32.mrb[0].mxu0
    %v324 = vadd.f32 %v73, %v323
    %325 = vmatprep.mubr.bf16.mxu0 0
    %326 = vmatmul.mubr.bf16.gmra.mrb[0].mxu0 %v200
    %v327 = vpop.f32.mrb[0].mxu0
    %v328 = vadd.f32 %v69, %v327
    %v329 = vpop.f32.mrb[0].mxu0
    %v330 = vadd.f32 %v73, %v329
    %v331 = vpop.f32.mrb[0].mxu0
    %v332 = vadd.f32 %v69, %v331
    %v333 = vpop.f32.mrb[0].mxu0
    %v334 = vadd.f32 %v73, %v333
    %335 = vmatprep.mubr.bf16.mxu0 0
    %336 = vmatmul.mubr.bf16.gmra.mrb[0].mxu0 %v203
    %v337 = vpop.f32.mrb[0].mxu0
    %v338 = vadd.f32 %v69, %v337
    %v339 = vpop.f32.mrb[0].mxu0
    %v340 = vadd.f32 %v73, %v339
    %v341 = vpop.f32.mrb[0].mxu0
    %v342 = vadd.f32 %v69, %v341
    %v343 = vpop.f32.mrb[0].mxu0
    %v344 = vadd.f32 %v73, %v343
    %345 = vmatprep.mubr.bf16.mxu0 0
    %346 = vmatmul.mubr.bf16.gmra.mrb[0].mxu0 %v206
    %v347 = vpop.f32.mrb[0].mxu0
    %v348 = vadd.f32 %v69, %v347
    %v349 = vpop.f32.mrb[0].mxu0
    %v350 = vadd.f32 %v73, %v349
    %v351 = vpop.f32.mrb[0].mxu0
    %v352 = vadd.f32 %v69, %v351
    %v353 = vpop.f32.mrb[0].mxu0
    %v354 = vadd.f32 %v73, %v353
    %355 = vmatprep.mubr.bf16.mxu0 0
    %356 = vmatmul.mubr.bf16.gmra.mrb[0].mxu0 %v209
    %v357 = vpop.f32.mrb[0].mxu0
    %v358 = vadd.f32 %v69, %v357
    %v359 = vpop.f32.mrb[0].mxu0
    %v360 = vadd.f32 %v73, %v359
    %v361 = vpop.f32.mrb[0].mxu0
    %v362 = vadd.f32 %v69, %v361
    %v363 = vpop.f32.mrb[0].mxu0
    %v364 = vadd.f32 %v73, %v363
    %365 = vmatprep.mubr.bf16.mxu0 0
    %366 = vmatmul.mubr.bf16.gmra.mrb[0].mxu0 %v212
    %v367 = vpop.f32.mrb[0].mxu0
    %v368 = vadd.f32 %v69, %v367
    %v369 = vpop.f32.mrb[0].mxu0
    %v370 = vadd.f32 %v73, %v369
    %v371 = vpop.f32.mrb[0].mxu0
    %v372 = vadd.f32 %v69, %v371
    %v373 = vpop.f32.mrb[0].mxu0
    %v374 = vadd.f32 %v73, %v373
    %375 = vmatprep.mubr.bf16.mxu0 0
    %376 = vmatmul.mubr.bf16.gmra.mrb[0].mxu0 %v215
    %v377 = vpop.f32.mrb[0].mxu0
    %v378 = vadd.f32 %v69, %v377
    %v379 = vpop.f32.mrb[0].mxu0
    %v380 = vadd.f32 %v73, %v379
    %v381 = vpop.f32.mrb[0].mxu0
    %v382 = vadd.f32 %v69, %v381
    %v383 = vpop.f32.mrb[0].mxu0
    %v384 = vadd.f32 %v73, %v383
    %385 = vmatprep.mubr.bf16.mxu0 0
    %386 = vmatmul.mubr.bf16.gmra.mrb[0].mxu0 %v218
    %v387 = vpop.f32.mrb[0].mxu0
    %v388 = vadd.f32 %v69, %v387
    %v389 = vpop.f32.mrb[0].mxu0
    %v390 = vadd.f32 %v73, %v389
    %v391 = vpop.f32.mrb[0].mxu0
    %v392 = vadd.f32 %v69, %v391
    %v393 = vpop.f32.mrb[0].mxu0
    %v394 = vadd.f32 %v73, %v393
    %395 = vmatprep.mubr.bf16.mxu0 0
    %396 = vmatmul.mubr.bf16.gmra.mrb[0].mxu0 %v221
    %v397 = vpop.f32.mrb[0].mxu0
    %v398 = vadd.f32 %v69, %v397
    %v399 = vpop.f32.mrb[0].mxu0
    %v400 = vadd.f32 %v73, %v399
    %v401 = vpop.f32.mrb[0].mxu0
    %v402 = vadd.f32 %v69, %v401
    %v403 = vpop.f32.mrb[0].mxu0
    %v404 = vadd.f32 %v73, %v403
    %405 = vdwg.mxu0
    %406 = vmatprep.subr.bf16.mxu0 0
    %407 = vmatpush1.bf16.msra.mxu0 %v173
    %408 = vmatprep.subr.bf16.mxu0 0
    %409 = vmatpush1.bf16.msra.mxu0 %v231
    %410 = vmatprep.subr.bf16.mxu0 0
    %411 = vmatpush1.bf16.msra.mxu0 0
    %412 = vmatprep.subr.bf16.mxu0 0
    %413 = vmatpush1.bf16.msra.mxu0 0
    %414 = vmatprep.subr.bf16.mxu0 0
    %415 = vmatpush1.bf16.msra.mxu0 0
    %416 = vmatprep.subr.bf16.mxu0 0
    %417 = vmatpush1.bf16.msra.mxu0 0
    %418 = vmatprep.subr.bf16.mxu0 0
    %419 = vmatpush1.bf16.msra.mxu0 0
    %420 = vmatprep.subr.bf16.mxu0 0
    %421 = vmatpush1.bf16.msra.mxu0 0
    %422 = vmatprep.subr.bf16.mxu0 0
    %423 = vmatpush1.bf16.msra.mxu0 0
    %424 = vmatprep.subr.bf16.mxu0 0
    %425 = vmatpush1.bf16.msra.mxu0 0
    %426 = vmatprep.subr.bf16.mxu0 0
    %427 = vmatpush1.bf16.msra.mxu0 0
    %428 = vmatprep.subr.bf16.mxu0 0
    %429 = vmatpush1.bf16.msra.mxu0 0
    %430 = vmatprep.subr.bf16.mxu0 0
    %431 = vmatpush1.bf16.msra.mxu0 0
    %432 = vmatprep.subr.bf16.mxu0 0
    %433 = vmatpush1.bf16.msra.mxu0 0
    %434 = vmatprep.subr.bf16.mxu0 0
    %435 = vmatpush1.bf16.msra.mxu0 0
    %436 = vmatprep.subr.bf16.mxu0 0
    %437 = vmatpush1.bf16.msra.mxu0 0
    %438 = vmatprep.mubr.bf16.mxu0 0
    %439 = vmatmul.mubr.bf16.gmra.mrb[0].mxu0 %v182
    %v440 = vpop.f32.mrb[0].mxu0
    %v441 = vadd.f32 %v77, %v440
    %v442 = vpop.f32.mrb[0].mxu0
    %v443 = vpop.f32.mrb[0].mxu0
    %v444 = vadd.f32 %v77, %v443
    %v445 = vpop.f32.mrb[0].mxu0
    %446 = vmatprep.mubr.bf16.mxu0 0
    %447 = vmatmul.mubr.bf16.gmra.mrb[0].mxu0 %v185
    %v448 = vpop.f32.mrb[0].mxu0
    %v449 = vadd.f32 %v77, %v448
    %v450 = vpop.f32.mrb[0].mxu0
    %v451 = vpop.f32.mrb[0].mxu0
    %v452 = vadd.f32 %v77, %v451
    %v453 = vpop.f32.mrb[0].mxu0
    %454 = vmatprep.mubr.bf16.mxu0 0
    %455 = vmatmul.mubr.bf16.gmra.mrb[0].mxu0 %v188
    %v456 = vpop.f32.mrb[0].mxu0
    %v457 = vadd.f32 %v77, %v456
    %v458 = vpop.f32.mrb[0].mxu0
    %v459 = vpop.f32.mrb[0].mxu0
    %v460 = vadd.f32 %v77, %v459
    %v461 = vpop.f32.mrb[0].mxu0
    %462 = vmatprep.mubr.bf16.mxu0 0
    %463 = vmatmul.mubr.bf16.gmra.mrb[0].mxu0 %v191
    %v464 = vpop.f32.mrb[0].mxu0
    %v465 = vadd.f32 %v77, %v464
    %v466 = vpop.f32.mrb[0].mxu0
    %v467 = vpop.f32.mrb[0].mxu0
    %v468 = vadd.f32 %v77, %v467
    %v469 = vpop.f32.mrb[0].mxu0
    %470 = vmatprep.mubr.bf16.mxu0 0
    %471 = vmatmul.mubr.bf16.gmra.mrb[0].mxu0 %v194
    %v472 = vpop.f32.mrb[0].mxu0
    %v473 = vadd.f32 %v77, %v472
    %v474 = vpop.f32.mrb[0].mxu0
    %v475 = vpop.f32.mrb[0].mxu0
    %v476 = vadd.f32 %v77, %v475
    %v477 = vpop.f32.mrb[0].mxu0
    %478 = vmatprep.mubr.bf16.mxu0 0
    %479 = vmatmul.mubr.bf16.gmra.mrb[0].mxu0 %v197
    %v480 = vpop.f32.mrb[0].mxu0
    %v481 = vadd.f32 %v77, %v480
    %v482 = vpop.f32.mrb[0].mxu0
    %v483 = vpop.f32.mrb[0].mxu0
    %v484 = vadd.f32 %v77, %v483
    %v485 = vpop.f32.mrb[0].mxu0
    %486 = vmatprep.mubr.bf16.mxu0 0
    %487 = vmatmul.mubr.bf16.gmra.mrb[0].mxu0 %v200
    %v488 = vpop.f32.mrb[0].mxu0
    %v489 = vadd.f32 %v77, %v488
    %v490 = vpop.f32.mrb[0].mxu0
    %v491 = vpop.f32.mrb[0].mxu0
    %v492 = vadd.f32 %v77, %v491
    %v493 = vpop.f32.mrb[0].mxu0
    %494 = vmatprep.mubr.bf16.mxu0 0
    %495 = vmatmul.mubr.bf16.gmra.mrb[0].mxu0 %v203
    %v496 = vpop.f32.mrb[0].mxu0
    %v497 = vadd.f32 %v77, %v496
    %v498 = vpop.f32.mrb[0].mxu0
    %v499 = vpop.f32.mrb[0].mxu0
    %v500 = vadd.f32 %v77, %v499
    %v501 = vpop.f32.mrb[0].mxu0
    %502 = vmatprep.mubr.bf16.mxu0 0
    %503 = vmatmul.mubr.bf16.gmra.mrb[0].mxu0 %v206
    %v504 = vpop.f32.mrb[0].mxu0
    %v505 = vadd.f32 %v77, %v504
    %v506 = vpop.f32.mrb[0].mxu0
    %v507 = vpop.f32.mrb[0].mxu0
    %v508 = vadd.f32 %v77, %v507
    %v509 = vpop.f32.mrb[0].mxu0
    %510 = vmatprep.mubr.bf16.mxu0 0
    %511 = vmatmul.mubr.bf16.gmra.mrb[0].mxu0 %v209
    %v512 = vpop.f32.mrb[0].mxu0
    %v513 = vadd.f32 %v77, %v512
    %v514 = vpop.f32.mrb[0].mxu0
    %v515 = vpop.f32.mrb[0].mxu0
    %v516 = vadd.f32 %v77, %v515
    %v517 = vpop.f32.mrb[0].mxu0
    %518 = vmatprep.mubr.bf16.mxu0 0
    %519 = vmatmul.mubr.bf16.gmra.mrb[0].mxu0 %v212
    %v520 = vpop.f32.mrb[0].mxu0
    %v521 = vadd.f32 %v77, %v520
    %v522 = vpop.f32.mrb[0].mxu0
    %v523 = vpop.f32.mrb[0].mxu0
    %v524 = vadd.f32 %v77, %v523
    %v525 = vpop.f32.mrb[0].mxu0
    %526 = vmatprep.mubr.bf16.mxu0 0
    %527 = vmatmul.mubr.bf16.gmra.mrb[0].mxu0 %v215
    %v528 = vpop.f32.mrb[0].mxu0
    %v529 = vadd.f32 %v77, %v528
    %v530 = vpop.f32.mrb[0].mxu0
    %v531 = vpop.f32.mrb[0].mxu0
    %v532 = vadd.f32 %v77, %v531
    %v533 = vpop.f32.mrb[0].mxu0
    %534 = vmatprep.mubr.bf16.mxu0 0
    %535 = vmatmul.mubr.bf16.gmra.mrb[0].mxu0 %v218
    %v536 = vpop.f32.mrb[0].mxu0
    %v537 = vadd.f32 %v77, %v536
    %v538 = vpop.f32.mrb[0].mxu0
    %v539 = vpop.f32.mrb[0].mxu0
    %v540 = vadd.f32 %v77, %v539
    %v541 = vpop.f32.mrb[0].mxu0
    %542 = vmatprep.mubr.bf16.mxu0 0
    %543 = vmatmul.mubr.bf16.gmra.mrb[0].mxu0 %v221
    %v544 = vpop.f32.mrb[0].mxu0
    %v545 = vadd.f32 %v77, %v544
    %v546 = vpop.f32.mrb[0].mxu0
    %v547 = vpop.f32.mrb[0].mxu0
    %v548 = vadd.f32 %v77, %v547
    %v549 = vpop.f32.mrb[0].mxu0
    %550 = vdwg.mxu0
    %551 = vst [vmem:[#allocation2] sm:$0xff] %v268
    %552 = vst [vmem:[#allocation2 + $0x8] sm:$0xff] %v270
    %553 = vst [vmem:[#allocation2 + $0x10] sm:$0xff] %v441
    %554 = vst [vmem:[#allocation2 + $0x18] sm:$0xff] %v272
    %555 = vst [vmem:[#allocation2 + $0x20] sm:$0xff] %v274
    %556 = vst [vmem:[#allocation2 + $0x28] sm:$0xff] %v444
    %557 = vst [vmem:[#allocation2 + $0x30] sm:$0xff] %v278
    %558 = vst [vmem:[#allocation2 + $0x38] sm:$0xff] %v280
    %559 = vst [vmem:[#allocation2 + $0x40] sm:$0xff] %v449
    %560 = vst [vmem:[#allocation2 + $0x48] sm:$0xff] %v282
    %561 = vst [vmem:[#allocation2 + $0x50] sm:$0xff] %v284
    %562 = vst [vmem:[#allocation2 + $0x58] sm:$0xff] %v452
    %563 = vst [vmem:[#allocation2 + $0x60] sm:$0xff] %v288
    %564 = vst [vmem:[#allocation2 + $0x68] sm:$0xff] %v290
    %565 = vst [vmem:[#allocation2 + $0x70] sm:$0xff] %v457
    %566 = vst [vmem:[#allocation2 + $0x78] sm:$0xff] %v292
    %567 = vst [vmem:[#allocation2 + $0x80] sm:$0xff] %v294
    %568 = vst [vmem:[#allocation2 + $0x88] sm:$0xff] %v460
    %569 = vst [vmem:[#allocation2 + $0x90] sm:$0xff] %v298
    %570 = vst [vmem:[#allocation2 + $0x98] sm:$0xff] %v300
    %571 = vst [vmem:[#allocation2 + $0xa0] sm:$0xff] %v465
    %572 = vst [vmem:[#allocation2 + $0xa8] sm:$0xff] %v302
    %573 = vst [vmem:[#allocation2 + $0xb0] sm:$0xff] %v304
    %574 = vst [vmem:[#allocation2 + $0xb8] sm:$0xff] %v468
    %575 = vst [vmem:[#allocation2 + $0xc0] sm:$0xff] %v308
    %576 = vst [vmem:[#allocation2 + $0xc8] sm:$0xff] %v310
    %577 = vst [vmem:[#allocation2 + $0xd0] sm:$0xff] %v473
    %578 = vst [vmem:[#allocation2 + $0xd8] sm:$0xff] %v312
    %579 = vst [vmem:[#allocation2 + $0xe0] sm:$0xff] %v314
    %580 = vst [vmem:[#allocation2 + $0xe8] sm:$0xff] %v476
    %581 = vst [vmem:[#allocation2 + $0xf0] sm:$0xff] %v318
    %582 = vst [vmem:[#allocation2 + $0xf8] sm:$0xff] %v320
    %583 = vst [vmem:[#allocation2 + $0x100] sm:$0xff] %v481
    %584 = vst [vmem:[#allocation2 + $0x108] sm:$0xff] %v322
    %585 = vst [vmem:[#allocation2 + $0x110] sm:$0xff] %v324
    %586 = vst [vmem:[#allocation2 + $0x118] sm:$0xff] %v484
    %587 = vst [vmem:[#allocation2 + $0x120] sm:$0xff] %v328
    %588 = vst [vmem:[#allocation2 + $0x128] sm:$0xff] %v330
    %589 = vst [vmem:[#allocation2 + $0x130] sm:$0xff] %v489
    %590 = vst [vmem:[#allocation2 + $0x138] sm:$0xff] %v332
    %591 = vst [vmem:[#allocation2 + $0x140] sm:$0xff] %v334
    %592 = vst [vmem:[#allocation2 + $0x148] sm:$0xff] %v492
    %593 = vst [vmem:[#allocation2 + $0x150] sm:$0xff] %v338
    %594 = vst [vmem:[#allocation2 + $0x158] sm:$0xff] %v340
    %595 = vst [vmem:[#allocation2 + $0x160] sm:$0xff] %v497
    %596 = vst [vmem:[#allocation2 + $0x168] sm:$0xff] %v342
    %597 = vst [vmem:[#allocation2 + $0x170] sm:$0xff] %v344
    %598 = vst [vmem:[#allocation2 + $0x178] sm:$0xff] %v500
    %599 = vst [vmem:[#allocation2 + $0x180] sm:$0xff] %v348
    %600 = vst [vmem:[#allocation2 + $0x188] sm:$0xff] %v350
    %601 = vst [vmem:[#allocation2 + $0x190] sm:$0xff] %v505
    %602 = vst [vmem:[#allocation2 + $0x198] sm:$0xff] %v352
    %603 = vst [vmem:[#allocation2 + $0x1a0] sm:$0xff] %v354
    %604 = vst [vmem:[#allocation2 + $0x1a8] sm:$0xff] %v508
    %605 = vst [vmem:[#allocation2 + $0x1b0] sm:$0xff] %v358
    %606 = vst [vmem:[#allocation2 + $0x1b8] sm:$0xff] %v360
    %607 = vst [vmem:[#allocation2 + $0x1c0] sm:$0xff] %v513
    %608 = vst [vmem:[#allocation2 + $0x1c8] sm:$0xff] %v362
    %609 = vst [vmem:[#allocation2 + $0x1d0] sm:$0xff] %v364
    %610 = vst [vmem:[#allocation2 + $0x1d8] sm:$0xff] %v516
    %611 = vst [vmem:[#allocation2 + $0x1e0] sm:$0xff] %v368
    %612 = vst [vmem:[#allocation2 + $0x1e8] sm:$0xff] %v370
    %613 = vst [vmem:[#allocation2 + $0x1f0] sm:$0xff] %v521
    %614 = vst [vmem:[#allocation2 + $0x1f8] sm:$0xff] %v372
    %615 = vst [vmem:[#allocation2 + $0x200] sm:$0xff] %v374
    %616 = vst [vmem:[#allocation2 + $0x208] sm:$0xff] %v524
    %617 = vst [vmem:[#allocation2 + $0x210] sm:$0xff] %v378
    %618 = vst [vmem:[#allocation2 + $0x218] sm:$0xff] %v380
    %619 = vst [vmem:[#allocation2 + $0x220] sm:$0xff] %v529
    %620 = vst [vmem:[#allocation2 + $0x228] sm:$0xff] %v382
    %621 = vst [vmem:[#allocation2 + $0x230] sm:$0xff] %v384
    %622 = vst [vmem:[#allocation2 + $0x238] sm:$0xff] %v532
    %623 = vst [vmem:[#allocation2 + $0x240] sm:$0xff] %v388
    %624 = vst [vmem:[#allocation2 + $0x248] sm:$0xff] %v390
    %625 = vst [vmem:[#allocation2 + $0x250] sm:$0xff] %v537
    %626 = vst [vmem:[#allocation2 + $0x258] sm:$0xff] %v392
    %627 = vst [vmem:[#allocation2 + $0x260] sm:$0xff] %v394
    %628 = vst [vmem:[#allocation2 + $0x268] sm:$0xff] %v540
    %629 = vst [vmem:[#allocation2 + $0x270] sm:$0xff] %v398
    %630 = vst [vmem:[#allocation2 + $0x278] sm:$0xff] %v400
    %631 = vst [vmem:[#allocation2 + $0x280] sm:$0xff] %v545
    %632 = vst [vmem:[#allocation2 + $0x288] sm:$0xff] %v402
    %633 = vst [vmem:[#allocation2 + $0x290] sm:$0xff] %v404
    %634 = vst [vmem:[#allocation2 + $0x298] sm:$0xff] %v548
    %v635 = vld [vmem:[%s2] sm:$0xff]
    %v636 = vld [vmem:[%s2 + $0x8] sm:$0xf]
    %v637 = vld [vmem:[%s2 + $0xc] sm:$0xff]
    %v638 = vld [vmem:[%s2 + $0x14] sm:$0xf]
    %v639 = vld [vmem:[%s2 + $0x18] sm:$0xff]
    %v640 = vld [vmem:[%s2 + $0x20] sm:$0xf]
    %v641 = vld [vmem:[%s2 + $0x24] sm:$0xff]
    %v642 = vld [vmem:[%s2 + $0x2c] sm:$0xf]
    %v643 = vld [vmem:[%s2 + $0x30] sm:$0xff]
    %v644 = vld [vmem:[%s2 + $0x38] sm:$0xf]
    %v645 = vld [vmem:[%s2 + $0x3c] sm:$0xff]
    %v646 = vld [vmem:[%s2 + $0x44] sm:$0xf]
    %v647 = vld [vmem:[%s2 + $0x48] sm:$0xff]
    %v648 = vld [vmem:[%s2 + $0x50] sm:$0xf]
    %v649 = vld [vmem:[%s2 + $0x54] sm:$0xff]
    %v650 = vld [vmem:[%s2 + $0x5c] sm:$0xf]
    %v651 = vld [vmem:[%s2 + $0x60] sm:$0xff]
    %v652 = vld [vmem:[%s2 + $0x68] sm:$0xf]
    %v653 = vld [vmem:[%s2 + $0x6c] sm:$0xff]
    %v654 = vld [vmem:[%s2 + $0x74] sm:$0xf]
    %v655 = vld [vmem:[%s2 + $0x78] sm:$0xff]
    %v656 = vld [vmem:[%s2 + $0x80] sm:$0xf]
    %v657 = vld [vmem:[%s2 + $0x84] sm:$0xff]
    %v658 = vld [vmem:[%s2 + $0x8c] sm:$0xf]
    %v659 = vld [vmem:[%s2 + $0x90] sm:$0xff]
    %v660 = vld [vmem:[%s2 + $0x98] sm:$0xf]
    %v661 = vld [vmem:[%s2 + $0x9c] sm:$0xff]
    %v662 = vld [vmem:[%s2 + $0xa4] sm:$0xf]
    %v663 = vld [vmem:[%s2 + $0xa8] sm:$0xff]
    %v664 = vld [vmem:[%s2 + $0xb0] sm:$0xf]
    %v665 = vld [vmem:[%s2 + $0xb4] sm:$0xff]
    %v666 = vld [vmem:[%s2 + $0xbc] sm:$0xf]
    %v667 = vld [vmem:[%s4] sm:$0x7]
    %v669 = vlaneseq
    %v670 = vshrl.u32 %v669, 7
    %v671 = vsub.s32 0, %v670
    %v672 = vrot.slane %v667, %v671
    %v673 = vlaneseq
    %v674 = vshrl.u32 %v673, 7
    %v675 = vsub.s32 1, %v674
    %v676 = vrot.slane %v667, %v675
    %v677 = vlaneseq
    %v678 = vshrl.u32 %v677, 7
    %v679 = vsub.s32 2, %v678
    %v680 = vrot.slane %v667, %v679
    %v684 = vld [vmem:[#allocation2] sm:$0xff]
    %v685 = vld [vmem:[#allocation2 + $0x8] sm:$0xff]
    %v686 = vld [vmem:[#allocation2 + $0x10] sm:$0xff]
    %v719 = vunpack.c.l.b16 %v635
    %v720 = vunpack.c.h.b16 %v635
    %v721 = vunpack.c.l.b16 %v636
    %v722 = vunpack.c.l.b16 %v637
    %v723 = vunpack.c.h.b16 %v637
    %v724 = vunpack.c.l.b16 %v638
    %v725 = vunpack.c.l.b16 %v639
    %v726 = vunpack.c.h.b16 %v639
    %v727 = vunpack.c.l.b16 %v640
    %v728 = vunpack.c.l.b16 %v641
    %v729 = vunpack.c.h.b16 %v641
    %v730 = vunpack.c.l.b16 %v642
    %v731 = vunpack.c.l.b16 %v643
    %v732 = vunpack.c.h.b16 %v643
    %v733 = vunpack.c.l.b16 %v644
    %v734 = vunpack.c.l.b16 %v645
    %v735 = vunpack.c.h.b16 %v645
    %v736 = vunpack.c.l.b16 %v646
    %v737 = vunpack.c.l.b16 %v647
    %v738 = vunpack.c.h.b16 %v647
    %v739 = vunpack.c.l.b16 %v648
    %v740 = vunpack.c.l.b16 %v649
    %v741 = vunpack.c.h.b16 %v649
    %v742 = vunpack.c.l.b16 %v650
    %v743 = vunpack.c.l.b16 %v651
    %v744 = vunpack.c.h.b16 %v651
    %v745 = vunpack.c.l.b16 %v652
    %v746 = vunpack.c.l.b16 %v653
    %v747 = vunpack.c.h.b16 %v653
    %v748 = vunpack.c.l.b16 %v654
    %v749 = vunpack.c.l.b16 %v655
    %v750 = vunpack.c.h.b16 %v655
    %v751 = vunpack.c.l.b16 %v656
    %v752 = vunpack.c.l.b16 %v657
    %v753 = vunpack.c.h.b16 %v657
    %v754 = vunpack.c.l.b16 %v658
    %v755 = vunpack.c.l.b16 %v659
    %v756 = vunpack.c.h.b16 %v659
    %v757 = vunpack.c.l.b16 %v660
    %v758 = vunpack.c.l.b16 %v661
    %v759 = vunpack.c.h.b16 %v661
    %v760 = vunpack.c.l.b16 %v662
    %v761 = vunpack.c.l.b16 %v663
    %v762 = vunpack.c.h.b16 %v663
    %v763 = vunpack.c.l.b16 %v664
    %v764 = vunpack.c.l.b16 %v665
    %v765 = vunpack.c.h.b16 %v665
    %v766 = vunpack.c.l.b16 %v666
    %v767 = vpack.c.b16 %v722, %v719
    %v768 = vpack.c.b16 %v723, %v720
    %v769 = vpack.c.b16 %v724, %v721
    %v770 = vpack.c.b16 %v728, %v725
    %v771 = vpack.c.b16 %v729, %v726
    %v772 = vpack.c.b16 %v730, %v727
    %v773 = vpack.c.b16 %v734, %v731
    %v774 = vpack.c.b16 %v735, %v732
    %v775 = vpack.c.b16 %v736, %v733
    %v776 = vpack.c.b16 %v740, %v737
    %v777 = vpack.c.b16 %v741, %v738
    %v778 = vpack.c.b16 %v742, %v739
    %v779 = vpack.c.b16 %v746, %v743
    %v780 = vpack.c.b16 %v747, %v744
    %v781 = vpack.c.b16 %v748, %v745
    %v782 = vpack.c.b16 %v752, %v749
    %v783 = vpack.c.b16 %v753, %v750
    %v784 = vpack.c.b16 %v754, %v751
    %v785 = vpack.c.b16 %v758, %v755
    %v786 = vpack.c.b16 %v759, %v756
    %v787 = vpack.c.b16 %v760, %v757
    %v788 = vpack.c.b16 %v764, %v761
    %v789 = vpack.c.b16 %v765, %v762
    %v790 = vpack.c.b16 %v766, %v763
    %815 = vmatprep.subr.bf16.mxu0 %v768
    %816 = vmatpush1.bf16.msra.mxu0 %v767
    %817 = vmatprep.subr.bf16.mxu0 %v771
    %818 = vmatpush1.bf16.msra.mxu0 %v770
    %819 = vmatprep.subr.bf16.mxu0 %v774
    %820 = vmatpush1.bf16.msra.mxu0 %v773
    %821 = vmatprep.subr.bf16.mxu0 %v777
    %822 = vmatpush1.bf16.msra.mxu0 %v776
    %823 = vmatprep.subr.bf16.mxu0 %v780
    %824 = vmatpush1.bf16.msra.mxu0 %v779
    %825 = vmatprep.subr.bf16.mxu0 %v783
    %826 = vmatpush1.bf16.msra.mxu0 %v782
    %827 = vmatprep.subr.bf16.mxu0 %v786
    %828 = vmatpush1.bf16.msra.mxu0 %v785
    %829 = vmatprep.subr.bf16.mxu0 %v789
    %830 = vmatpush1.bf16.msra.mxu0 %v788
    %831 = vmatprep.subr.bf16.mxu0 0
    %832 = vmatpush1.bf16.msra.mxu0 0
    %833 = vmatprep.subr.bf16.mxu0 0
    %834 = vmatpush1.bf16.msra.mxu0 0
    %835 = vmatprep.subr.bf16.mxu0 0
    %836 = vmatpush1.bf16.msra.mxu0 0
    %837 = vmatprep.subr.bf16.mxu0 0
    %838 = vmatpush1.bf16.msra.mxu0 0
    %839 = vmatprep.subr.bf16.mxu0 0
    %840 = vmatpush1.bf16.msra.mxu0 0
    %841 = vmatprep.subr.bf16.mxu0 0
    %842 = vmatpush1.bf16.msra.mxu0 0
    %843 = vmatprep.subr.bf16.mxu0 0
    %844 = vmatpush1.bf16.msra.mxu0 0
    %845 = vmatprep.subr.bf16.mxu0 0
    %846 = vmatpush1.bf16.msra.mxu0 0
    %847 = vmatprep.mubr.bf16.mxu0 0
    %848 = vmatmul.mubr.bf16.gmra.mrb[0].mxu0 0
    %v849 = vpop.f32.mrb[0].mxu0
    %v850 = vadd.f32 %v672, %v849
    %v851 = vpop.f32.mrb[0].mxu0
    %v852 = vadd.f32 %v676, %v851
    %v853 = vpop.f32.mrb[0].mxu0
    %v854 = vpop.f32.mrb[0].mxu0
    %855 = vdwg.mxu0
    %856 = vmatprep.subr.bf16.mxu0 0
    %857 = vmatpush1.bf16.msra.mxu0 %v769
    %858 = vmatprep.subr.bf16.mxu0 0
    %859 = vmatpush1.bf16.msra.mxu0 %v772
    %860 = vmatprep.subr.bf16.mxu0 0
    %861 = vmatpush1.bf16.msra.mxu0 %v775
    %862 = vmatprep.subr.bf16.mxu0 0
    %863 = vmatpush1.bf16.msra.mxu0 %v778
    %864 = vmatprep.subr.bf16.mxu0 0
    %865 = vmatpush1.bf16.msra.mxu0 %v781
    %866 = vmatprep.subr.bf16.mxu0 0
    %867 = vmatpush1.bf16.msra.mxu0 %v784
    %868 = vmatprep.subr.bf16.mxu0 0
    %869 = vmatpush1.bf16.msra.mxu0 %v787
    %870 = vmatprep.subr.bf16.mxu0 0
    %871 = vmatpush1.bf16.msra.mxu0 %v790
    %872 = vmatprep.subr.bf16.mxu0 0
    %873 = vmatpush1.bf16.msra.mxu0 0
    %874 = vmatprep.subr.bf16.mxu0 0
    %875 = vmatpush1.bf16.msra.mxu0 0
    %876 = vmatprep.subr.bf16.mxu0 0
    %877 = vmatpush1.bf16.msra.mxu0 0
    %878 = vmatprep.subr.bf16.mxu0 0
    %879 = vmatpush1.bf16.msra.mxu0 0
    %880 = vmatprep.subr.bf16.mxu0 0
    %881 = vmatpush1.bf16.msra.mxu0 0
    %882 = vmatprep.subr.bf16.mxu0 0
    %883 = vmatpush1.bf16.msra.mxu0 0
    %884 = vmatprep.subr.bf16.mxu0 0
    %885 = vmatpush1.bf16.msra.mxu0 0
    %886 = vmatprep.subr.bf16.mxu0 0
    %887 = vmatpush1.bf16.msra.mxu0 0
    %888 = vmatprep.mubr.bf16.mxu0 0
    %889 = vmatmul.mubr.bf16.gmra.mrb[0].mxu0 0
    %v890 = vpop.f32.mrb[0].mxu0
    %v891 = vadd.f32 %v680, %v890
    %v892 = vpop.f32.mrb[0].mxu0
    %v893 = vpop.f32.mrb[0].mxu0
    %v894 = vpop.f32.mrb[0].mxu0
    %895 = vdwg.mxu0
    %v896 = vadd.f32 %v684, %v850
    %v897 = vmul.f32 %v896, 0.5
    %v898 = vtanh.pop %v897
    %v899 = vmul.f32 %v898, 0.5
    %v900 = vadd.f32 %v899, 0.5
    %v901 = vadd.f32 %v685, %v852
    %v902 = vmul.f32 %v901, 0.5
    %v903 = vtanh.pop %v902
    %v904 = vmul.f32 %v903, 0.5
    %v905 = vadd.f32 %v904, 0.5
    %v906 = vmul.f32 %v900, %v891
    %v907 = vadd.f32 %v686, %v906
    %v908 = vtanh.pop %v907
    %v909 = vsub.f32 0.0, %v908
    %v910 = vmul.f32 %v905, %v909
    %v911 = vadd.f32 %v908, %v910
    %v912 = vld [vmem:[#allocation2 + $0x18] sm:$0xff]
    %v913 = vld [vmem:[#allocation2 + $0x20] sm:$0xff]
    %v914 = vld [vmem:[#allocation2 + $0x28] sm:$0xff]
    %v915 = vpack.c.bf16 %v911, %v911
    %916 = vmatprep.subr.bf16.mxu0 %v768
    %917 = vmatpush1.bf16.msra.mxu0 %v767
    %918 = vmatprep.subr.bf16.mxu0 %v771
    %919 = vmatpush1.bf16.msra.mxu0 %v770
    %920 = vmatprep.subr.bf16.mxu0 %v774
    %921 = vmatpush1.bf16.msra.mxu0 %v773
    %922 = vmatprep.subr.bf16.mxu0 %v777
    %923 = vmatpush1.bf16.msra.mxu0 %v776
    %924 = vmatprep.subr.bf16.mxu0 %v780
    %925 = vmatpush1.bf16.msra.mxu0 %v779
    %926 = vmatprep.subr.bf16.mxu0 %v783
    %927 = vmatpush1.bf16.msra.mxu0 %v782
    %928 = vmatprep.subr.bf16.mxu0 %v786
    %929 = vmatpush1.bf16.msra.mxu0 %v785
    %930 = vmatprep.subr.bf16.mxu0 %v789
    %931 = vmatpush1.bf16.msra.mxu0 %v788
    %932 = vmatprep.subr.bf16.mxu0 0
    %933 = vmatpush1.bf16.msra.mxu0 0
    %934 = vmatprep.subr.bf16.mxu0 0
    %935 = vmatpush1.bf16.msra.mxu0 0
    %936 = vmatprep.subr.bf16.mxu0 0
    %937 = vmatpush1.bf16.msra.mxu0 0
    %938 = vmatprep.subr.bf16.mxu0 0
    %939 = vmatpush1.bf16.msra.mxu0 0
    %940 = vmatprep.subr.bf16.mxu0 0
    %941 = vmatpush1.bf16.msra.mxu0 0
    %942 = vmatprep.subr.bf16.mxu0 0
    %943 = vmatpush1.bf16.msra.mxu0 0
    %944 = vmatprep.subr.bf16.mxu0 0
    %945 = vmatpush1.bf16.msra.mxu0 0
    %946 = vmatprep.subr.bf16.mxu0 0
    %947 = vmatpush1.bf16.msra.mxu0 0
    %948 = vmatprep.mubr.bf16.mxu0 0
    %949 = vmatmul.mubr.bf16.gmra.mrb[0].mxu0 %v915
    %v950 = vpop.f32.mrb[0].mxu0
    %v951 = vadd.f32 %v672, %v950
    %v952 = vpop.f32.mrb[0].mxu0
    %v953 = vadd.f32 %v676, %v952
    %v954 = vpop.f32.mrb[0].mxu0
    %v955 = vpop.f32.mrb[0].mxu0
    %956 = vdwg.mxu0
    %957 = vmatprep.subr.bf16.mxu0 0
    %958 = vmatpush1.bf16.msra.mxu0 %v769
    %959 = vmatprep.subr.bf16.mxu0 0
    %960 = vmatpush1.bf16.msra.mxu0 %v772
    %961 = vmatprep.subr.bf16.mxu0 0
    %962 = vmatpush1.bf16.msra.mxu0 %v775
    %963 = vmatprep.subr.bf16.mxu0 0
    %964 = vmatpush1.bf16.msra.mxu0 %v778
    %965 = vmatprep.subr.bf16.mxu0 0
    %966 = vmatpush1.bf16.msra.mxu0 %v781
    %967 = vmatprep.subr.bf16.mxu0 0
    %968 = vmatpush1.bf16.msra.mxu0 %v784
    %969 = vmatprep.subr.bf16.mxu0 0
    %970 = vmatpush1.bf16.msra.mxu0 %v787
    %971 = vmatprep.subr.bf16.mxu0 0
    %972 = vmatpush1.bf16.msra.mxu0 %v790
    %973 = vmatprep.subr.bf16.mxu0 0
    %974 = vmatpush1.bf16.msra.mxu0 0
    %975 = vmatprep.subr.bf16.mxu0 0
    %976 = vmatpush1.bf16.msra.mxu0 0
    %977 = vmatprep.subr.bf16.mxu0 0
    %978 = vmatpush1.bf16.msra.mxu0 0
    %979 = vmatprep.subr.bf16.mxu0 0
    %980 = vmatpush1.bf16.msra.mxu0 0
    %981 = vmatprep.subr.bf16.mxu0 0
    %982 = vmatpush1.bf16.msra.mxu0 0
    %983 = vmatprep.subr.bf16.mxu0 0
    %984 = vmatpush1.bf16.msra.mxu0 0
    %985 = vmatprep.subr.bf16.mxu0 0
    %986 = vmatpush1.bf16.msra.mxu0 0
    %987 = vmatprep.subr.bf16.mxu0 0
    %988 = vmatpush1.bf16.msra.mxu0 0
    %989 = vmatprep.mubr.bf16.mxu0 0
    %990 = vmatmul.mubr.bf16.gmra.mrb[0].mxu0 %v915
    %v991 = vpop.f32.mrb[0].mxu0
    %v992 = vadd.f32 %v680, %v991
    %v993 = vpop.f32.mrb[0].mxu0
    %v994 = vpop.f32.mrb[0].mxu0
    %v995 = vpop.f32.mrb[0].mxu0
    %996 = vdwg.mxu0
    %v997 = vadd.f32 %v912, %v951
    %v998 = vmul.f32 %v997, 0.5
    %v999 = vtanh.pop %v998
    %v1000 = vmul.f32 %v999, 0.5
    %v1001 = vadd.f32 %v1000, 0.5
    %v1002 = vadd.f32 %v913, %v953
    %v1003 = vmul.f32 %v1002, 0.5
    %v1004 = vtanh.pop %v1003
    %v1005 = vmul.f32 %v1004, 0.5
    %v1006 = vadd.f32 %v1005, 0.5
    %v1007 = vmul.f32 %v1001, %v992
    %v1008 = vadd.f32 %v914, %v1007
    %v1009 = vtanh.pop %v1008
    %v1010 = vsub.f32 %v911, %v1009
    %v1011 = vmul.f32 %v1006, %v1010
    %v1012 = vadd.f32 %v1009, %v1011
    %v1013 = vld [vmem:[#allocation2 + $0x30] sm:$0xff]
    %v1014 = vld [vmem:[#allocation2 + $0x38] sm:$0xff]
    %v1015 = vld [vmem:[#allocation2 + $0x40] sm:$0xff]
    %v1016 = vpack.c.bf16 %v1012, %v1012
    %1017 = vmatprep.subr.bf16.mxu0 %v768
    %1018 = vmatpush1.bf16.msra.mxu0 %v767
    %1019 = vmatprep.subr.bf16.mxu0 %v771
    %1020 = vmatpush1.bf16.msra.mxu0 %v770
    %1021 = vmatprep.subr.bf16.mxu0 %v774
    %1022 = vmatpush1.bf16.msra.mxu0 %v773
    %1023 = vmatprep.subr.bf16.mxu0 %v777
    %1024 = vmatpush1.bf16.msra.mxu0 %v776
    %1025 = vmatprep.subr.bf16.mxu0 %v780
    %1026 = vmatpush1.bf16.msra.mxu0 %v779
    %1027 = vmatprep.subr.bf16.mxu0 %v783
    %1028 = vmatpush1.bf16.msra.mxu0 %v782
    %1029 = vmatprep.subr.bf16.mxu0 %v786
    %1030 = vmatpush1.bf16.msra.mxu0 %v785
    %1031 = vmatprep.subr.bf16.mxu0 %v789
    %1032 = vmatpush1.bf16.msra.mxu0 %v788
    %1033 = vmatprep.subr.bf16.mxu0 0
    %1034 = vmatpush1.bf16.msra.mxu0 0
    %1035 = vmatprep.subr.bf16.mxu0 0
    %1036 = vmatpush1.bf16.msra.mxu0 0
    %1037 = vmatprep.subr.bf16.mxu0 0
    %1038 = vmatpush1.bf16.msra.mxu0 0
    %1039 = vmatprep.subr.bf16.mxu0 0
    %1040 = vmatpush1.bf16.msra.mxu0 0
    %1041 = vmatprep.subr.bf16.mxu0 0
    %1042 = vmatpush1.bf16.msra.mxu0 0
    %1043 = vmatprep.subr.bf16.mxu0 0
    %1044 = vmatpush1.bf16.msra.mxu0 0
    %1045 = vmatprep.subr.bf16.mxu0 0
    %1046 = vmatpush1.bf16.msra.mxu0 0
    %1047 = vmatprep.subr.bf16.mxu0 0
    %1048 = vmatpush1.bf16.msra.mxu0 0
    %1049 = vmatprep.mubr.bf16.mxu0 0
    %1050 = vmatmul.mubr.bf16.gmra.mrb[0].mxu0 %v1016
    %v1051 = vpop.f32.mrb[0].mxu0
    %v1052 = vadd.f32 %v672, %v1051
    %v1053 = vpop.f32.mrb[0].mxu0
    %v1054 = vadd.f32 %v676, %v1053
    %v1055 = vpop.f32.mrb[0].mxu0
    %v1056 = vpop.f32.mrb[0].mxu0
    %1057 = vdwg.mxu0
    %1058 = vmatprep.subr.bf16.mxu0 0
    %1059 = vmatpush1.bf16.msra.mxu0 %v769
    %1060 = vmatprep.subr.bf16.mxu0 0
    %1061 = vmatpush1.bf16.msra.mxu0 %v772
    %1062 = vmatprep.subr.bf16.mxu0 0
    %1063 = vmatpush1.bf16.msra.mxu0 %v775
    %1064 = vmatprep.subr.bf16.mxu0 0
    %1065 = vmatpush1.bf16.msra.mxu0 %v778
    %1066 = vmatprep.subr.bf16.mxu0 0
    %1067 = vmatpush1.bf16.msra.mxu0 %v781
    %1068 = vmatprep.subr.bf16.mxu0 0
    %1069 = vmatpush1.bf16.msra.mxu0 %v784
    %1070 = vmatprep.subr.bf16.mxu0 0
    %1071 = vmatpush1.bf16.msra.mxu0 %v787
    %1072 = vmatprep.subr.bf16.mxu0 0
    %1073 = vmatpush1.bf16.msra.mxu0 %v790
    %1074 = vmatprep.subr.bf16.mxu0 0
    %1075 = vmatpush1.bf16.msra.mxu0 0
    %1076 = vmatprep.subr.bf16.mxu0 0
    %1077 = vmatpush1.bf16.msra.mxu0 0
    %1078 = vmatprep.subr.bf16.mxu0 0
    %1079 = vmatpush1.bf16.msra.mxu0 0
    %1080 = vmatprep.subr.bf16.mxu0 0
    %1081 = vmatpush1.bf16.msra.mxu0 0
    %1082 = vmatprep.subr.bf16.mxu0 0
    %1083 = vmatpush1.bf16.msra.mxu0 0
    %1084 = vmatprep.subr.bf16.mxu0 0
    %1085 = vmatpush1.bf16.msra.mxu0 0
    %1086 = vmatprep.subr.bf16.mxu0 0
    %1087 = vmatpush1.bf16.msra.mxu0 0
    %1088 = vmatprep.subr.bf16.mxu0 0
    %1089 = vmatpush1.bf16.msra.mxu0 0
    %1090 = vmatprep.mubr.bf16.mxu0 0
    %1091 = vmatmul.mubr.bf16.gmra.mrb[0].mxu0 %v1016
    %v1092 = vpop.f32.mrb[0].mxu0
    %v1093 = vadd.f32 %v680, %v1092
    %v1094 = vpop.f32.mrb[0].mxu0
    %v1095 = vpop.f32.mrb[0].mxu0
    %v1096 = vpop.f32.mrb[0].mxu0
    %1097 = vdwg.mxu0
    %v1098 = vadd.f32 %v1013, %v1052
    %v1099 = vmul.f32 %v1098, 0.5
    %v1100 = vtanh.pop %v1099
    %v1101 = vmul.f32 %v1100, 0.5
    %v1102 = vadd.f32 %v1101, 0.5
    %v1103 = vadd.f32 %v1014, %v1054
    %v1104 = vmul.f32 %v1103, 0.5
    %v1105 = vtanh.pop %v1104
    %v1106 = vmul.f32 %v1105, 0.5
    %v1107 = vadd.f32 %v1106, 0.5
    %v1108 = vmul.f32 %v1102, %v1093
    %v1109 = vadd.f32 %v1015, %v1108
    %v1110 = vtanh.pop %v1109
    %v1111 = vsub.f32 %v1012, %v1110
    %v1112 = vmul.f32 %v1107, %v1111
    %v1113 = vadd.f32 %v1110, %v1112
    %v1114 = vld [vmem:[#allocation2 + $0x48] sm:$0xff]
    %v1115 = vld [vmem:[#allocation2 + $0x50] sm:$0xff]
    %v1116 = vld [vmem:[#allocation2 + $0x58] sm:$0xff]
    %v1117 = vpack.c.bf16 %v1113, %v1113
    %1118 = vmatprep.subr.bf16.mxu0 %v768
    %1119 = vmatpush1.bf16.msra.mxu0 %v767
    %1120 = vmatprep.subr.bf16.mxu0 %v771
    %1121 = vmatpush1.bf16.msra.mxu0 %v770
    %1122 = vmatprep.subr.bf16.mxu0 %v774
    %1123 = vmatpush1.bf16.msra.mxu0 %v773
    %1124 = vmatprep.subr.bf16.mxu0 %v777
    %1125 = vmatpush1.bf16.msra.mxu0 %v776
    %1126 = vmatprep.subr.bf16.mxu0 %v780
    %1127 = vmatpush1.bf16.msra.mxu0 %v779
    %1128 = vmatprep.subr.bf16.mxu0 %v783
    %1129 = vmatpush1.bf16.msra.mxu0 %v782
    %1130 = vmatprep.subr.bf16.mxu0 %v786
    %1131 = vmatpush1.bf16.msra.mxu0 %v785
    %1132 = vmatprep.subr.bf16.mxu0 %v789
    %1133 = vmatpush1.bf16.msra.mxu0 %v788
    %1134 = vmatprep.subr.bf16.mxu0 0
    %1135 = vmatpush1.bf16.msra.mxu0 0
    %1136 = vmatprep.subr.bf16.mxu0 0
    %1137 = vmatpush1.bf16.msra.mxu0 0
    %1138 = vmatprep.subr.bf16.mxu0 0
    %1139 = vmatpush1.bf16.msra.mxu0 0
    %1140 = vmatprep.subr.bf16.mxu0 0
    %1141 = vmatpush1.bf16.msra.mxu0 0
    %1142 = vmatprep.subr.bf16.mxu0 0
    %1143 = vmatpush1.bf16.msra.mxu0 0
    %1144 = vmatprep.subr.bf16.mxu0 0
    %1145 = vmatpush1.bf16.msra.mxu0 0
    %1146 = vmatprep.subr.bf16.mxu0 0
    %1147 = vmatpush1.bf16.msra.mxu0 0
    %1148 = vmatprep.subr.bf16.mxu0 0
    %1149 = vmatpush1.bf16.msra.mxu0 0
    %1150 = vmatprep.mubr.bf16.mxu0 0
    %1151 = vmatmul.mubr.bf16.gmra.mrb[0].mxu0 %v1117
    %v1152 = vpop.f32.mrb[0].mxu0
    %v1153 = vadd.f32 %v672, %v1152
    %v1154 = vpop.f32.mrb[0].mxu0
    %v1155 = vadd.f32 %v676, %v1154
    %v1156 = vpop.f32.mrb[0].mxu0
    %v1157 = vpop.f32.mrb[0].mxu0
    %1158 = vdwg.mxu0
    %1159 = vmatprep.subr.bf16.mxu0 0
    %1160 = vmatpush1.bf16.msra.mxu0 %v769
    %1161 = vmatprep.subr.bf16.mxu0 0
    %1162 = vmatpush1.bf16.msra.mxu0 %v772
    %1163 = vmatprep.subr.bf16.mxu0 0
    %1164 = vmatpush1.bf16.msra.mxu0 %v775
    %1165 = vmatprep.subr.bf16.mxu0 0
    %1166 = vmatpush1.bf16.msra.mxu0 %v778
    %1167 = vmatprep.subr.bf16.mxu0 0
    %1168 = vmatpush1.bf16.msra.mxu0 %v781
    %1169 = vmatprep.subr.bf16.mxu0 0
    %1170 = vmatpush1.bf16.msra.mxu0 %v784
    %1171 = vmatprep.subr.bf16.mxu0 0
    %1172 = vmatpush1.bf16.msra.mxu0 %v787
    %1173 = vmatprep.subr.bf16.mxu0 0
    %1174 = vmatpush1.bf16.msra.mxu0 %v790
    %1175 = vmatprep.subr.bf16.mxu0 0
    %1176 = vmatpush1.bf16.msra.mxu0 0
    %1177 = vmatprep.subr.bf16.mxu0 0
    %1178 = vmatpush1.bf16.msra.mxu0 0
    %1179 = vmatprep.subr.bf16.mxu0 0
    %1180 = vmatpush1.bf16.msra.mxu0 0
    %1181 = vmatprep.subr.bf16.mxu0 0
    %1182 = vmatpush1.bf16.msra.mxu0 0
    %1183 = vmatprep.subr.bf16.mxu0 0
    %1184 = vmatpush1.bf16.msra.mxu0 0
    %1185 = vmatprep.subr.bf16.mxu0 0
    %1186 = vmatpush1.bf16.msra.mxu0 0
    %1187 = vmatprep.subr.bf16.mxu0 0
    %1188 = vmatpush1.bf16.msra.mxu0 0
    %1189 = vmatprep.subr.bf16.mxu0 0
    %1190 = vmatpush1.bf16.msra.mxu0 0
    %1191 = vmatprep.mubr.bf16.mxu0 0
    %1192 = vmatmul.mubr.bf16.gmra.mrb[0].mxu0 %v1117
    %v1193 = vpop.f32.mrb[0].mxu0
    %v1194 = vadd.f32 %v680, %v1193
    %v1195 = vpop.f32.mrb[0].mxu0
    %v1196 = vpop.f32.mrb[0].mxu0
    %v1197 = vpop.f32.mrb[0].mxu0
    %1198 = vdwg.mxu0
    %v1199 = vadd.f32 %v1114, %v1153
    %v1200 = vmul.f32 %v1199, 0.5
    %v1201 = vtanh.pop %v1200
    %v1202 = vmul.f32 %v1201, 0.5
    %v1203 = vadd.f32 %v1202, 0.5
    %v1204 = vadd.f32 %v1115, %v1155
    %v1205 = vmul.f32 %v1204, 0.5
    %v1206 = vtanh.pop %v1205
    %v1207 = vmul.f32 %v1206, 0.5
    %v1208 = vadd.f32 %v1207, 0.5
    %v1209 = vmul.f32 %v1203, %v1194
    %v1210 = vadd.f32 %v1116, %v1209
    %v1211 = vtanh.pop %v1210
    %v1212 = vsub.f32 %v1113, %v1211
    %v1213 = vmul.f32 %v1208, %v1212
    %v1214 = vadd.f32 %v1211, %v1213
    %v1215 = vld [vmem:[#allocation2 + $0x60] sm:$0xff]
    %v1216 = vld [vmem:[#allocation2 + $0x68] sm:$0xff]
    %v1217 = vld [vmem:[#allocation2 + $0x70] sm:$0xff]
    %v1218 = vpack.c.bf16 %v1214, %v1214
    %1219 = vmatprep.subr.bf16.mxu0 %v768
    %1220 = vmatpush1.bf16.msra.mxu0 %v767
    %1221 = vmatprep.subr.bf16.mxu0 %v771
    %1222 = vmatpush1.bf16.msra.mxu0 %v770
    %1223 = vmatprep.subr.bf16.mxu0 %v774
    %1224 = vmatpush1.bf16.msra.mxu0 %v773
    %1225 = vmatprep.subr.bf16.mxu0 %v777
    %1226 = vmatpush1.bf16.msra.mxu0 %v776
    %1227 = vmatprep.subr.bf16.mxu0 %v780
    %1228 = vmatpush1.bf16.msra.mxu0 %v779
    %1229 = vmatprep.subr.bf16.mxu0 %v783
    %1230 = vmatpush1.bf16.msra.mxu0 %v782
    %1231 = vmatprep.subr.bf16.mxu0 %v786
    %1232 = vmatpush1.bf16.msra.mxu0 %v785
    %1233 = vmatprep.subr.bf16.mxu0 %v789
    %1234 = vmatpush1.bf16.msra.mxu0 %v788
    %1235 = vmatprep.subr.bf16.mxu0 0
    %1236 = vmatpush1.bf16.msra.mxu0 0
    %1237 = vmatprep.subr.bf16.mxu0 0
    %1238 = vmatpush1.bf16.msra.mxu0 0
    %1239 = vmatprep.subr.bf16.mxu0 0
    %1240 = vmatpush1.bf16.msra.mxu0 0
    %1241 = vmatprep.subr.bf16.mxu0 0
    %1242 = vmatpush1.bf16.msra.mxu0 0
    %1243 = vmatprep.subr.bf16.mxu0 0
    %1244 = vmatpush1.bf16.msra.mxu0 0
    %1245 = vmatprep.subr.bf16.mxu0 0
    %1246 = vmatpush1.bf16.msra.mxu0 0
    %1247 = vmatprep.subr.bf16.mxu0 0
    %1248 = vmatpush1.bf16.msra.mxu0 0
    %1249 = vmatprep.subr.bf16.mxu0 0
    %1250 = vmatpush1.bf16.msra.mxu0 0
    %1251 = vmatprep.mubr.bf16.mxu0 0
    %1252 = vmatmul.mubr.bf16.gmra.mrb[0].mxu0 %v1218
    %v1253 = vpop.f32.mrb[0].mxu0
    %v1254 = vadd.f32 %v672, %v1253
    %v1255 = vpop.f32.mrb[0].mxu0
    %v1256 = vadd.f32 %v676, %v1255
    %v1257 = vpop.f32.mrb[0].mxu0
    %v1258 = vpop.f32.mrb[0].mxu0
    %1259 = vdwg.mxu0
    %1260 = vmatprep.subr.bf16.mxu0 0
    %1261 = vmatpush1.bf16.msra.mxu0 %v769
    %1262 = vmatprep.subr.bf16.mxu0 0
    %1263 = vmatpush1.bf16.msra.mxu0 %v772
    %1264 = vmatprep.subr.bf16.mxu0 0
    %1265 = vmatpush1.bf16.msra.mxu0 %v775
    %1266 = vmatprep.subr.bf16.mxu0 0
    %1267 = vmatpush1.bf16.msra.mxu0 %v778
    %1268 = vmatprep.subr.bf16.mxu0 0
    %1269 = vmatpush1.bf16.msra.mxu0 %v781
    %1270 = vmatprep.subr.bf16.mxu0 0
    %1271 = vmatpush1.bf16.msra.mxu0 %v784
    %1272 = vmatprep.subr.bf16.mxu0 0
    %1273 = vmatpush1.bf16.msra.mxu0 %v787
    %1274 = vmatprep.subr.bf16.mxu0 0
    %1275 = vmatpush1.bf16.msra.mxu0 %v790
    %1276 = vmatprep.subr.bf16.mxu0 0
    %1277 = vmatpush1.bf16.msra.mxu0 0
    %1278 = vmatprep.subr.bf16.mxu0 0
    %1279 = vmatpush1.bf16.msra.mxu0 0
    %1280 = vmatprep.subr.bf16.mxu0 0
    %1281 = vmatpush1.bf16.msra.mxu0 0
    %1282 = vmatprep.subr.bf16.mxu0 0
    %1283 = vmatpush1.bf16.msra.mxu0 0
    %1284 = vmatprep.subr.bf16.mxu0 0
    %1285 = vmatpush1.bf16.msra.mxu0 0
    %1286 = vmatprep.subr.bf16.mxu0 0
    %1287 = vmatpush1.bf16.msra.mxu0 0
    %1288 = vmatprep.subr.bf16.mxu0 0
    %1289 = vmatpush1.bf16.msra.mxu0 0
    %1290 = vmatprep.subr.bf16.mxu0 0
    %1291 = vmatpush1.bf16.msra.mxu0 0
    %1292 = vmatprep.mubr.bf16.mxu0 0
    %1293 = vmatmul.mubr.bf16.gmra.mrb[0].mxu0 %v1218
    %v1294 = vpop.f32.mrb[0].mxu0
    %v1295 = vadd.f32 %v680, %v1294
    %v1296 = vpop.f32.mrb[0].mxu0
    %v1297 = vpop.f32.mrb[0].mxu0
    %v1298 = vpop.f32.mrb[0].mxu0
    %1299 = vdwg.mxu0
    %v1300 = vadd.f32 %v1215, %v1254
    %v1301 = vmul.f32 %v1300, 0.5
    %v1302 = vtanh.pop %v1301
    %v1303 = vmul.f32 %v1302, 0.5
    %v1304 = vadd.f32 %v1303, 0.5
    %v1305 = vadd.f32 %v1216, %v1256
    %v1306 = vmul.f32 %v1305, 0.5
    %v1307 = vtanh.pop %v1306
    %v1308 = vmul.f32 %v1307, 0.5
    %v1309 = vadd.f32 %v1308, 0.5
    %v1310 = vmul.f32 %v1304, %v1295
    %v1311 = vadd.f32 %v1217, %v1310
    %v1312 = vtanh.pop %v1311
    %v1313 = vsub.f32 %v1214, %v1312
    %v1314 = vmul.f32 %v1309, %v1313
    %v1315 = vadd.f32 %v1312, %v1314
    %v1316 = vld [vmem:[#allocation2 + $0x78] sm:$0xff]
    %v1317 = vld [vmem:[#allocation2 + $0x80] sm:$0xff]
    %v1318 = vld [vmem:[#allocation2 + $0x88] sm:$0xff]
    %v1319 = vpack.c.bf16 %v1315, %v1315
    %1320 = vmatprep.subr.bf16.mxu0 %v768
    %1321 = vmatpush1.bf16.msra.mxu0 %v767
    %1322 = vmatprep.subr.bf16.mxu0 %v771
    %1323 = vmatpush1.bf16.msra.mxu0 %v770
    %1324 = vmatprep.subr.bf16.mxu0 %v774
    %1325 = vmatpush1.bf16.msra.mxu0 %v773
    %1326 = vmatprep.subr.bf16.mxu0 %v777
    %1327 = vmatpush1.bf16.msra.mxu0 %v776
    %1328 = vmatprep.subr.bf16.mxu0 %v780
    %1329 = vmatpush1.bf16.msra.mxu0 %v779
    %1330 = vmatprep.subr.bf16.mxu0 %v783
    %1331 = vmatpush1.bf16.msra.mxu0 %v782
    %1332 = vmatprep.subr.bf16.mxu0 %v786
    %1333 = vmatpush1.bf16.msra.mxu0 %v785
    %1334 = vmatprep.subr.bf16.mxu0 %v789
    %1335 = vmatpush1.bf16.msra.mxu0 %v788
    %1336 = vmatprep.subr.bf16.mxu0 0
    %1337 = vmatpush1.bf16.msra.mxu0 0
    %1338 = vmatprep.subr.bf16.mxu0 0
    %1339 = vmatpush1.bf16.msra.mxu0 0
    %1340 = vmatprep.subr.bf16.mxu0 0
    %1341 = vmatpush1.bf16.msra.mxu0 0
    %1342 = vmatprep.subr.bf16.mxu0 0
    %1343 = vmatpush1.bf16.msra.mxu0 0
    %1344 = vmatprep.subr.bf16.mxu0 0
    %1345 = vmatpush1.bf16.msra.mxu0 0
    %1346 = vmatprep.subr.bf16.mxu0 0
    %1347 = vmatpush1.bf16.msra.mxu0 0
    %1348 = vmatprep.subr.bf16.mxu0 0
    %1349 = vmatpush1.bf16.msra.mxu0 0
    %1350 = vmatprep.subr.bf16.mxu0 0
    %1351 = vmatpush1.bf16.msra.mxu0 0
    %1352 = vmatprep.mubr.bf16.mxu0 0
    %1353 = vmatmul.mubr.bf16.gmra.mrb[0].mxu0 %v1319
    %v1354 = vpop.f32.mrb[0].mxu0
    %v1355 = vadd.f32 %v672, %v1354
    %v1356 = vpop.f32.mrb[0].mxu0
    %v1357 = vadd.f32 %v676, %v1356
    %v1358 = vpop.f32.mrb[0].mxu0
    %v1359 = vpop.f32.mrb[0].mxu0
    %1360 = vdwg.mxu0
    %1361 = vmatprep.subr.bf16.mxu0 0
    %1362 = vmatpush1.bf16.msra.mxu0 %v769
    %1363 = vmatprep.subr.bf16.mxu0 0
    %1364 = vmatpush1.bf16.msra.mxu0 %v772
    %1365 = vmatprep.subr.bf16.mxu0 0
    %1366 = vmatpush1.bf16.msra.mxu0 %v775
    %1367 = vmatprep.subr.bf16.mxu0 0
    %1368 = vmatpush1.bf16.msra.mxu0 %v778
    %1369 = vmatprep.subr.bf16.mxu0 0
    %1370 = vmatpush1.bf16.msra.mxu0 %v781
    %1371 = vmatprep.subr.bf16.mxu0 0
    %1372 = vmatpush1.bf16.msra.mxu0 %v784
    %1373 = vmatprep.subr.bf16.mxu0 0
    %1374 = vmatpush1.bf16.msra.mxu0 %v787
    %1375 = vmatprep.subr.bf16.mxu0 0
    %1376 = vmatpush1.bf16.msra.mxu0 %v790
    %1377 = vmatprep.subr.bf16.mxu0 0
    %1378 = vmatpush1.bf16.msra.mxu0 0
    %1379 = vmatprep.subr.bf16.mxu0 0
    %1380 = vmatpush1.bf16.msra.mxu0 0
    %1381 = vmatprep.subr.bf16.mxu0 0
    %1382 = vmatpush1.bf16.msra.mxu0 0
    %1383 = vmatprep.subr.bf16.mxu0 0
    %1384 = vmatpush1.bf16.msra.mxu0 0
    %1385 = vmatprep.subr.bf16.mxu0 0
    %1386 = vmatpush1.bf16.msra.mxu0 0
    %1387 = vmatprep.subr.bf16.mxu0 0
    %1388 = vmatpush1.bf16.msra.mxu0 0
    %1389 = vmatprep.subr.bf16.mxu0 0
    %1390 = vmatpush1.bf16.msra.mxu0 0
    %1391 = vmatprep.subr.bf16.mxu0 0
    %1392 = vmatpush1.bf16.msra.mxu0 0
    %1393 = vmatprep.mubr.bf16.mxu0 0
    %1394 = vmatmul.mubr.bf16.gmra.mrb[0].mxu0 %v1319
    %v1395 = vpop.f32.mrb[0].mxu0
    %v1396 = vadd.f32 %v680, %v1395
    %v1397 = vpop.f32.mrb[0].mxu0
    %v1398 = vpop.f32.mrb[0].mxu0
    %v1399 = vpop.f32.mrb[0].mxu0
    %1400 = vdwg.mxu0
    %v1401 = vadd.f32 %v1316, %v1355
    %v1402 = vmul.f32 %v1401, 0.5
    %v1403 = vtanh.pop %v1402
    %v1404 = vmul.f32 %v1403, 0.5
    %v1405 = vadd.f32 %v1404, 0.5
    %v1406 = vadd.f32 %v1317, %v1357
    %v1407 = vmul.f32 %v1406, 0.5
    %v1408 = vtanh.pop %v1407
    %v1409 = vmul.f32 %v1408, 0.5
    %v1410 = vadd.f32 %v1409, 0.5
    %v1411 = vmul.f32 %v1405, %v1396
    %v1412 = vadd.f32 %v1318, %v1411
    %v1413 = vtanh.pop %v1412
    %v1414 = vsub.f32 %v1315, %v1413
    %v1415 = vmul.f32 %v1410, %v1414
    %v1416 = vadd.f32 %v1413, %v1415
    %v1417 = vld [vmem:[#allocation2 + $0x90] sm:$0xff]
    %v1418 = vld [vmem:[#allocation2 + $0x98] sm:$0xff]
    %v1419 = vld [vmem:[#allocation2 + $0xa0] sm:$0xff]
    %v1420 = vpack.c.bf16 %v1416, %v1416
    %1421 = vmatprep.subr.bf16.mxu0 %v768
    %1422 = vmatpush1.bf16.msra.mxu0 %v767
    %1423 = vmatprep.subr.bf16.mxu0 %v771
    %1424 = vmatpush1.bf16.msra.mxu0 %v770
    %1425 = vmatprep.subr.bf16.mxu0 %v774
    %1426 = vmatpush1.bf16.msra.mxu0 %v773
    %1427 = vmatprep.subr.bf16.mxu0 %v777
    %1428 = vmatpush1.bf16.msra.mxu0 %v776
    %1429 = vmatprep.subr.bf16.mxu0 %v780
    %1430 = vmatpush1.bf16.msra.mxu0 %v779
    %1431 = vmatprep.subr.bf16.mxu0 %v783
    %1432 = vmatpush1.bf16.msra.mxu0 %v782
    %1433 = vmatprep.subr.bf16.mxu0 %v786
    %1434 = vmatpush1.bf16.msra.mxu0 %v785
    %1435 = vmatprep.subr.bf16.mxu0 %v789
    %1436 = vmatpush1.bf16.msra.mxu0 %v788
    %1437 = vmatprep.subr.bf16.mxu0 0
    %1438 = vmatpush1.bf16.msra.mxu0 0
    %1439 = vmatprep.subr.bf16.mxu0 0
    %1440 = vmatpush1.bf16.msra.mxu0 0
    %1441 = vmatprep.subr.bf16.mxu0 0
    %1442 = vmatpush1.bf16.msra.mxu0 0
    %1443 = vmatprep.subr.bf16.mxu0 0
    %1444 = vmatpush1.bf16.msra.mxu0 0
    %1445 = vmatprep.subr.bf16.mxu0 0
    %1446 = vmatpush1.bf16.msra.mxu0 0
    %1447 = vmatprep.subr.bf16.mxu0 0
    %1448 = vmatpush1.bf16.msra.mxu0 0
    %1449 = vmatprep.subr.bf16.mxu0 0
    %1450 = vmatpush1.bf16.msra.mxu0 0
    %1451 = vmatprep.subr.bf16.mxu0 0
    %1452 = vmatpush1.bf16.msra.mxu0 0
    %1453 = vmatprep.mubr.bf16.mxu0 0
    %1454 = vmatmul.mubr.bf16.gmra.mrb[0].mxu0 %v1420
    %v1455 = vpop.f32.mrb[0].mxu0
    %v1456 = vadd.f32 %v672, %v1455
    %v1457 = vpop.f32.mrb[0].mxu0
    %v1458 = vadd.f32 %v676, %v1457
    %v1459 = vpop.f32.mrb[0].mxu0
    %v1460 = vpop.f32.mrb[0].mxu0
    %1461 = vdwg.mxu0
    %1462 = vmatprep.subr.bf16.mxu0 0
    %1463 = vmatpush1.bf16.msra.mxu0 %v769
    %1464 = vmatprep.subr.bf16.mxu0 0
    %1465 = vmatpush1.bf16.msra.mxu0 %v772
    %1466 = vmatprep.subr.bf16.mxu0 0
    %1467 = vmatpush1.bf16.msra.mxu0 %v775
    %1468 = vmatprep.subr.bf16.mxu0 0
    %1469 = vmatpush1.bf16.msra.mxu0 %v778
    %1470 = vmatprep.subr.bf16.mxu0 0
    %1471 = vmatpush1.bf16.msra.mxu0 %v781
    %1472 = vmatprep.subr.bf16.mxu0 0
    %1473 = vmatpush1.bf16.msra.mxu0 %v784
    %1474 = vmatprep.subr.bf16.mxu0 0
    %1475 = vmatpush1.bf16.msra.mxu0 %v787
    %1476 = vmatprep.subr.bf16.mxu0 0
    %1477 = vmatpush1.bf16.msra.mxu0 %v790
    %1478 = vmatprep.subr.bf16.mxu0 0
    %1479 = vmatpush1.bf16.msra.mxu0 0
    %1480 = vmatprep.subr.bf16.mxu0 0
    %1481 = vmatpush1.bf16.msra.mxu0 0
    %1482 = vmatprep.subr.bf16.mxu0 0
    %1483 = vmatpush1.bf16.msra.mxu0 0
    %1484 = vmatprep.subr.bf16.mxu0 0
    %1485 = vmatpush1.bf16.msra.mxu0 0
    %1486 = vmatprep.subr.bf16.mxu0 0
    %1487 = vmatpush1.bf16.msra.mxu0 0
    %1488 = vmatprep.subr.bf16.mxu0 0
    %1489 = vmatpush1.bf16.msra.mxu0 0
    %1490 = vmatprep.subr.bf16.mxu0 0
    %1491 = vmatpush1.bf16.msra.mxu0 0
    %1492 = vmatprep.subr.bf16.mxu0 0
    %1493 = vmatpush1.bf16.msra.mxu0 0
    %1494 = vmatprep.mubr.bf16.mxu0 0
    %1495 = vmatmul.mubr.bf16.gmra.mrb[0].mxu0 %v1420
    %v1496 = vpop.f32.mrb[0].mxu0
    %v1497 = vadd.f32 %v680, %v1496
    %v1498 = vpop.f32.mrb[0].mxu0
    %v1499 = vpop.f32.mrb[0].mxu0
    %v1500 = vpop.f32.mrb[0].mxu0
    %1501 = vdwg.mxu0
    %v1502 = vadd.f32 %v1417, %v1456
    %v1503 = vmul.f32 %v1502, 0.5
    %v1504 = vtanh.pop %v1503
    %v1505 = vmul.f32 %v1504, 0.5
    %v1506 = vadd.f32 %v1505, 0.5
    %v1507 = vadd.f32 %v1418, %v1458
    %v1508 = vmul.f32 %v1507, 0.5
    %v1509 = vtanh.pop %v1508
    %v1510 = vmul.f32 %v1509, 0.5
    %v1511 = vadd.f32 %v1510, 0.5
    %v1512 = vmul.f32 %v1506, %v1497
    %v1513 = vadd.f32 %v1419, %v1512
    %v1514 = vtanh.pop %v1513
    %v1515 = vsub.f32 %v1416, %v1514
    %v1516 = vmul.f32 %v1511, %v1515
    %v1517 = vadd.f32 %v1514, %v1516
    %v1518 = vld [vmem:[#allocation2 + $0xa8] sm:$0xff]
    %v1519 = vld [vmem:[#allocation2 + $0xb0] sm:$0xff]
    %v1520 = vld [vmem:[#allocation2 + $0xb8] sm:$0xff]
    %v1521 = vpack.c.bf16 %v1517, %v1517
    %1522 = vmatprep.subr.bf16.mxu0 %v768
    %1523 = vmatpush1.bf16.msra.mxu0 %v767
    %1524 = vmatprep.subr.bf16.mxu0 %v771
    %1525 = vmatpush1.bf16.msra.mxu0 %v770
    %1526 = vmatprep.subr.bf16.mxu0 %v774
    %1527 = vmatpush1.bf16.msra.mxu0 %v773
    %1528 = vmatprep.subr.bf16.mxu0 %v777
    %1529 = vmatpush1.bf16.msra.mxu0 %v776
    %1530 = vmatprep.subr.bf16.mxu0 %v780
    %1531 = vmatpush1.bf16.msra.mxu0 %v779
    %1532 = vmatprep.subr.bf16.mxu0 %v783
    %1533 = vmatpush1.bf16.msra.mxu0 %v782
    %1534 = vmatprep.subr.bf16.mxu0 %v786
    %1535 = vmatpush1.bf16.msra.mxu0 %v785
    %1536 = vmatprep.subr.bf16.mxu0 %v789
    %1537 = vmatpush1.bf16.msra.mxu0 %v788
    %1538 = vmatprep.subr.bf16.mxu0 0
    %1539 = vmatpush1.bf16.msra.mxu0 0
    %1540 = vmatprep.subr.bf16.mxu0 0
    %1541 = vmatpush1.bf16.msra.mxu0 0
    %1542 = vmatprep.subr.bf16.mxu0 0
    %1543 = vmatpush1.bf16.msra.mxu0 0
    %1544 = vmatprep.subr.bf16.mxu0 0
    %1545 = vmatpush1.bf16.msra.mxu0 0
    %1546 = vmatprep.subr.bf16.mxu0 0
    %1547 = vmatpush1.bf16.msra.mxu0 0
    %1548 = vmatprep.subr.bf16.mxu0 0
    %1549 = vmatpush1.bf16.msra.mxu0 0
    %1550 = vmatprep.subr.bf16.mxu0 0
    %1551 = vmatpush1.bf16.msra.mxu0 0
    %1552 = vmatprep.subr.bf16.mxu0 0
    %1553 = vmatpush1.bf16.msra.mxu0 0
    %1554 = vmatprep.mubr.bf16.mxu0 0
    %1555 = vmatmul.mubr.bf16.gmra.mrb[0].mxu0 %v1521
    %v1556 = vpop.f32.mrb[0].mxu0
    %v1557 = vadd.f32 %v672, %v1556
    %v1558 = vpop.f32.mrb[0].mxu0
    %v1559 = vadd.f32 %v676, %v1558
    %v1560 = vpop.f32.mrb[0].mxu0
    %v1561 = vpop.f32.mrb[0].mxu0
    %1562 = vdwg.mxu0
    %1563 = vmatprep.subr.bf16.mxu0 0
    %1564 = vmatpush1.bf16.msra.mxu0 %v769
    %1565 = vmatprep.subr.bf16.mxu0 0
    %1566 = vmatpush1.bf16.msra.mxu0 %v772
    %1567 = vmatprep.subr.bf16.mxu0 0
    %1568 = vmatpush1.bf16.msra.mxu0 %v775
    %1569 = vmatprep.subr.bf16.mxu0 0
    %1570 = vmatpush1.bf16.msra.mxu0 %v778
    %1571 = vmatprep.subr.bf16.mxu0 0
    %1572 = vmatpush1.bf16.msra.mxu0 %v781
    %1573 = vmatprep.subr.bf16.mxu0 0
    %1574 = vmatpush1.bf16.msra.mxu0 %v784
    %1575 = vmatprep.subr.bf16.mxu0 0
    %1576 = vmatpush1.bf16.msra.mxu0 %v787
    %1577 = vmatprep.subr.bf16.mxu0 0
    %1578 = vmatpush1.bf16.msra.mxu0 %v790
    %1579 = vmatprep.subr.bf16.mxu0 0
    %1580 = vmatpush1.bf16.msra.mxu0 0
    %1581 = vmatprep.subr.bf16.mxu0 0
    %1582 = vmatpush1.bf16.msra.mxu0 0
    %1583 = vmatprep.subr.bf16.mxu0 0
    %1584 = vmatpush1.bf16.msra.mxu0 0
    %1585 = vmatprep.subr.bf16.mxu0 0
    %1586 = vmatpush1.bf16.msra.mxu0 0
    %1587 = vmatprep.subr.bf16.mxu0 0
    %1588 = vmatpush1.bf16.msra.mxu0 0
    %1589 = vmatprep.subr.bf16.mxu0 0
    %1590 = vmatpush1.bf16.msra.mxu0 0
    %1591 = vmatprep.subr.bf16.mxu0 0
    %1592 = vmatpush1.bf16.msra.mxu0 0
    %1593 = vmatprep.subr.bf16.mxu0 0
    %1594 = vmatpush1.bf16.msra.mxu0 0
    %1595 = vmatprep.mubr.bf16.mxu0 0
    %1596 = vmatmul.mubr.bf16.gmra.mrb[0].mxu0 %v1521
    %v1597 = vpop.f32.mrb[0].mxu0
    %v1598 = vadd.f32 %v680, %v1597
    %v1599 = vpop.f32.mrb[0].mxu0
    %v1600 = vpop.f32.mrb[0].mxu0
    %v1601 = vpop.f32.mrb[0].mxu0
    %1602 = vdwg.mxu0
    %v1603 = vadd.f32 %v1518, %v1557
    %v1604 = vmul.f32 %v1603, 0.5
    %v1605 = vtanh.pop %v1604
    %v1606 = vmul.f32 %v1605, 0.5
    %v1607 = vadd.f32 %v1606, 0.5
    %v1608 = vadd.f32 %v1519, %v1559
    %v1609 = vmul.f32 %v1608, 0.5
    %v1610 = vtanh.pop %v1609
    %v1611 = vmul.f32 %v1610, 0.5
    %v1612 = vadd.f32 %v1611, 0.5
    %v1613 = vmul.f32 %v1607, %v1598
    %v1614 = vadd.f32 %v1520, %v1613
    %v1615 = vtanh.pop %v1614
    %v1616 = vsub.f32 %v1517, %v1615
    %v1617 = vmul.f32 %v1612, %v1616
    %v1618 = vadd.f32 %v1615, %v1617
    %v1619 = vld [vmem:[#allocation2 + $0xc0] sm:$0xff]
    %v1620 = vld [vmem:[#allocation2 + $0xc8] sm:$0xff]
    %v1621 = vld [vmem:[#allocation2 + $0xd0] sm:$0xff]
    %v1622 = vpack.c.bf16 %v1618, %v1618
    %1623 = vmatprep.subr.bf16.mxu0 %v768
    %1624 = vmatpush1.bf16.msra.mxu0 %v767
    %1625 = vmatprep.subr.bf16.mxu0 %v771
    %1626 = vmatpush1.bf16.msra.mxu0 %v770
    %1627 = vmatprep.subr.bf16.mxu0 %v774
    %1628 = vmatpush1.bf16.msra.mxu0 %v773
    %1629 = vmatprep.subr.bf16.mxu0 %v777
    %1630 = vmatpush1.bf16.msra.mxu0 %v776
    %1631 = vmatprep.subr.bf16.mxu0 %v780
    %1632 = vmatpush1.bf16.msra.mxu0 %v779
    %1633 = vmatprep.subr.bf16.mxu0 %v783
    %1634 = vmatpush1.bf16.msra.mxu0 %v782
    %1635 = vmatprep.subr.bf16.mxu0 %v786
    %1636 = vmatpush1.bf16.msra.mxu0 %v785
    %1637 = vmatprep.subr.bf16.mxu0 %v789
    %1638 = vmatpush1.bf16.msra.mxu0 %v788
    %1639 = vmatprep.subr.bf16.mxu0 0
    %1640 = vmatpush1.bf16.msra.mxu0 0
    %1641 = vmatprep.subr.bf16.mxu0 0
    %1642 = vmatpush1.bf16.msra.mxu0 0
    %1643 = vmatprep.subr.bf16.mxu0 0
    %1644 = vmatpush1.bf16.msra.mxu0 0
    %1645 = vmatprep.subr.bf16.mxu0 0
    %1646 = vmatpush1.bf16.msra.mxu0 0
    %1647 = vmatprep.subr.bf16.mxu0 0
    %1648 = vmatpush1.bf16.msra.mxu0 0
    %1649 = vmatprep.subr.bf16.mxu0 0
    %1650 = vmatpush1.bf16.msra.mxu0 0
    %1651 = vmatprep.subr.bf16.mxu0 0
    %1652 = vmatpush1.bf16.msra.mxu0 0
    %1653 = vmatprep.subr.bf16.mxu0 0
    %1654 = vmatpush1.bf16.msra.mxu0 0
    %1655 = vmatprep.mubr.bf16.mxu0 0
    %1656 = vmatmul.mubr.bf16.gmra.mrb[0].mxu0 %v1622
    %v1657 = vpop.f32.mrb[0].mxu0
    %v1658 = vadd.f32 %v672, %v1657
    %v1659 = vpop.f32.mrb[0].mxu0
    %v1660 = vadd.f32 %v676, %v1659
    %v1661 = vpop.f32.mrb[0].mxu0
    %v1662 = vpop.f32.mrb[0].mxu0
    %1663 = vdwg.mxu0
    %1664 = vmatprep.subr.bf16.mxu0 0
    %1665 = vmatpush1.bf16.msra.mxu0 %v769
    %1666 = vmatprep.subr.bf16.mxu0 0
    %1667 = vmatpush1.bf16.msra.mxu0 %v772
    %1668 = vmatprep.subr.bf16.mxu0 0
    %1669 = vmatpush1.bf16.msra.mxu0 %v775
    %1670 = vmatprep.subr.bf16.mxu0 0
    %1671 = vmatpush1.bf16.msra.mxu0 %v778
    %1672 = vmatprep.subr.bf16.mxu0 0
    %1673 = vmatpush1.bf16.msra.mxu0 %v781
    %1674 = vmatprep.subr.bf16.mxu0 0
    %1675 = vmatpush1.bf16.msra.mxu0 %v784
    %1676 = vmatprep.subr.bf16.mxu0 0
    %1677 = vmatpush1.bf16.msra.mxu0 %v787
    %1678 = vmatprep.subr.bf16.mxu0 0
    %1679 = vmatpush1.bf16.msra.mxu0 %v790
    %1680 = vmatprep.subr.bf16.mxu0 0
    %1681 = vmatpush1.bf16.msra.mxu0 0
    %1682 = vmatprep.subr.bf16.mxu0 0
    %1683 = vmatpush1.bf16.msra.mxu0 0
    %1684 = vmatprep.subr.bf16.mxu0 0
    %1685 = vmatpush1.bf16.msra.mxu0 0
    %1686 = vmatprep.subr.bf16.mxu0 0
    %1687 = vmatpush1.bf16.msra.mxu0 0
    %1688 = vmatprep.subr.bf16.mxu0 0
    %1689 = vmatpush1.bf16.msra.mxu0 0
    %1690 = vmatprep.subr.bf16.mxu0 0
    %1691 = vmatpush1.bf16.msra.mxu0 0
    %1692 = vmatprep.subr.bf16.mxu0 0
    %1693 = vmatpush1.bf16.msra.mxu0 0
    %1694 = vmatprep.subr.bf16.mxu0 0
    %1695 = vmatpush1.bf16.msra.mxu0 0
    %1696 = vmatprep.mubr.bf16.mxu0 0
    %1697 = vmatmul.mubr.bf16.gmra.mrb[0].mxu0 %v1622
    %v1698 = vpop.f32.mrb[0].mxu0
    %v1699 = vadd.f32 %v680, %v1698
    %v1700 = vpop.f32.mrb[0].mxu0
    %v1701 = vpop.f32.mrb[0].mxu0
    %v1702 = vpop.f32.mrb[0].mxu0
    %1703 = vdwg.mxu0
    %v1704 = vadd.f32 %v1619, %v1658
    %v1705 = vmul.f32 %v1704, 0.5
    %v1706 = vtanh.pop %v1705
    %v1707 = vmul.f32 %v1706, 0.5
    %v1708 = vadd.f32 %v1707, 0.5
    %v1709 = vadd.f32 %v1620, %v1660
    %v1710 = vmul.f32 %v1709, 0.5
    %v1711 = vtanh.pop %v1710
    %v1712 = vmul.f32 %v1711, 0.5
    %v1713 = vadd.f32 %v1712, 0.5
    %v1714 = vmul.f32 %v1708, %v1699
    %v1715 = vadd.f32 %v1621, %v1714
    %v1716 = vtanh.pop %v1715
    %v1717 = vsub.f32 %v1618, %v1716
    %v1718 = vmul.f32 %v1713, %v1717
    %v1719 = vadd.f32 %v1716, %v1718
    %v1720 = vld [vmem:[#allocation2 + $0xd8] sm:$0xff]
    %v1721 = vld [vmem:[#allocation2 + $0xe0] sm:$0xff]
    %v1722 = vld [vmem:[#allocation2 + $0xe8] sm:$0xff]
    %v1723 = vpack.c.bf16 %v1719, %v1719
    %1724 = vmatprep.subr.bf16.mxu0 %v768
    %1725 = vmatpush1.bf16.msra.mxu0 %v767
    %1726 = vmatprep.subr.bf16.mxu0 %v771
    %1727 = vmatpush1.bf16.msra.mxu0 %v770
    %1728 = vmatprep.subr.bf16.mxu0 %v774
    %1729 = vmatpush1.bf16.msra.mxu0 %v773
    %1730 = vmatprep.subr.bf16.mxu0 %v777
    %1731 = vmatpush1.bf16.msra.mxu0 %v776
    %1732 = vmatprep.subr.bf16.mxu0 %v780
    %1733 = vmatpush1.bf16.msra.mxu0 %v779
    %1734 = vmatprep.subr.bf16.mxu0 %v783
    %1735 = vmatpush1.bf16.msra.mxu0 %v782
    %1736 = vmatprep.subr.bf16.mxu0 %v786
    %1737 = vmatpush1.bf16.msra.mxu0 %v785
    %1738 = vmatprep.subr.bf16.mxu0 %v789
    %1739 = vmatpush1.bf16.msra.mxu0 %v788
    %1740 = vmatprep.subr.bf16.mxu0 0
    %1741 = vmatpush1.bf16.msra.mxu0 0
    %1742 = vmatprep.subr.bf16.mxu0 0
    %1743 = vmatpush1.bf16.msra.mxu0 0
    %1744 = vmatprep.subr.bf16.mxu0 0
    %1745 = vmatpush1.bf16.msra.mxu0 0
    %1746 = vmatprep.subr.bf16.mxu0 0
    %1747 = vmatpush1.bf16.msra.mxu0 0
    %1748 = vmatprep.subr.bf16.mxu0 0
    %1749 = vmatpush1.bf16.msra.mxu0 0
    %1750 = vmatprep.subr.bf16.mxu0 0
    %1751 = vmatpush1.bf16.msra.mxu0 0
    %1752 = vmatprep.subr.bf16.mxu0 0
    %1753 = vmatpush1.bf16.msra.mxu0 0
    %1754 = vmatprep.subr.bf16.mxu0 0
    %1755 = vmatpush1.bf16.msra.mxu0 0
    %1756 = vmatprep.mubr.bf16.mxu0 0
    %1757 = vmatmul.mubr.bf16.gmra.mrb[0].mxu0 %v1723
    %v1758 = vpop.f32.mrb[0].mxu0
    %v1759 = vadd.f32 %v672, %v1758
    %v1760 = vpop.f32.mrb[0].mxu0
    %v1761 = vadd.f32 %v676, %v1760
    %v1762 = vpop.f32.mrb[0].mxu0
    %v1763 = vpop.f32.mrb[0].mxu0
    %1764 = vdwg.mxu0
    %1765 = vmatprep.subr.bf16.mxu0 0
    %1766 = vmatpush1.bf16.msra.mxu0 %v769
    %1767 = vmatprep.subr.bf16.mxu0 0
    %1768 = vmatpush1.bf16.msra.mxu0 %v772
    %1769 = vmatprep.subr.bf16.mxu0 0
    %1770 = vmatpush1.bf16.msra.mxu0 %v775
    %1771 = vmatprep.subr.bf16.mxu0 0
    %1772 = vmatpush1.bf16.msra.mxu0 %v778
    %1773 = vmatprep.subr.bf16.mxu0 0
    %1774 = vmatpush1.bf16.msra.mxu0 %v781
    %1775 = vmatprep.subr.bf16.mxu0 0
    %1776 = vmatpush1.bf16.msra.mxu0 %v784
    %1777 = vmatprep.subr.bf16.mxu0 0
    %1778 = vmatpush1.bf16.msra.mxu0 %v787
    %1779 = vmatprep.subr.bf16.mxu0 0
    %1780 = vmatpush1.bf16.msra.mxu0 %v790
    %1781 = vmatprep.subr.bf16.mxu0 0
    %1782 = vmatpush1.bf16.msra.mxu0 0
    %1783 = vmatprep.subr.bf16.mxu0 0
    %1784 = vmatpush1.bf16.msra.mxu0 0
    %1785 = vmatprep.subr.bf16.mxu0 0
    %1786 = vmatpush1.bf16.msra.mxu0 0
    %1787 = vmatprep.subr.bf16.mxu0 0
    %1788 = vmatpush1.bf16.msra.mxu0 0
    %1789 = vmatprep.subr.bf16.mxu0 0
    %1790 = vmatpush1.bf16.msra.mxu0 0
    %1791 = vmatprep.subr.bf16.mxu0 0
    %1792 = vmatpush1.bf16.msra.mxu0 0
    %1793 = vmatprep.subr.bf16.mxu0 0
    %1794 = vmatpush1.bf16.msra.mxu0 0
    %1795 = vmatprep.subr.bf16.mxu0 0
    %1796 = vmatpush1.bf16.msra.mxu0 0
    %1797 = vmatprep.mubr.bf16.mxu0 0
    %1798 = vmatmul.mubr.bf16.gmra.mrb[0].mxu0 %v1723
    %v1799 = vpop.f32.mrb[0].mxu0
    %v1800 = vadd.f32 %v680, %v1799
    %v1801 = vpop.f32.mrb[0].mxu0
    %v1802 = vpop.f32.mrb[0].mxu0
    %v1803 = vpop.f32.mrb[0].mxu0
    %1804 = vdwg.mxu0
    %v1805 = vadd.f32 %v1720, %v1759
    %v1806 = vmul.f32 %v1805, 0.5
    %v1807 = vtanh.pop %v1806
    %v1808 = vmul.f32 %v1807, 0.5
    %v1809 = vadd.f32 %v1808, 0.5
    %v1810 = vadd.f32 %v1721, %v1761
    %v1811 = vmul.f32 %v1810, 0.5
    %v1812 = vtanh.pop %v1811
    %v1813 = vmul.f32 %v1812, 0.5
    %v1814 = vadd.f32 %v1813, 0.5
    %v1815 = vmul.f32 %v1809, %v1800
    %v1816 = vadd.f32 %v1722, %v1815
    %v1817 = vtanh.pop %v1816
    %v1818 = vsub.f32 %v1719, %v1817
    %v1819 = vmul.f32 %v1814, %v1818
    %v1820 = vadd.f32 %v1817, %v1819
    %v1821 = vld [vmem:[#allocation2 + $0xf0] sm:$0xff]
    %v1822 = vld [vmem:[#allocation2 + $0xf8] sm:$0xff]
    %v1823 = vld [vmem:[#allocation2 + $0x100] sm:$0xff]
    %v1824 = vpack.c.bf16 %v1820, %v1820
    %1825 = vmatprep.subr.bf16.mxu0 %v768
    %1826 = vmatpush1.bf16.msra.mxu0 %v767
    %1827 = vmatprep.subr.bf16.mxu0 %v771
    %1828 = vmatpush1.bf16.msra.mxu0 %v770
    %1829 = vmatprep.subr.bf16.mxu0 %v774
    %1830 = vmatpush1.bf16.msra.mxu0 %v773
    %1831 = vmatprep.subr.bf16.mxu0 %v777
    %1832 = vmatpush1.bf16.msra.mxu0 %v776
    %1833 = vmatprep.subr.bf16.mxu0 %v780
    %1834 = vmatpush1.bf16.msra.mxu0 %v779
    %1835 = vmatprep.subr.bf16.mxu0 %v783
    %1836 = vmatpush1.bf16.msra.mxu0 %v782
    %1837 = vmatprep.subr.bf16.mxu0 %v786
    %1838 = vmatpush1.bf16.msra.mxu0 %v785
    %1839 = vmatprep.subr.bf16.mxu0 %v789
    %1840 = vmatpush1.bf16.msra.mxu0 %v788
    %1841 = vmatprep.subr.bf16.mxu0 0
    %1842 = vmatpush1.bf16.msra.mxu0 0
    %1843 = vmatprep.subr.bf16.mxu0 0
    %1844 = vmatpush1.bf16.msra.mxu0 0
    %1845 = vmatprep.subr.bf16.mxu0 0
    %1846 = vmatpush1.bf16.msra.mxu0 0
    %1847 = vmatprep.subr.bf16.mxu0 0
    %1848 = vmatpush1.bf16.msra.mxu0 0
    %1849 = vmatprep.subr.bf16.mxu0 0
    %1850 = vmatpush1.bf16.msra.mxu0 0
    %1851 = vmatprep.subr.bf16.mxu0 0
    %1852 = vmatpush1.bf16.msra.mxu0 0
    %1853 = vmatprep.subr.bf16.mxu0 0
    %1854 = vmatpush1.bf16.msra.mxu0 0
    %1855 = vmatprep.subr.bf16.mxu0 0
    %1856 = vmatpush1.bf16.msra.mxu0 0
    %1857 = vmatprep.mubr.bf16.mxu0 0
    %1858 = vmatmul.mubr.bf16.gmra.mrb[0].mxu0 %v1824
    %v1859 = vpop.f32.mrb[0].mxu0
    %v1860 = vadd.f32 %v672, %v1859
    %v1861 = vpop.f32.mrb[0].mxu0
    %v1862 = vadd.f32 %v676, %v1861
    %v1863 = vpop.f32.mrb[0].mxu0
    %v1864 = vpop.f32.mrb[0].mxu0
    %1865 = vdwg.mxu0
    %1866 = vmatprep.subr.bf16.mxu0 0
    %1867 = vmatpush1.bf16.msra.mxu0 %v769
    %1868 = vmatprep.subr.bf16.mxu0 0
    %1869 = vmatpush1.bf16.msra.mxu0 %v772
    %1870 = vmatprep.subr.bf16.mxu0 0
    %1871 = vmatpush1.bf16.msra.mxu0 %v775
    %1872 = vmatprep.subr.bf16.mxu0 0
    %1873 = vmatpush1.bf16.msra.mxu0 %v778
    %1874 = vmatprep.subr.bf16.mxu0 0
    %1875 = vmatpush1.bf16.msra.mxu0 %v781
    %1876 = vmatprep.subr.bf16.mxu0 0
    %1877 = vmatpush1.bf16.msra.mxu0 %v784
    %1878 = vmatprep.subr.bf16.mxu0 0
    %1879 = vmatpush1.bf16.msra.mxu0 %v787
    %1880 = vmatprep.subr.bf16.mxu0 0
    %1881 = vmatpush1.bf16.msra.mxu0 %v790
    %1882 = vmatprep.subr.bf16.mxu0 0
    %1883 = vmatpush1.bf16.msra.mxu0 0
    %1884 = vmatprep.subr.bf16.mxu0 0
    %1885 = vmatpush1.bf16.msra.mxu0 0
    %1886 = vmatprep.subr.bf16.mxu0 0
    %1887 = vmatpush1.bf16.msra.mxu0 0
    %1888 = vmatprep.subr.bf16.mxu0 0
    %1889 = vmatpush1.bf16.msra.mxu0 0
    %1890 = vmatprep.subr.bf16.mxu0 0
    %1891 = vmatpush1.bf16.msra.mxu0 0
    %1892 = vmatprep.subr.bf16.mxu0 0
    %1893 = vmatpush1.bf16.msra.mxu0 0
    %1894 = vmatprep.subr.bf16.mxu0 0
    %1895 = vmatpush1.bf16.msra.mxu0 0
    %1896 = vmatprep.subr.bf16.mxu0 0
    %1897 = vmatpush1.bf16.msra.mxu0 0
    %1898 = vmatprep.mubr.bf16.mxu0 0
    %1899 = vmatmul.mubr.bf16.gmra.mrb[0].mxu0 %v1824
    %v1900 = vpop.f32.mrb[0].mxu0
    %v1901 = vadd.f32 %v680, %v1900
    %v1902 = vpop.f32.mrb[0].mxu0
    %v1903 = vpop.f32.mrb[0].mxu0
    %v1904 = vpop.f32.mrb[0].mxu0
    %1905 = vdwg.mxu0
    %v1906 = vadd.f32 %v1821, %v1860
    %v1907 = vmul.f32 %v1906, 0.5
    %v1908 = vtanh.pop %v1907
    %v1909 = vmul.f32 %v1908, 0.5
    %v1910 = vadd.f32 %v1909, 0.5
    %v1911 = vadd.f32 %v1822, %v1862
    %v1912 = vmul.f32 %v1911, 0.5
    %v1913 = vtanh.pop %v1912
    %v1914 = vmul.f32 %v1913, 0.5
    %v1915 = vadd.f32 %v1914, 0.5
    %v1916 = vmul.f32 %v1910, %v1901
    %v1917 = vadd.f32 %v1823, %v1916
    %v1918 = vtanh.pop %v1917
    %v1919 = vsub.f32 %v1820, %v1918
    %v1920 = vmul.f32 %v1915, %v1919
    %v1921 = vadd.f32 %v1918, %v1920
    %v1922 = vld [vmem:[#allocation2 + $0x108] sm:$0xff]
    %v1923 = vld [vmem:[#allocation2 + $0x110] sm:$0xff]
    %v1924 = vld [vmem:[#allocation2 + $0x118] sm:$0xff]
    %v1925 = vpack.c.bf16 %v1921, %v1921
    %1926 = vmatprep.subr.bf16.mxu0 %v768
    %1927 = vmatpush1.bf16.msra.mxu0 %v767
    %1928 = vmatprep.subr.bf16.mxu0 %v771
    %1929 = vmatpush1.bf16.msra.mxu0 %v770
    %1930 = vmatprep.subr.bf16.mxu0 %v774
    %1931 = vmatpush1.bf16.msra.mxu0 %v773
    %1932 = vmatprep.subr.bf16.mxu0 %v777
    %1933 = vmatpush1.bf16.msra.mxu0 %v776
    %1934 = vmatprep.subr.bf16.mxu0 %v780
    %1935 = vmatpush1.bf16.msra.mxu0 %v779
    %1936 = vmatprep.subr.bf16.mxu0 %v783
    %1937 = vmatpush1.bf16.msra.mxu0 %v782
    %1938 = vmatprep.subr.bf16.mxu0 %v786
    %1939 = vmatpush1.bf16.msra.mxu0 %v785
    %1940 = vmatprep.subr.bf16.mxu0 %v789
    %1941 = vmatpush1.bf16.msra.mxu0 %v788
    %1942 = vmatprep.subr.bf16.mxu0 0
    %1943 = vmatpush1.bf16.msra.mxu0 0
    %1944 = vmatprep.subr.bf16.mxu0 0
    %1945 = vmatpush1.bf16.msra.mxu0 0
    %1946 = vmatprep.subr.bf16.mxu0 0
    %1947 = vmatpush1.bf16.msra.mxu0 0
    %1948 = vmatprep.subr.bf16.mxu0 0
    %1949 = vmatpush1.bf16.msra.mxu0 0
    %1950 = vmatprep.subr.bf16.mxu0 0
    %1951 = vmatpush1.bf16.msra.mxu0 0
    %1952 = vmatprep.subr.bf16.mxu0 0
    %1953 = vmatpush1.bf16.msra.mxu0 0
    %1954 = vmatprep.subr.bf16.mxu0 0
    %1955 = vmatpush1.bf16.msra.mxu0 0
    %1956 = vmatprep.subr.bf16.mxu0 0
    %1957 = vmatpush1.bf16.msra.mxu0 0
    %1958 = vmatprep.mubr.bf16.mxu0 0
    %1959 = vmatmul.mubr.bf16.gmra.mrb[0].mxu0 %v1925
    %v1960 = vpop.f32.mrb[0].mxu0
    %v1961 = vadd.f32 %v672, %v1960
    %v1962 = vpop.f32.mrb[0].mxu0
    %v1963 = vadd.f32 %v676, %v1962
    %v1964 = vpop.f32.mrb[0].mxu0
    %v1965 = vpop.f32.mrb[0].mxu0
    %1966 = vdwg.mxu0
    %1967 = vmatprep.subr.bf16.mxu0 0
    %1968 = vmatpush1.bf16.msra.mxu0 %v769
    %1969 = vmatprep.subr.bf16.mxu0 0
    %1970 = vmatpush1.bf16.msra.mxu0 %v772
    %1971 = vmatprep.subr.bf16.mxu0 0
    %1972 = vmatpush1.bf16.msra.mxu0 %v775
    %1973 = vmatprep.subr.bf16.mxu0 0
    %1974 = vmatpush1.bf16.msra.mxu0 %v778
    %1975 = vmatprep.subr.bf16.mxu0 0
    %1976 = vmatpush1.bf16.msra.mxu0 %v781
    %1977 = vmatprep.subr.bf16.mxu0 0
    %1978 = vmatpush1.bf16.msra.mxu0 %v784
    %1979 = vmatprep.subr.bf16.mxu0 0
    %1980 = vmatpush1.bf16.msra.mxu0 %v787
    %1981 = vmatprep.subr.bf16.mxu0 0
    %1982 = vmatpush1.bf16.msra.mxu0 %v790
    %1983 = vmatprep.subr.bf16.mxu0 0
    %1984 = vmatpush1.bf16.msra.mxu0 0
    %1985 = vmatprep.subr.bf16.mxu0 0
    %1986 = vmatpush1.bf16.msra.mxu0 0
    %1987 = vmatprep.subr.bf16.mxu0 0
    %1988 = vmatpush1.bf16.msra.mxu0 0
    %1989 = vmatprep.subr.bf16.mxu0 0
    %1990 = vmatpush1.bf16.msra.mxu0 0
    %1991 = vmatprep.subr.bf16.mxu0 0
    %1992 = vmatpush1.bf16.msra.mxu0 0
    %1993 = vmatprep.subr.bf16.mxu0 0
    %1994 = vmatpush1.bf16.msra.mxu0 0
    %1995 = vmatprep.subr.bf16.mxu0 0
    %1996 = vmatpush1.bf16.msra.mxu0 0
    %1997 = vmatprep.subr.bf16.mxu0 0
    %1998 = vmatpush1.bf16.msra.mxu0 0
    %1999 = vmatprep.mubr.bf16.mxu0 0
    %2000 = vmatmul.mubr.bf16.gmra.mrb[0].mxu0 %v1925
    %v2001 = vpop.f32.mrb[0].mxu0
    %v2002 = vadd.f32 %v680, %v2001
    %v2003 = vpop.f32.mrb[0].mxu0
    %v2004 = vpop.f32.mrb[0].mxu0
    %v2005 = vpop.f32.mrb[0].mxu0
    %2006 = vdwg.mxu0
    %v2007 = vadd.f32 %v1922, %v1961
    %v2008 = vmul.f32 %v2007, 0.5
    %v2009 = vtanh.pop %v2008
    %v2010 = vmul.f32 %v2009, 0.5
    %v2011 = vadd.f32 %v2010, 0.5
    %v2012 = vadd.f32 %v1923, %v1963
    %v2013 = vmul.f32 %v2012, 0.5
    %v2014 = vtanh.pop %v2013
    %v2015 = vmul.f32 %v2014, 0.5
    %v2016 = vadd.f32 %v2015, 0.5
    %v2017 = vmul.f32 %v2011, %v2002
    %v2018 = vadd.f32 %v1924, %v2017
    %v2019 = vtanh.pop %v2018
    %v2020 = vsub.f32 %v1921, %v2019
    %v2021 = vmul.f32 %v2016, %v2020
    %v2022 = vadd.f32 %v2019, %v2021
    %v2023 = vld [vmem:[#allocation2 + $0x120] sm:$0xff]
    %v2024 = vld [vmem:[#allocation2 + $0x128] sm:$0xff]
    %v2025 = vld [vmem:[#allocation2 + $0x130] sm:$0xff]
    %v2026 = vpack.c.bf16 %v2022, %v2022
    %2027 = vmatprep.subr.bf16.mxu0 %v768
    %2028 = vmatpush1.bf16.msra.mxu0 %v767
    %2029 = vmatprep.subr.bf16.mxu0 %v771
    %2030 = vmatpush1.bf16.msra.mxu0 %v770
    %2031 = vmatprep.subr.bf16.mxu0 %v774
    %2032 = vmatpush1.bf16.msra.mxu0 %v773
    %2033 = vmatprep.subr.bf16.mxu0 %v777
    %2034 = vmatpush1.bf16.msra.mxu0 %v776
    %2035 = vmatprep.subr.bf16.mxu0 %v780
    %2036 = vmatpush1.bf16.msra.mxu0 %v779
    %2037 = vmatprep.subr.bf16.mxu0 %v783
    %2038 = vmatpush1.bf16.msra.mxu0 %v782
    %2039 = vmatprep.subr.bf16.mxu0 %v786
    %2040 = vmatpush1.bf16.msra.mxu0 %v785
    %2041 = vmatprep.subr.bf16.mxu0 %v789
    %2042 = vmatpush1.bf16.msra.mxu0 %v788
    %2043 = vmatprep.subr.bf16.mxu0 0
    %2044 = vmatpush1.bf16.msra.mxu0 0
    %2045 = vmatprep.subr.bf16.mxu0 0
    %2046 = vmatpush1.bf16.msra.mxu0 0
    %2047 = vmatprep.subr.bf16.mxu0 0
    %2048 = vmatpush1.bf16.msra.mxu0 0
    %2049 = vmatprep.subr.bf16.mxu0 0
    %2050 = vmatpush1.bf16.msra.mxu0 0
    %2051 = vmatprep.subr.bf16.mxu0 0
    %2052 = vmatpush1.bf16.msra.mxu0 0
    %2053 = vmatprep.subr.bf16.mxu0 0
    %2054 = vmatpush1.bf16.msra.mxu0 0
    %2055 = vmatprep.subr.bf16.mxu0 0
    %2056 = vmatpush1.bf16.msra.mxu0 0
    %2057 = vmatprep.subr.bf16.mxu0 0
    %2058 = vmatpush1.bf16.msra.mxu0 0
    %2059 = vmatprep.mubr.bf16.mxu0 0
    %2060 = vmatmul.mubr.bf16.gmra.mrb[0].mxu0 %v2026
    %v2061 = vpop.f32.mrb[0].mxu0
    %v2062 = vadd.f32 %v672, %v2061
    %v2063 = vpop.f32.mrb[0].mxu0
    %v2064 = vadd.f32 %v676, %v2063
    %v2065 = vpop.f32.mrb[0].mxu0
    %v2066 = vpop.f32.mrb[0].mxu0
    %2067 = vdwg.mxu0
    %2068 = vmatprep.subr.bf16.mxu0 0
    %2069 = vmatpush1.bf16.msra.mxu0 %v769
    %2070 = vmatprep.subr.bf16.mxu0 0
    %2071 = vmatpush1.bf16.msra.mxu0 %v772
    %2072 = vmatprep.subr.bf16.mxu0 0
    %2073 = vmatpush1.bf16.msra.mxu0 %v775
    %2074 = vmatprep.subr.bf16.mxu0 0
    %2075 = vmatpush1.bf16.msra.mxu0 %v778
    %2076 = vmatprep.subr.bf16.mxu0 0
    %2077 = vmatpush1.bf16.msra.mxu0 %v781
    %2078 = vmatprep.subr.bf16.mxu0 0
    %2079 = vmatpush1.bf16.msra.mxu0 %v784
    %2080 = vmatprep.subr.bf16.mxu0 0
    %2081 = vmatpush1.bf16.msra.mxu0 %v787
    %2082 = vmatprep.subr.bf16.mxu0 0
    %2083 = vmatpush1.bf16.msra.mxu0 %v790
    %2084 = vmatprep.subr.bf16.mxu0 0
    %2085 = vmatpush1.bf16.msra.mxu0 0
    %2086 = vmatprep.subr.bf16.mxu0 0
    %2087 = vmatpush1.bf16.msra.mxu0 0
    %2088 = vmatprep.subr.bf16.mxu0 0
    %2089 = vmatpush1.bf16.msra.mxu0 0
    %2090 = vmatprep.subr.bf16.mxu0 0
    %2091 = vmatpush1.bf16.msra.mxu0 0
    %2092 = vmatprep.subr.bf16.mxu0 0
    %2093 = vmatpush1.bf16.msra.mxu0 0
    %2094 = vmatprep.subr.bf16.mxu0 0
    %2095 = vmatpush1.bf16.msra.mxu0 0
    %2096 = vmatprep.subr.bf16.mxu0 0
    %2097 = vmatpush1.bf16.msra.mxu0 0
    %2098 = vmatprep.subr.bf16.mxu0 0
    %2099 = vmatpush1.bf16.msra.mxu0 0
    %2100 = vmatprep.mubr.bf16.mxu0 0
    %2101 = vmatmul.mubr.bf16.gmra.mrb[0].mxu0 %v2026
    %v2102 = vpop.f32.mrb[0].mxu0
    %v2103 = vadd.f32 %v680, %v2102
    %v2104 = vpop.f32.mrb[0].mxu0
    %v2105 = vpop.f32.mrb[0].mxu0
    %v2106 = vpop.f32.mrb[0].mxu0
    %2107 = vdwg.mxu0
    %v2108 = vadd.f32 %v2023, %v2062
    %v2109 = vmul.f32 %v2108, 0.5
    %v2110 = vtanh.pop %v2109
    %v2111 = vmul.f32 %v2110, 0.5
    %v2112 = vadd.f32 %v2111, 0.5
    %v2113 = vadd.f32 %v2024, %v2064
    %v2114 = vmul.f32 %v2113, 0.5
    %v2115 = vtanh.pop %v2114
    %v2116 = vmul.f32 %v2115, 0.5
    %v2117 = vadd.f32 %v2116, 0.5
    %v2118 = vmul.f32 %v2112, %v2103
    %v2119 = vadd.f32 %v2025, %v2118
    %v2120 = vtanh.pop %v2119
    %v2121 = vsub.f32 %v2022, %v2120
    %v2122 = vmul.f32 %v2117, %v2121
    %v2123 = vadd.f32 %v2120, %v2122
    %v2124 = vld [vmem:[#allocation2 + $0x138] sm:$0xff]
    %v2125 = vld [vmem:[#allocation2 + $0x140] sm:$0xff]
    %v2126 = vld [vmem:[#allocation2 + $0x148] sm:$0xff]
    %v2127 = vpack.c.bf16 %v2123, %v2123
    %2128 = vmatprep.subr.bf16.mxu0 %v768
    %2129 = vmatpush1.bf16.msra.mxu0 %v767
    %2130 = vmatprep.subr.bf16.mxu0 %v771
    %2131 = vmatpush1.bf16.msra.mxu0 %v770
    %2132 = vmatprep.subr.bf16.mxu0 %v774
    %2133 = vmatpush1.bf16.msra.mxu0 %v773
    %2134 = vmatprep.subr.bf16.mxu0 %v777
    %2135 = vmatpush1.bf16.msra.mxu0 %v776
    %2136 = vmatprep.subr.bf16.mxu0 %v780
    %2137 = vmatpush1.bf16.msra.mxu0 %v779
    %2138 = vmatprep.subr.bf16.mxu0 %v783
    %2139 = vmatpush1.bf16.msra.mxu0 %v782
    %2140 = vmatprep.subr.bf16.mxu0 %v786
    %2141 = vmatpush1.bf16.msra.mxu0 %v785
    %2142 = vmatprep.subr.bf16.mxu0 %v789
    %2143 = vmatpush1.bf16.msra.mxu0 %v788
    %2144 = vmatprep.subr.bf16.mxu0 0
    %2145 = vmatpush1.bf16.msra.mxu0 0
    %2146 = vmatprep.subr.bf16.mxu0 0
    %2147 = vmatpush1.bf16.msra.mxu0 0
    %2148 = vmatprep.subr.bf16.mxu0 0
    %2149 = vmatpush1.bf16.msra.mxu0 0
    %2150 = vmatprep.subr.bf16.mxu0 0
    %2151 = vmatpush1.bf16.msra.mxu0 0
    %2152 = vmatprep.subr.bf16.mxu0 0
    %2153 = vmatpush1.bf16.msra.mxu0 0
    %2154 = vmatprep.subr.bf16.mxu0 0
    %2155 = vmatpush1.bf16.msra.mxu0 0
    %2156 = vmatprep.subr.bf16.mxu0 0
    %2157 = vmatpush1.bf16.msra.mxu0 0
    %2158 = vmatprep.subr.bf16.mxu0 0
    %2159 = vmatpush1.bf16.msra.mxu0 0
    %2160 = vmatprep.mubr.bf16.mxu0 0
    %2161 = vmatmul.mubr.bf16.gmra.mrb[0].mxu0 %v2127
    %v2162 = vpop.f32.mrb[0].mxu0
    %v2163 = vadd.f32 %v672, %v2162
    %v2164 = vpop.f32.mrb[0].mxu0
    %v2165 = vadd.f32 %v676, %v2164
    %v2166 = vpop.f32.mrb[0].mxu0
    %v2167 = vpop.f32.mrb[0].mxu0
    %2168 = vdwg.mxu0
    %2169 = vmatprep.subr.bf16.mxu0 0
    %2170 = vmatpush1.bf16.msra.mxu0 %v769
    %2171 = vmatprep.subr.bf16.mxu0 0
    %2172 = vmatpush1.bf16.msra.mxu0 %v772
    %2173 = vmatprep.subr.bf16.mxu0 0
    %2174 = vmatpush1.bf16.msra.mxu0 %v775
    %2175 = vmatprep.subr.bf16.mxu0 0
    %2176 = vmatpush1.bf16.msra.mxu0 %v778
    %2177 = vmatprep.subr.bf16.mxu0 0
    %2178 = vmatpush1.bf16.msra.mxu0 %v781
    %2179 = vmatprep.subr.bf16.mxu0 0
    %2180 = vmatpush1.bf16.msra.mxu0 %v784
    %2181 = vmatprep.subr.bf16.mxu0 0
    %2182 = vmatpush1.bf16.msra.mxu0 %v787
    %2183 = vmatprep.subr.bf16.mxu0 0
    %2184 = vmatpush1.bf16.msra.mxu0 %v790
    %2185 = vmatprep.subr.bf16.mxu0 0
    %2186 = vmatpush1.bf16.msra.mxu0 0
    %2187 = vmatprep.subr.bf16.mxu0 0
    %2188 = vmatpush1.bf16.msra.mxu0 0
    %2189 = vmatprep.subr.bf16.mxu0 0
    %2190 = vmatpush1.bf16.msra.mxu0 0
    %2191 = vmatprep.subr.bf16.mxu0 0
    %2192 = vmatpush1.bf16.msra.mxu0 0
    %2193 = vmatprep.subr.bf16.mxu0 0
    %2194 = vmatpush1.bf16.msra.mxu0 0
    %2195 = vmatprep.subr.bf16.mxu0 0
    %2196 = vmatpush1.bf16.msra.mxu0 0
    %2197 = vmatprep.subr.bf16.mxu0 0
    %2198 = vmatpush1.bf16.msra.mxu0 0
    %2199 = vmatprep.subr.bf16.mxu0 0
    %2200 = vmatpush1.bf16.msra.mxu0 0
    %2201 = vmatprep.mubr.bf16.mxu0 0
    %2202 = vmatmul.mubr.bf16.gmra.mrb[0].mxu0 %v2127
    %v2203 = vpop.f32.mrb[0].mxu0
    %v2204 = vadd.f32 %v680, %v2203
    %v2205 = vpop.f32.mrb[0].mxu0
    %v2206 = vpop.f32.mrb[0].mxu0
    %v2207 = vpop.f32.mrb[0].mxu0
    %2208 = vdwg.mxu0
    %v2209 = vadd.f32 %v2124, %v2163
    %v2210 = vmul.f32 %v2209, 0.5
    %v2211 = vtanh.pop %v2210
    %v2212 = vmul.f32 %v2211, 0.5
    %v2213 = vadd.f32 %v2212, 0.5
    %v2214 = vadd.f32 %v2125, %v2165
    %v2215 = vmul.f32 %v2214, 0.5
    %v2216 = vtanh.pop %v2215
    %v2217 = vmul.f32 %v2216, 0.5
    %v2218 = vadd.f32 %v2217, 0.5
    %v2219 = vmul.f32 %v2213, %v2204
    %v2220 = vadd.f32 %v2126, %v2219
    %v2221 = vtanh.pop %v2220
    %v2222 = vsub.f32 %v2123, %v2221
    %v2223 = vmul.f32 %v2218, %v2222
    %v2224 = vadd.f32 %v2221, %v2223
    %v2225 = vld [vmem:[#allocation2 + $0x150] sm:$0xff]
    %v2226 = vld [vmem:[#allocation2 + $0x158] sm:$0xff]
    %v2227 = vld [vmem:[#allocation2 + $0x160] sm:$0xff]
    %v2228 = vpack.c.bf16 %v2224, %v2224
    %2229 = vmatprep.subr.bf16.mxu0 %v768
    %2230 = vmatpush1.bf16.msra.mxu0 %v767
    %2231 = vmatprep.subr.bf16.mxu0 %v771
    %2232 = vmatpush1.bf16.msra.mxu0 %v770
    %2233 = vmatprep.subr.bf16.mxu0 %v774
    %2234 = vmatpush1.bf16.msra.mxu0 %v773
    %2235 = vmatprep.subr.bf16.mxu0 %v777
    %2236 = vmatpush1.bf16.msra.mxu0 %v776
    %2237 = vmatprep.subr.bf16.mxu0 %v780
    %2238 = vmatpush1.bf16.msra.mxu0 %v779
    %2239 = vmatprep.subr.bf16.mxu0 %v783
    %2240 = vmatpush1.bf16.msra.mxu0 %v782
    %2241 = vmatprep.subr.bf16.mxu0 %v786
    %2242 = vmatpush1.bf16.msra.mxu0 %v785
    %2243 = vmatprep.subr.bf16.mxu0 %v789
    %2244 = vmatpush1.bf16.msra.mxu0 %v788
    %2245 = vmatprep.subr.bf16.mxu0 0
    %2246 = vmatpush1.bf16.msra.mxu0 0
    %2247 = vmatprep.subr.bf16.mxu0 0
    %2248 = vmatpush1.bf16.msra.mxu0 0
    %2249 = vmatprep.subr.bf16.mxu0 0
    %2250 = vmatpush1.bf16.msra.mxu0 0
    %2251 = vmatprep.subr.bf16.mxu0 0
    %2252 = vmatpush1.bf16.msra.mxu0 0
    %2253 = vmatprep.subr.bf16.mxu0 0
    %2254 = vmatpush1.bf16.msra.mxu0 0
    %2255 = vmatprep.subr.bf16.mxu0 0
    %2256 = vmatpush1.bf16.msra.mxu0 0
    %2257 = vmatprep.subr.bf16.mxu0 0
    %2258 = vmatpush1.bf16.msra.mxu0 0
    %2259 = vmatprep.subr.bf16.mxu0 0
    %2260 = vmatpush1.bf16.msra.mxu0 0
    %2261 = vmatprep.mubr.bf16.mxu0 0
    %2262 = vmatmul.mubr.bf16.gmra.mrb[0].mxu0 %v2228
    %v2263 = vpop.f32.mrb[0].mxu0
    %v2264 = vadd.f32 %v672, %v2263
    %v2265 = vpop.f32.mrb[0].mxu0
    %v2266 = vadd.f32 %v676, %v2265
    %v2267 = vpop.f32.mrb[0].mxu0
    %v2268 = vpop.f32.mrb[0].mxu0
    %2269 = vdwg.mxu0
    %2270 = vmatprep.subr.bf16.mxu0 0
    %2271 = vmatpush1.bf16.msra.mxu0 %v769
    %2272 = vmatprep.subr.bf16.mxu0 0
    %2273 = vmatpush1.bf16.msra.mxu0 %v772
    %2274 = vmatprep.subr.bf16.mxu0 0
    %2275 = vmatpush1.bf16.msra.mxu0 %v775
    %2276 = vmatprep.subr.bf16.mxu0 0
    %2277 = vmatpush1.bf16.msra.mxu0 %v778
    %2278 = vmatprep.subr.bf16.mxu0 0
    %2279 = vmatpush1.bf16.msra.mxu0 %v781
    %2280 = vmatprep.subr.bf16.mxu0 0
    %2281 = vmatpush1.bf16.msra.mxu0 %v784
    %2282 = vmatprep.subr.bf16.mxu0 0
    %2283 = vmatpush1.bf16.msra.mxu0 %v787
    %2284 = vmatprep.subr.bf16.mxu0 0
    %2285 = vmatpush1.bf16.msra.mxu0 %v790
    %2286 = vmatprep.subr.bf16.mxu0 0
    %2287 = vmatpush1.bf16.msra.mxu0 0
    %2288 = vmatprep.subr.bf16.mxu0 0
    %2289 = vmatpush1.bf16.msra.mxu0 0
    %2290 = vmatprep.subr.bf16.mxu0 0
    %2291 = vmatpush1.bf16.msra.mxu0 0
    %2292 = vmatprep.subr.bf16.mxu0 0
    %2293 = vmatpush1.bf16.msra.mxu0 0
    %2294 = vmatprep.subr.bf16.mxu0 0
    %2295 = vmatpush1.bf16.msra.mxu0 0
    %2296 = vmatprep.subr.bf16.mxu0 0
    %2297 = vmatpush1.bf16.msra.mxu0 0
    %2298 = vmatprep.subr.bf16.mxu0 0
    %2299 = vmatpush1.bf16.msra.mxu0 0
    %2300 = vmatprep.subr.bf16.mxu0 0
    %2301 = vmatpush1.bf16.msra.mxu0 0
    %2302 = vmatprep.mubr.bf16.mxu0 0
    %2303 = vmatmul.mubr.bf16.gmra.mrb[0].mxu0 %v2228
    %v2304 = vpop.f32.mrb[0].mxu0
    %v2305 = vadd.f32 %v680, %v2304
    %v2306 = vpop.f32.mrb[0].mxu0
    %v2307 = vpop.f32.mrb[0].mxu0
    %v2308 = vpop.f32.mrb[0].mxu0
    %2309 = vdwg.mxu0
    %v2310 = vadd.f32 %v2225, %v2264
    %v2311 = vmul.f32 %v2310, 0.5
    %v2312 = vtanh.pop %v2311
    %v2313 = vmul.f32 %v2312, 0.5
    %v2314 = vadd.f32 %v2313, 0.5
    %v2315 = vadd.f32 %v2226, %v2266
    %v2316 = vmul.f32 %v2315, 0.5
    %v2317 = vtanh.pop %v2316
    %v2318 = vmul.f32 %v2317, 0.5
    %v2319 = vadd.f32 %v2318, 0.5
    %v2320 = vmul.f32 %v2314, %v2305
    %v2321 = vadd.f32 %v2227, %v2320
    %v2322 = vtanh.pop %v2321
    %v2323 = vsub.f32 %v2224, %v2322
    %v2324 = vmul.f32 %v2319, %v2323
    %v2325 = vadd.f32 %v2322, %v2324
    %v2326 = vld [vmem:[#allocation2 + $0x168] sm:$0xff]
    %v2327 = vld [vmem:[#allocation2 + $0x170] sm:$0xff]
    %v2328 = vld [vmem:[#allocation2 + $0x178] sm:$0xff]
    %v2329 = vpack.c.bf16 %v2325, %v2325
    %2330 = vmatprep.subr.bf16.mxu0 %v768
    %2331 = vmatpush1.bf16.msra.mxu0 %v767
    %2332 = vmatprep.subr.bf16.mxu0 %v771
    %2333 = vmatpush1.bf16.msra.mxu0 %v770
    %2334 = vmatprep.subr.bf16.mxu0 %v774
    %2335 = vmatpush1.bf16.msra.mxu0 %v773
    %2336 = vmatprep.subr.bf16.mxu0 %v777
    %2337 = vmatpush1.bf16.msra.mxu0 %v776
    %2338 = vmatprep.subr.bf16.mxu0 %v780
    %2339 = vmatpush1.bf16.msra.mxu0 %v779
    %2340 = vmatprep.subr.bf16.mxu0 %v783
    %2341 = vmatpush1.bf16.msra.mxu0 %v782
    %2342 = vmatprep.subr.bf16.mxu0 %v786
    %2343 = vmatpush1.bf16.msra.mxu0 %v785
    %2344 = vmatprep.subr.bf16.mxu0 %v789
    %2345 = vmatpush1.bf16.msra.mxu0 %v788
    %2346 = vmatprep.subr.bf16.mxu0 0
    %2347 = vmatpush1.bf16.msra.mxu0 0
    %2348 = vmatprep.subr.bf16.mxu0 0
    %2349 = vmatpush1.bf16.msra.mxu0 0
    %2350 = vmatprep.subr.bf16.mxu0 0
    %2351 = vmatpush1.bf16.msra.mxu0 0
    %2352 = vmatprep.subr.bf16.mxu0 0
    %2353 = vmatpush1.bf16.msra.mxu0 0
    %2354 = vmatprep.subr.bf16.mxu0 0
    %2355 = vmatpush1.bf16.msra.mxu0 0
    %2356 = vmatprep.subr.bf16.mxu0 0
    %2357 = vmatpush1.bf16.msra.mxu0 0
    %2358 = vmatprep.subr.bf16.mxu0 0
    %2359 = vmatpush1.bf16.msra.mxu0 0
    %2360 = vmatprep.subr.bf16.mxu0 0
    %2361 = vmatpush1.bf16.msra.mxu0 0
    %2362 = vmatprep.mubr.bf16.mxu0 0
    %2363 = vmatmul.mubr.bf16.gmra.mrb[0].mxu0 %v2329
    %v2364 = vpop.f32.mrb[0].mxu0
    %v2365 = vadd.f32 %v672, %v2364
    %v2366 = vpop.f32.mrb[0].mxu0
    %v2367 = vadd.f32 %v676, %v2366
    %v2368 = vpop.f32.mrb[0].mxu0
    %v2369 = vpop.f32.mrb[0].mxu0
    %2370 = vdwg.mxu0
    %2371 = vmatprep.subr.bf16.mxu0 0
    %2372 = vmatpush1.bf16.msra.mxu0 %v769
    %2373 = vmatprep.subr.bf16.mxu0 0
    %2374 = vmatpush1.bf16.msra.mxu0 %v772
    %2375 = vmatprep.subr.bf16.mxu0 0
    %2376 = vmatpush1.bf16.msra.mxu0 %v775
    %2377 = vmatprep.subr.bf16.mxu0 0
    %2378 = vmatpush1.bf16.msra.mxu0 %v778
    %2379 = vmatprep.subr.bf16.mxu0 0
    %2380 = vmatpush1.bf16.msra.mxu0 %v781
    %2381 = vmatprep.subr.bf16.mxu0 0
    %2382 = vmatpush1.bf16.msra.mxu0 %v784
    %2383 = vmatprep.subr.bf16.mxu0 0
    %2384 = vmatpush1.bf16.msra.mxu0 %v787
    %2385 = vmatprep.subr.bf16.mxu0 0
    %2386 = vmatpush1.bf16.msra.mxu0 %v790
    %2387 = vmatprep.subr.bf16.mxu0 0
    %2388 = vmatpush1.bf16.msra.mxu0 0
    %2389 = vmatprep.subr.bf16.mxu0 0
    %2390 = vmatpush1.bf16.msra.mxu0 0
    %2391 = vmatprep.subr.bf16.mxu0 0
    %2392 = vmatpush1.bf16.msra.mxu0 0
    %2393 = vmatprep.subr.bf16.mxu0 0
    %2394 = vmatpush1.bf16.msra.mxu0 0
    %2395 = vmatprep.subr.bf16.mxu0 0
    %2396 = vmatpush1.bf16.msra.mxu0 0
    %2397 = vmatprep.subr.bf16.mxu0 0
    %2398 = vmatpush1.bf16.msra.mxu0 0
    %2399 = vmatprep.subr.bf16.mxu0 0
    %2400 = vmatpush1.bf16.msra.mxu0 0
    %2401 = vmatprep.subr.bf16.mxu0 0
    %2402 = vmatpush1.bf16.msra.mxu0 0
    %2403 = vmatprep.mubr.bf16.mxu0 0
    %2404 = vmatmul.mubr.bf16.gmra.mrb[0].mxu0 %v2329
    %v2405 = vpop.f32.mrb[0].mxu0
    %v2406 = vadd.f32 %v680, %v2405
    %v2407 = vpop.f32.mrb[0].mxu0
    %v2408 = vpop.f32.mrb[0].mxu0
    %v2409 = vpop.f32.mrb[0].mxu0
    %2410 = vdwg.mxu0
    %v2411 = vadd.f32 %v2326, %v2365
    %v2412 = vmul.f32 %v2411, 0.5
    %v2413 = vtanh.pop %v2412
    %v2414 = vmul.f32 %v2413, 0.5
    %v2415 = vadd.f32 %v2414, 0.5
    %v2416 = vadd.f32 %v2327, %v2367
    %v2417 = vmul.f32 %v2416, 0.5
    %v2418 = vtanh.pop %v2417
    %v2419 = vmul.f32 %v2418, 0.5
    %v2420 = vadd.f32 %v2419, 0.5
    %v2421 = vmul.f32 %v2415, %v2406
    %v2422 = vadd.f32 %v2328, %v2421
    %v2423 = vtanh.pop %v2422
    %v2424 = vsub.f32 %v2325, %v2423
    %v2425 = vmul.f32 %v2420, %v2424
    %v2426 = vadd.f32 %v2423, %v2425
    %v2427 = vld [vmem:[#allocation2 + $0x180] sm:$0xff]
    %v2428 = vld [vmem:[#allocation2 + $0x188] sm:$0xff]
    %v2429 = vld [vmem:[#allocation2 + $0x190] sm:$0xff]
    %v2430 = vpack.c.bf16 %v2426, %v2426
    %2431 = vmatprep.subr.bf16.mxu0 %v768
    %2432 = vmatpush1.bf16.msra.mxu0 %v767
    %2433 = vmatprep.subr.bf16.mxu0 %v771
    %2434 = vmatpush1.bf16.msra.mxu0 %v770
    %2435 = vmatprep.subr.bf16.mxu0 %v774
    %2436 = vmatpush1.bf16.msra.mxu0 %v773
    %2437 = vmatprep.subr.bf16.mxu0 %v777
    %2438 = vmatpush1.bf16.msra.mxu0 %v776
    %2439 = vmatprep.subr.bf16.mxu0 %v780
    %2440 = vmatpush1.bf16.msra.mxu0 %v779
    %2441 = vmatprep.subr.bf16.mxu0 %v783
    %2442 = vmatpush1.bf16.msra.mxu0 %v782
    %2443 = vmatprep.subr.bf16.mxu0 %v786
    %2444 = vmatpush1.bf16.msra.mxu0 %v785
    %2445 = vmatprep.subr.bf16.mxu0 %v789
    %2446 = vmatpush1.bf16.msra.mxu0 %v788
    %2447 = vmatprep.subr.bf16.mxu0 0
    %2448 = vmatpush1.bf16.msra.mxu0 0
    %2449 = vmatprep.subr.bf16.mxu0 0
    %2450 = vmatpush1.bf16.msra.mxu0 0
    %2451 = vmatprep.subr.bf16.mxu0 0
    %2452 = vmatpush1.bf16.msra.mxu0 0
    %2453 = vmatprep.subr.bf16.mxu0 0
    %2454 = vmatpush1.bf16.msra.mxu0 0
    %2455 = vmatprep.subr.bf16.mxu0 0
    %2456 = vmatpush1.bf16.msra.mxu0 0
    %2457 = vmatprep.subr.bf16.mxu0 0
    %2458 = vmatpush1.bf16.msra.mxu0 0
    %2459 = vmatprep.subr.bf16.mxu0 0
    %2460 = vmatpush1.bf16.msra.mxu0 0
    %2461 = vmatprep.subr.bf16.mxu0 0
    %2462 = vmatpush1.bf16.msra.mxu0 0
    %2463 = vmatprep.mubr.bf16.mxu0 0
    %2464 = vmatmul.mubr.bf16.gmra.mrb[0].mxu0 %v2430
    %v2465 = vpop.f32.mrb[0].mxu0
    %v2466 = vadd.f32 %v672, %v2465
    %v2467 = vpop.f32.mrb[0].mxu0
    %v2468 = vadd.f32 %v676, %v2467
    %v2469 = vpop.f32.mrb[0].mxu0
    %v2470 = vpop.f32.mrb[0].mxu0
    %2471 = vdwg.mxu0
    %2472 = vmatprep.subr.bf16.mxu0 0
    %2473 = vmatpush1.bf16.msra.mxu0 %v769
    %2474 = vmatprep.subr.bf16.mxu0 0
    %2475 = vmatpush1.bf16.msra.mxu0 %v772
    %2476 = vmatprep.subr.bf16.mxu0 0
    %2477 = vmatpush1.bf16.msra.mxu0 %v775
    %2478 = vmatprep.subr.bf16.mxu0 0
    %2479 = vmatpush1.bf16.msra.mxu0 %v778
    %2480 = vmatprep.subr.bf16.mxu0 0
    %2481 = vmatpush1.bf16.msra.mxu0 %v781
    %2482 = vmatprep.subr.bf16.mxu0 0
    %2483 = vmatpush1.bf16.msra.mxu0 %v784
    %2484 = vmatprep.subr.bf16.mxu0 0
    %2485 = vmatpush1.bf16.msra.mxu0 %v787
    %2486 = vmatprep.subr.bf16.mxu0 0
    %2487 = vmatpush1.bf16.msra.mxu0 %v790
    %2488 = vmatprep.subr.bf16.mxu0 0
    %2489 = vmatpush1.bf16.msra.mxu0 0
    %2490 = vmatprep.subr.bf16.mxu0 0
    %2491 = vmatpush1.bf16.msra.mxu0 0
    %2492 = vmatprep.subr.bf16.mxu0 0
    %2493 = vmatpush1.bf16.msra.mxu0 0
    %2494 = vmatprep.subr.bf16.mxu0 0
    %2495 = vmatpush1.bf16.msra.mxu0 0
    %2496 = vmatprep.subr.bf16.mxu0 0
    %2497 = vmatpush1.bf16.msra.mxu0 0
    %2498 = vmatprep.subr.bf16.mxu0 0
    %2499 = vmatpush1.bf16.msra.mxu0 0
    %2500 = vmatprep.subr.bf16.mxu0 0
    %2501 = vmatpush1.bf16.msra.mxu0 0
    %2502 = vmatprep.subr.bf16.mxu0 0
    %2503 = vmatpush1.bf16.msra.mxu0 0
    %2504 = vmatprep.mubr.bf16.mxu0 0
    %2505 = vmatmul.mubr.bf16.gmra.mrb[0].mxu0 %v2430
    %v2506 = vpop.f32.mrb[0].mxu0
    %v2507 = vadd.f32 %v680, %v2506
    %v2508 = vpop.f32.mrb[0].mxu0
    %v2509 = vpop.f32.mrb[0].mxu0
    %v2510 = vpop.f32.mrb[0].mxu0
    %2511 = vdwg.mxu0
    %v2512 = vadd.f32 %v2427, %v2466
    %v2513 = vmul.f32 %v2512, 0.5
    %v2514 = vtanh.pop %v2513
    %v2515 = vmul.f32 %v2514, 0.5
    %v2516 = vadd.f32 %v2515, 0.5
    %v2517 = vadd.f32 %v2428, %v2468
    %v2518 = vmul.f32 %v2517, 0.5
    %v2519 = vtanh.pop %v2518
    %v2520 = vmul.f32 %v2519, 0.5
    %v2521 = vadd.f32 %v2520, 0.5
    %v2522 = vmul.f32 %v2516, %v2507
    %v2523 = vadd.f32 %v2429, %v2522
    %v2524 = vtanh.pop %v2523
    %v2525 = vsub.f32 %v2426, %v2524
    %v2526 = vmul.f32 %v2521, %v2525
    %v2527 = vadd.f32 %v2524, %v2526
    %v2528 = vld [vmem:[#allocation2 + $0x198] sm:$0xff]
    %v2529 = vld [vmem:[#allocation2 + $0x1a0] sm:$0xff]
    %v2530 = vld [vmem:[#allocation2 + $0x1a8] sm:$0xff]
    %v2531 = vpack.c.bf16 %v2527, %v2527
    %2532 = vmatprep.subr.bf16.mxu0 %v768
    %2533 = vmatpush1.bf16.msra.mxu0 %v767
    %2534 = vmatprep.subr.bf16.mxu0 %v771
    %2535 = vmatpush1.bf16.msra.mxu0 %v770
    %2536 = vmatprep.subr.bf16.mxu0 %v774
    %2537 = vmatpush1.bf16.msra.mxu0 %v773
    %2538 = vmatprep.subr.bf16.mxu0 %v777
    %2539 = vmatpush1.bf16.msra.mxu0 %v776
    %2540 = vmatprep.subr.bf16.mxu0 %v780
    %2541 = vmatpush1.bf16.msra.mxu0 %v779
    %2542 = vmatprep.subr.bf16.mxu0 %v783
    %2543 = vmatpush1.bf16.msra.mxu0 %v782
    %2544 = vmatprep.subr.bf16.mxu0 %v786
    %2545 = vmatpush1.bf16.msra.mxu0 %v785
    %2546 = vmatprep.subr.bf16.mxu0 %v789
    %2547 = vmatpush1.bf16.msra.mxu0 %v788
    %2548 = vmatprep.subr.bf16.mxu0 0
    %2549 = vmatpush1.bf16.msra.mxu0 0
    %2550 = vmatprep.subr.bf16.mxu0 0
    %2551 = vmatpush1.bf16.msra.mxu0 0
    %2552 = vmatprep.subr.bf16.mxu0 0
    %2553 = vmatpush1.bf16.msra.mxu0 0
    %2554 = vmatprep.subr.bf16.mxu0 0
    %2555 = vmatpush1.bf16.msra.mxu0 0
    %2556 = vmatprep.subr.bf16.mxu0 0
    %2557 = vmatpush1.bf16.msra.mxu0 0
    %2558 = vmatprep.subr.bf16.mxu0 0
    %2559 = vmatpush1.bf16.msra.mxu0 0
    %2560 = vmatprep.subr.bf16.mxu0 0
    %2561 = vmatpush1.bf16.msra.mxu0 0
    %2562 = vmatprep.subr.bf16.mxu0 0
    %2563 = vmatpush1.bf16.msra.mxu0 0
    %2564 = vmatprep.mubr.bf16.mxu0 0
    %2565 = vmatmul.mubr.bf16.gmra.mrb[0].mxu0 %v2531
    %v2566 = vpop.f32.mrb[0].mxu0
    %v2567 = vadd.f32 %v672, %v2566
    %v2568 = vpop.f32.mrb[0].mxu0
    %v2569 = vadd.f32 %v676, %v2568
    %v2570 = vpop.f32.mrb[0].mxu0
    %v2571 = vpop.f32.mrb[0].mxu0
    %2572 = vdwg.mxu0
    %2573 = vmatprep.subr.bf16.mxu0 0
    %2574 = vmatpush1.bf16.msra.mxu0 %v769
    %2575 = vmatprep.subr.bf16.mxu0 0
    %2576 = vmatpush1.bf16.msra.mxu0 %v772
    %2577 = vmatprep.subr.bf16.mxu0 0
    %2578 = vmatpush1.bf16.msra.mxu0 %v775
    %2579 = vmatprep.subr.bf16.mxu0 0
    %2580 = vmatpush1.bf16.msra.mxu0 %v778
    %2581 = vmatprep.subr.bf16.mxu0 0
    %2582 = vmatpush1.bf16.msra.mxu0 %v781
    %2583 = vmatprep.subr.bf16.mxu0 0
    %2584 = vmatpush1.bf16.msra.mxu0 %v784
    %2585 = vmatprep.subr.bf16.mxu0 0
    %2586 = vmatpush1.bf16.msra.mxu0 %v787
    %2587 = vmatprep.subr.bf16.mxu0 0
    %2588 = vmatpush1.bf16.msra.mxu0 %v790
    %2589 = vmatprep.subr.bf16.mxu0 0
    %2590 = vmatpush1.bf16.msra.mxu0 0
    %2591 = vmatprep.subr.bf16.mxu0 0
    %2592 = vmatpush1.bf16.msra.mxu0 0
    %2593 = vmatprep.subr.bf16.mxu0 0
    %2594 = vmatpush1.bf16.msra.mxu0 0
    %2595 = vmatprep.subr.bf16.mxu0 0
    %2596 = vmatpush1.bf16.msra.mxu0 0
    %2597 = vmatprep.subr.bf16.mxu0 0
    %2598 = vmatpush1.bf16.msra.mxu0 0
    %2599 = vmatprep.subr.bf16.mxu0 0
    %2600 = vmatpush1.bf16.msra.mxu0 0
    %2601 = vmatprep.subr.bf16.mxu0 0
    %2602 = vmatpush1.bf16.msra.mxu0 0
    %2603 = vmatprep.subr.bf16.mxu0 0
    %2604 = vmatpush1.bf16.msra.mxu0 0
    %2605 = vmatprep.mubr.bf16.mxu0 0
    %2606 = vmatmul.mubr.bf16.gmra.mrb[0].mxu0 %v2531
    %v2607 = vpop.f32.mrb[0].mxu0
    %v2608 = vadd.f32 %v680, %v2607
    %v2609 = vpop.f32.mrb[0].mxu0
    %v2610 = vpop.f32.mrb[0].mxu0
    %v2611 = vpop.f32.mrb[0].mxu0
    %2612 = vdwg.mxu0
    %v2613 = vadd.f32 %v2528, %v2567
    %v2614 = vmul.f32 %v2613, 0.5
    %v2615 = vtanh.pop %v2614
    %v2616 = vmul.f32 %v2615, 0.5
    %v2617 = vadd.f32 %v2616, 0.5
    %v2618 = vadd.f32 %v2529, %v2569
    %v2619 = vmul.f32 %v2618, 0.5
    %v2620 = vtanh.pop %v2619
    %v2621 = vmul.f32 %v2620, 0.5
    %v2622 = vadd.f32 %v2621, 0.5
    %v2623 = vmul.f32 %v2617, %v2608
    %v2624 = vadd.f32 %v2530, %v2623
    %v2625 = vtanh.pop %v2624
    %v2626 = vsub.f32 %v2527, %v2625
    %v2627 = vmul.f32 %v2622, %v2626
    %v2628 = vadd.f32 %v2625, %v2627
    %v2629 = vld [vmem:[#allocation2 + $0x1b0] sm:$0xff]
    %v2630 = vld [vmem:[#allocation2 + $0x1b8] sm:$0xff]
    %v2631 = vld [vmem:[#allocation2 + $0x1c0] sm:$0xff]
    %v2632 = vpack.c.bf16 %v2628, %v2628
    %2633 = vmatprep.subr.bf16.mxu0 %v768
    %2634 = vmatpush1.bf16.msra.mxu0 %v767
    %2635 = vmatprep.subr.bf16.mxu0 %v771
    %2636 = vmatpush1.bf16.msra.mxu0 %v770
    %2637 = vmatprep.subr.bf16.mxu0 %v774
    %2638 = vmatpush1.bf16.msra.mxu0 %v773
    %2639 = vmatprep.subr.bf16.mxu0 %v777
    %2640 = vmatpush1.bf16.msra.mxu0 %v776
    %2641 = vmatprep.subr.bf16.mxu0 %v780
    %2642 = vmatpush1.bf16.msra.mxu0 %v779
    %2643 = vmatprep.subr.bf16.mxu0 %v783
    %2644 = vmatpush1.bf16.msra.mxu0 %v782
    %2645 = vmatprep.subr.bf16.mxu0 %v786
    %2646 = vmatpush1.bf16.msra.mxu0 %v785
    %2647 = vmatprep.subr.bf16.mxu0 %v789
    %2648 = vmatpush1.bf16.msra.mxu0 %v788
    %2649 = vmatprep.subr.bf16.mxu0 0
    %2650 = vmatpush1.bf16.msra.mxu0 0
    %2651 = vmatprep.subr.bf16.mxu0 0
    %2652 = vmatpush1.bf16.msra.mxu0 0
    %2653 = vmatprep.subr.bf16.mxu0 0
    %2654 = vmatpush1.bf16.msra.mxu0 0
    %2655 = vmatprep.subr.bf16.mxu0 0
    %2656 = vmatpush1.bf16.msra.mxu0 0
    %2657 = vmatprep.subr.bf16.mxu0 0
    %2658 = vmatpush1.bf16.msra.mxu0 0
    %2659 = vmatprep.subr.bf16.mxu0 0
    %2660 = vmatpush1.bf16.msra.mxu0 0
    %2661 = vmatprep.subr.bf16.mxu0 0
    %2662 = vmatpush1.bf16.msra.mxu0 0
    %2663 = vmatprep.subr.bf16.mxu0 0
    %2664 = vmatpush1.bf16.msra.mxu0 0
    %2665 = vmatprep.mubr.bf16.mxu0 0
    %2666 = vmatmul.mubr.bf16.gmra.mrb[0].mxu0 %v2632
    %v2667 = vpop.f32.mrb[0].mxu0
    %v2668 = vadd.f32 %v672, %v2667
    %v2669 = vpop.f32.mrb[0].mxu0
    %v2670 = vadd.f32 %v676, %v2669
    %v2671 = vpop.f32.mrb[0].mxu0
    %v2672 = vpop.f32.mrb[0].mxu0
    %2673 = vdwg.mxu0
    %2674 = vmatprep.subr.bf16.mxu0 0
    %2675 = vmatpush1.bf16.msra.mxu0 %v769
    %2676 = vmatprep.subr.bf16.mxu0 0
    %2677 = vmatpush1.bf16.msra.mxu0 %v772
    %2678 = vmatprep.subr.bf16.mxu0 0
    %2679 = vmatpush1.bf16.msra.mxu0 %v775
    %2680 = vmatprep.subr.bf16.mxu0 0
    %2681 = vmatpush1.bf16.msra.mxu0 %v778
    %2682 = vmatprep.subr.bf16.mxu0 0
    %2683 = vmatpush1.bf16.msra.mxu0 %v781
    %2684 = vmatprep.subr.bf16.mxu0 0
    %2685 = vmatpush1.bf16.msra.mxu0 %v784
    %2686 = vmatprep.subr.bf16.mxu0 0
    %2687 = vmatpush1.bf16.msra.mxu0 %v787
    %2688 = vmatprep.subr.bf16.mxu0 0
    %2689 = vmatpush1.bf16.msra.mxu0 %v790
    %2690 = vmatprep.subr.bf16.mxu0 0
    %2691 = vmatpush1.bf16.msra.mxu0 0
    %2692 = vmatprep.subr.bf16.mxu0 0
    %2693 = vmatpush1.bf16.msra.mxu0 0
    %2694 = vmatprep.subr.bf16.mxu0 0
    %2695 = vmatpush1.bf16.msra.mxu0 0
    %2696 = vmatprep.subr.bf16.mxu0 0
    %2697 = vmatpush1.bf16.msra.mxu0 0
    %2698 = vmatprep.subr.bf16.mxu0 0
    %2699 = vmatpush1.bf16.msra.mxu0 0
    %2700 = vmatprep.subr.bf16.mxu0 0
    %2701 = vmatpush1.bf16.msra.mxu0 0
    %2702 = vmatprep.subr.bf16.mxu0 0
    %2703 = vmatpush1.bf16.msra.mxu0 0
    %2704 = vmatprep.subr.bf16.mxu0 0
    %2705 = vmatpush1.bf16.msra.mxu0 0
    %2706 = vmatprep.mubr.bf16.mxu0 0
    %2707 = vmatmul.mubr.bf16.gmra.mrb[0].mxu0 %v2632
    %v2708 = vpop.f32.mrb[0].mxu0
    %v2709 = vadd.f32 %v680, %v2708
    %v2710 = vpop.f32.mrb[0].mxu0
    %v2711 = vpop.f32.mrb[0].mxu0
    %v2712 = vpop.f32.mrb[0].mxu0
    %2713 = vdwg.mxu0
    %v2714 = vadd.f32 %v2629, %v2668
    %v2715 = vmul.f32 %v2714, 0.5
    %v2716 = vtanh.pop %v2715
    %v2717 = vmul.f32 %v2716, 0.5
    %v2718 = vadd.f32 %v2717, 0.5
    %v2719 = vadd.f32 %v2630, %v2670
    %v2720 = vmul.f32 %v2719, 0.5
    %v2721 = vtanh.pop %v2720
    %v2722 = vmul.f32 %v2721, 0.5
    %v2723 = vadd.f32 %v2722, 0.5
    %v2724 = vmul.f32 %v2718, %v2709
    %v2725 = vadd.f32 %v2631, %v2724
    %v2726 = vtanh.pop %v2725
    %v2727 = vsub.f32 %v2628, %v2726
    %v2728 = vmul.f32 %v2723, %v2727
    %v2729 = vadd.f32 %v2726, %v2728
    %v2730 = vld [vmem:[#allocation2 + $0x1c8] sm:$0xff]
    %v2731 = vld [vmem:[#allocation2 + $0x1d0] sm:$0xff]
    %v2732 = vld [vmem:[#allocation2 + $0x1d8] sm:$0xff]
    %v2733 = vpack.c.bf16 %v2729, %v2729
    %2734 = vmatprep.subr.bf16.mxu0 %v768
    %2735 = vmatpush1.bf16.msra.mxu0 %v767
    %2736 = vmatprep.subr.bf16.mxu0 %v771
    %2737 = vmatpush1.bf16.msra.mxu0 %v770
    %2738 = vmatprep.subr.bf16.mxu0 %v774
    %2739 = vmatpush1.bf16.msra.mxu0 %v773
    %2740 = vmatprep.subr.bf16.mxu0 %v777
    %2741 = vmatpush1.bf16.msra.mxu0 %v776
    %2742 = vmatprep.subr.bf16.mxu0 %v780
    %2743 = vmatpush1.bf16.msra.mxu0 %v779
    %2744 = vmatprep.subr.bf16.mxu0 %v783
    %2745 = vmatpush1.bf16.msra.mxu0 %v782
    %2746 = vmatprep.subr.bf16.mxu0 %v786
    %2747 = vmatpush1.bf16.msra.mxu0 %v785
    %2748 = vmatprep.subr.bf16.mxu0 %v789
    %2749 = vmatpush1.bf16.msra.mxu0 %v788
    %2750 = vmatprep.subr.bf16.mxu0 0
    %2751 = vmatpush1.bf16.msra.mxu0 0
    %2752 = vmatprep.subr.bf16.mxu0 0
    %2753 = vmatpush1.bf16.msra.mxu0 0
    %2754 = vmatprep.subr.bf16.mxu0 0
    %2755 = vmatpush1.bf16.msra.mxu0 0
    %2756 = vmatprep.subr.bf16.mxu0 0
    %2757 = vmatpush1.bf16.msra.mxu0 0
    %2758 = vmatprep.subr.bf16.mxu0 0
    %2759 = vmatpush1.bf16.msra.mxu0 0
    %2760 = vmatprep.subr.bf16.mxu0 0
    %2761 = vmatpush1.bf16.msra.mxu0 0
    %2762 = vmatprep.subr.bf16.mxu0 0
    %2763 = vmatpush1.bf16.msra.mxu0 0
    %2764 = vmatprep.subr.bf16.mxu0 0
    %2765 = vmatpush1.bf16.msra.mxu0 0
    %2766 = vmatprep.mubr.bf16.mxu0 0
    %2767 = vmatmul.mubr.bf16.gmra.mrb[0].mxu0 %v2733
    %v2768 = vpop.f32.mrb[0].mxu0
    %v2769 = vadd.f32 %v672, %v2768
    %v2770 = vpop.f32.mrb[0].mxu0
    %v2771 = vadd.f32 %v676, %v2770
    %v2772 = vpop.f32.mrb[0].mxu0
    %v2773 = vpop.f32.mrb[0].mxu0
    %2774 = vdwg.mxu0
    %2775 = vmatprep.subr.bf16.mxu0 0
    %2776 = vmatpush1.bf16.msra.mxu0 %v769
    %2777 = vmatprep.subr.bf16.mxu0 0
    %2778 = vmatpush1.bf16.msra.mxu0 %v772
    %2779 = vmatprep.subr.bf16.mxu0 0
    %2780 = vmatpush1.bf16.msra.mxu0 %v775
    %2781 = vmatprep.subr.bf16.mxu0 0
    %2782 = vmatpush1.bf16.msra.mxu0 %v778
    %2783 = vmatprep.subr.bf16.mxu0 0
    %2784 = vmatpush1.bf16.msra.mxu0 %v781
    %2785 = vmatprep.subr.bf16.mxu0 0
    %2786 = vmatpush1.bf16.msra.mxu0 %v784
    %2787 = vmatprep.subr.bf16.mxu0 0
    %2788 = vmatpush1.bf16.msra.mxu0 %v787
    %2789 = vmatprep.subr.bf16.mxu0 0
    %2790 = vmatpush1.bf16.msra.mxu0 %v790
    %2791 = vmatprep.subr.bf16.mxu0 0
    %2792 = vmatpush1.bf16.msra.mxu0 0
    %2793 = vmatprep.subr.bf16.mxu0 0
    %2794 = vmatpush1.bf16.msra.mxu0 0
    %2795 = vmatprep.subr.bf16.mxu0 0
    %2796 = vmatpush1.bf16.msra.mxu0 0
    %2797 = vmatprep.subr.bf16.mxu0 0
    %2798 = vmatpush1.bf16.msra.mxu0 0
    %2799 = vmatprep.subr.bf16.mxu0 0
    %2800 = vmatpush1.bf16.msra.mxu0 0
    %2801 = vmatprep.subr.bf16.mxu0 0
    %2802 = vmatpush1.bf16.msra.mxu0 0
    %2803 = vmatprep.subr.bf16.mxu0 0
    %2804 = vmatpush1.bf16.msra.mxu0 0
    %2805 = vmatprep.subr.bf16.mxu0 0
    %2806 = vmatpush1.bf16.msra.mxu0 0
    %2807 = vmatprep.mubr.bf16.mxu0 0
    %2808 = vmatmul.mubr.bf16.gmra.mrb[0].mxu0 %v2733
    %v2809 = vpop.f32.mrb[0].mxu0
    %v2810 = vadd.f32 %v680, %v2809
    %v2811 = vpop.f32.mrb[0].mxu0
    %v2812 = vpop.f32.mrb[0].mxu0
    %v2813 = vpop.f32.mrb[0].mxu0
    %2814 = vdwg.mxu0
    %v2815 = vadd.f32 %v2730, %v2769
    %v2816 = vmul.f32 %v2815, 0.5
    %v2817 = vtanh.pop %v2816
    %v2818 = vmul.f32 %v2817, 0.5
    %v2819 = vadd.f32 %v2818, 0.5
    %v2820 = vadd.f32 %v2731, %v2771
    %v2821 = vmul.f32 %v2820, 0.5
    %v2822 = vtanh.pop %v2821
    %v2823 = vmul.f32 %v2822, 0.5
    %v2824 = vadd.f32 %v2823, 0.5
    %v2825 = vmul.f32 %v2819, %v2810
    %v2826 = vadd.f32 %v2732, %v2825
    %v2827 = vtanh.pop %v2826
    %v2828 = vsub.f32 %v2729, %v2827
    %v2829 = vmul.f32 %v2824, %v2828
    %v2830 = vadd.f32 %v2827, %v2829
    %v2831 = vld [vmem:[#allocation2 + $0x1e0] sm:$0xff]
    %v2832 = vld [vmem:[#allocation2 + $0x1e8] sm:$0xff]
    %v2833 = vld [vmem:[#allocation2 + $0x1f0] sm:$0xff]
    %v2834 = vpack.c.bf16 %v2830, %v2830
    %2835 = vmatprep.subr.bf16.mxu0 %v768
    %2836 = vmatpush1.bf16.msra.mxu0 %v767
    %2837 = vmatprep.subr.bf16.mxu0 %v771
    %2838 = vmatpush1.bf16.msra.mxu0 %v770
    %2839 = vmatprep.subr.bf16.mxu0 %v774
    %2840 = vmatpush1.bf16.msra.mxu0 %v773
    %2841 = vmatprep.subr.bf16.mxu0 %v777
    %2842 = vmatpush1.bf16.msra.mxu0 %v776
    %2843 = vmatprep.subr.bf16.mxu0 %v780
    %2844 = vmatpush1.bf16.msra.mxu0 %v779
    %2845 = vmatprep.subr.bf16.mxu0 %v783
    %2846 = vmatpush1.bf16.msra.mxu0 %v782
    %2847 = vmatprep.subr.bf16.mxu0 %v786
    %2848 = vmatpush1.bf16.msra.mxu0 %v785
    %2849 = vmatprep.subr.bf16.mxu0 %v789
    %2850 = vmatpush1.bf16.msra.mxu0 %v788
    %2851 = vmatprep.subr.bf16.mxu0 0
    %2852 = vmatpush1.bf16.msra.mxu0 0
    %2853 = vmatprep.subr.bf16.mxu0 0
    %2854 = vmatpush1.bf16.msra.mxu0 0
    %2855 = vmatprep.subr.bf16.mxu0 0
    %2856 = vmatpush1.bf16.msra.mxu0 0
    %2857 = vmatprep.subr.bf16.mxu0 0
    %2858 = vmatpush1.bf16.msra.mxu0 0
    %2859 = vmatprep.subr.bf16.mxu0 0
    %2860 = vmatpush1.bf16.msra.mxu0 0
    %2861 = vmatprep.subr.bf16.mxu0 0
    %2862 = vmatpush1.bf16.msra.mxu0 0
    %2863 = vmatprep.subr.bf16.mxu0 0
    %2864 = vmatpush1.bf16.msra.mxu0 0
    %2865 = vmatprep.subr.bf16.mxu0 0
    %2866 = vmatpush1.bf16.msra.mxu0 0
    %2867 = vmatprep.mubr.bf16.mxu0 0
    %2868 = vmatmul.mubr.bf16.gmra.mrb[0].mxu0 %v2834
    %v2869 = vpop.f32.mrb[0].mxu0
    %v2870 = vadd.f32 %v672, %v2869
    %v2871 = vpop.f32.mrb[0].mxu0
    %v2872 = vadd.f32 %v676, %v2871
    %v2873 = vpop.f32.mrb[0].mxu0
    %v2874 = vpop.f32.mrb[0].mxu0
    %2875 = vdwg.mxu0
    %2876 = vmatprep.subr.bf16.mxu0 0
    %2877 = vmatpush1.bf16.msra.mxu0 %v769
    %2878 = vmatprep.subr.bf16.mxu0 0
    %2879 = vmatpush1.bf16.msra.mxu0 %v772
    %2880 = vmatprep.subr.bf16.mxu0 0
    %2881 = vmatpush1.bf16.msra.mxu0 %v775
    %2882 = vmatprep.subr.bf16.mxu0 0
    %2883 = vmatpush1.bf16.msra.mxu0 %v778
    %2884 = vmatprep.subr.bf16.mxu0 0
    %2885 = vmatpush1.bf16.msra.mxu0 %v781
    %2886 = vmatprep.subr.bf16.mxu0 0
    %2887 = vmatpush1.bf16.msra.mxu0 %v784
    %2888 = vmatprep.subr.bf16.mxu0 0
    %2889 = vmatpush1.bf16.msra.mxu0 %v787
    %2890 = vmatprep.subr.bf16.mxu0 0
    %2891 = vmatpush1.bf16.msra.mxu0 %v790
    %2892 = vmatprep.subr.bf16.mxu0 0
    %2893 = vmatpush1.bf16.msra.mxu0 0
    %2894 = vmatprep.subr.bf16.mxu0 0
    %2895 = vmatpush1.bf16.msra.mxu0 0
    %2896 = vmatprep.subr.bf16.mxu0 0
    %2897 = vmatpush1.bf16.msra.mxu0 0
    %2898 = vmatprep.subr.bf16.mxu0 0
    %2899 = vmatpush1.bf16.msra.mxu0 0
    %2900 = vmatprep.subr.bf16.mxu0 0
    %2901 = vmatpush1.bf16.msra.mxu0 0
    %2902 = vmatprep.subr.bf16.mxu0 0
    %2903 = vmatpush1.bf16.msra.mxu0 0
    %2904 = vmatprep.subr.bf16.mxu0 0
    %2905 = vmatpush1.bf16.msra.mxu0 0
    %2906 = vmatprep.subr.bf16.mxu0 0
    %2907 = vmatpush1.bf16.msra.mxu0 0
    %2908 = vmatprep.mubr.bf16.mxu0 0
    %2909 = vmatmul.mubr.bf16.gmra.mrb[0].mxu0 %v2834
    %v2910 = vpop.f32.mrb[0].mxu0
    %v2911 = vadd.f32 %v680, %v2910
    %v2912 = vpop.f32.mrb[0].mxu0
    %v2913 = vpop.f32.mrb[0].mxu0
    %v2914 = vpop.f32.mrb[0].mxu0
    %2915 = vdwg.mxu0
    %v2916 = vadd.f32 %v2831, %v2870
    %v2917 = vmul.f32 %v2916, 0.5
    %v2918 = vtanh.pop %v2917
    %v2919 = vmul.f32 %v2918, 0.5
    %v2920 = vadd.f32 %v2919, 0.5
    %v2921 = vadd.f32 %v2832, %v2872
    %v2922 = vmul.f32 %v2921, 0.5
    %v2923 = vtanh.pop %v2922
    %v2924 = vmul.f32 %v2923, 0.5
    %v2925 = vadd.f32 %v2924, 0.5
    %v2926 = vmul.f32 %v2920, %v2911
    %v2927 = vadd.f32 %v2833, %v2926
    %v2928 = vtanh.pop %v2927
    %v2929 = vsub.f32 %v2830, %v2928
    %v2930 = vmul.f32 %v2925, %v2929
    %v2931 = vadd.f32 %v2928, %v2930
    %v2932 = vld [vmem:[#allocation2 + $0x1f8] sm:$0xff]
    %v2933 = vld [vmem:[#allocation2 + $0x200] sm:$0xff]
    %v2934 = vld [vmem:[#allocation2 + $0x208] sm:$0xff]
    %v2935 = vpack.c.bf16 %v2931, %v2931
    %2936 = vmatprep.subr.bf16.mxu0 %v768
    %2937 = vmatpush1.bf16.msra.mxu0 %v767
    %2938 = vmatprep.subr.bf16.mxu0 %v771
    %2939 = vmatpush1.bf16.msra.mxu0 %v770
    %2940 = vmatprep.subr.bf16.mxu0 %v774
    %2941 = vmatpush1.bf16.msra.mxu0 %v773
    %2942 = vmatprep.subr.bf16.mxu0 %v777
    %2943 = vmatpush1.bf16.msra.mxu0 %v776
    %2944 = vmatprep.subr.bf16.mxu0 %v780
    %2945 = vmatpush1.bf16.msra.mxu0 %v779
    %2946 = vmatprep.subr.bf16.mxu0 %v783
    %2947 = vmatpush1.bf16.msra.mxu0 %v782
    %2948 = vmatprep.subr.bf16.mxu0 %v786
    %2949 = vmatpush1.bf16.msra.mxu0 %v785
    %2950 = vmatprep.subr.bf16.mxu0 %v789
    %2951 = vmatpush1.bf16.msra.mxu0 %v788
    %2952 = vmatprep.subr.bf16.mxu0 0
    %2953 = vmatpush1.bf16.msra.mxu0 0
    %2954 = vmatprep.subr.bf16.mxu0 0
    %2955 = vmatpush1.bf16.msra.mxu0 0
    %2956 = vmatprep.subr.bf16.mxu0 0
    %2957 = vmatpush1.bf16.msra.mxu0 0
    %2958 = vmatprep.subr.bf16.mxu0 0
    %2959 = vmatpush1.bf16.msra.mxu0 0
    %2960 = vmatprep.subr.bf16.mxu0 0
    %2961 = vmatpush1.bf16.msra.mxu0 0
    %2962 = vmatprep.subr.bf16.mxu0 0
    %2963 = vmatpush1.bf16.msra.mxu0 0
    %2964 = vmatprep.subr.bf16.mxu0 0
    %2965 = vmatpush1.bf16.msra.mxu0 0
    %2966 = vmatprep.subr.bf16.mxu0 0
    %2967 = vmatpush1.bf16.msra.mxu0 0
    %2968 = vmatprep.mubr.bf16.mxu0 0
    %2969 = vmatmul.mubr.bf16.gmra.mrb[0].mxu0 %v2935
    %v2970 = vpop.f32.mrb[0].mxu0
    %v2971 = vadd.f32 %v672, %v2970
    %v2972 = vpop.f32.mrb[0].mxu0
    %v2973 = vadd.f32 %v676, %v2972
    %v2974 = vpop.f32.mrb[0].mxu0
    %v2975 = vpop.f32.mrb[0].mxu0
    %2976 = vdwg.mxu0
    %2977 = vmatprep.subr.bf16.mxu0 0
    %2978 = vmatpush1.bf16.msra.mxu0 %v769
    %2979 = vmatprep.subr.bf16.mxu0 0
    %2980 = vmatpush1.bf16.msra.mxu0 %v772
    %2981 = vmatprep.subr.bf16.mxu0 0
    %2982 = vmatpush1.bf16.msra.mxu0 %v775
    %2983 = vmatprep.subr.bf16.mxu0 0
    %2984 = vmatpush1.bf16.msra.mxu0 %v778
    %2985 = vmatprep.subr.bf16.mxu0 0
    %2986 = vmatpush1.bf16.msra.mxu0 %v781
    %2987 = vmatprep.subr.bf16.mxu0 0
    %2988 = vmatpush1.bf16.msra.mxu0 %v784
    %2989 = vmatprep.subr.bf16.mxu0 0
    %2990 = vmatpush1.bf16.msra.mxu0 %v787
    %2991 = vmatprep.subr.bf16.mxu0 0
    %2992 = vmatpush1.bf16.msra.mxu0 %v790
    %2993 = vmatprep.subr.bf16.mxu0 0
    %2994 = vmatpush1.bf16.msra.mxu0 0
    %2995 = vmatprep.subr.bf16.mxu0 0
    %2996 = vmatpush1.bf16.msra.mxu0 0
    %2997 = vmatprep.subr.bf16.mxu0 0
    %2998 = vmatpush1.bf16.msra.mxu0 0
    %2999 = vmatprep.subr.bf16.mxu0 0
    %3000 = vmatpush1.bf16.msra.mxu0 0
    %3001 = vmatprep.subr.bf16.mxu0 0
    %3002 = vmatpush1.bf16.msra.mxu0 0
    %3003 = vmatprep.subr.bf16.mxu0 0
    %3004 = vmatpush1.bf16.msra.mxu0 0
    %3005 = vmatprep.subr.bf16.mxu0 0
    %3006 = vmatpush1.bf16.msra.mxu0 0
    %3007 = vmatprep.subr.bf16.mxu0 0
    %3008 = vmatpush1.bf16.msra.mxu0 0
    %3009 = vmatprep.mubr.bf16.mxu0 0
    %3010 = vmatmul.mubr.bf16.gmra.mrb[0].mxu0 %v2935
    %v3011 = vpop.f32.mrb[0].mxu0
    %v3012 = vadd.f32 %v680, %v3011
    %v3013 = vpop.f32.mrb[0].mxu0
    %v3014 = vpop.f32.mrb[0].mxu0
    %v3015 = vpop.f32.mrb[0].mxu0
    %3016 = vdwg.mxu0
    %v3017 = vadd.f32 %v2932, %v2971
    %v3018 = vmul.f32 %v3017, 0.5
    %v3019 = vtanh.pop %v3018
    %v3020 = vmul.f32 %v3019, 0.5
    %v3021 = vadd.f32 %v3020, 0.5
    %v3022 = vadd.f32 %v2933, %v2973
    %v3023 = vmul.f32 %v3022, 0.5
    %v3024 = vtanh.pop %v3023
    %v3025 = vmul.f32 %v3024, 0.5
    %v3026 = vadd.f32 %v3025, 0.5
    %v3027 = vmul.f32 %v3021, %v3012
    %v3028 = vadd.f32 %v2934, %v3027
    %v3029 = vtanh.pop %v3028
    %v3030 = vsub.f32 %v2931, %v3029
    %v3031 = vmul.f32 %v3026, %v3030
    %v3032 = vadd.f32 %v3029, %v3031
    %v3033 = vld [vmem:[#allocation2 + $0x210] sm:$0xff]
    %v3034 = vld [vmem:[#allocation2 + $0x218] sm:$0xff]
    %v3035 = vld [vmem:[#allocation2 + $0x220] sm:$0xff]
    %v3036 = vpack.c.bf16 %v3032, %v3032
    %3037 = vmatprep.subr.bf16.mxu0 %v768
    %3038 = vmatpush1.bf16.msra.mxu0 %v767
    %3039 = vmatprep.subr.bf16.mxu0 %v771
    %3040 = vmatpush1.bf16.msra.mxu0 %v770
    %3041 = vmatprep.subr.bf16.mxu0 %v774
    %3042 = vmatpush1.bf16.msra.mxu0 %v773
    %3043 = vmatprep.subr.bf16.mxu0 %v777
    %3044 = vmatpush1.bf16.msra.mxu0 %v776
    %3045 = vmatprep.subr.bf16.mxu0 %v780
    %3046 = vmatpush1.bf16.msra.mxu0 %v779
    %3047 = vmatprep.subr.bf16.mxu0 %v783
    %3048 = vmatpush1.bf16.msra.mxu0 %v782
    %3049 = vmatprep.subr.bf16.mxu0 %v786
    %3050 = vmatpush1.bf16.msra.mxu0 %v785
    %3051 = vmatprep.subr.bf16.mxu0 %v789
    %3052 = vmatpush1.bf16.msra.mxu0 %v788
    %3053 = vmatprep.subr.bf16.mxu0 0
    %3054 = vmatpush1.bf16.msra.mxu0 0
    %3055 = vmatprep.subr.bf16.mxu0 0
    %3056 = vmatpush1.bf16.msra.mxu0 0
    %3057 = vmatprep.subr.bf16.mxu0 0
    %3058 = vmatpush1.bf16.msra.mxu0 0
    %3059 = vmatprep.subr.bf16.mxu0 0
    %3060 = vmatpush1.bf16.msra.mxu0 0
    %3061 = vmatprep.subr.bf16.mxu0 0
    %3062 = vmatpush1.bf16.msra.mxu0 0
    %3063 = vmatprep.subr.bf16.mxu0 0
    %3064 = vmatpush1.bf16.msra.mxu0 0
    %3065 = vmatprep.subr.bf16.mxu0 0
    %3066 = vmatpush1.bf16.msra.mxu0 0
    %3067 = vmatprep.subr.bf16.mxu0 0
    %3068 = vmatpush1.bf16.msra.mxu0 0
    %3069 = vmatprep.mubr.bf16.mxu0 0
    %3070 = vmatmul.mubr.bf16.gmra.mrb[0].mxu0 %v3036
    %v3071 = vpop.f32.mrb[0].mxu0
    %v3072 = vadd.f32 %v672, %v3071
    %v3073 = vpop.f32.mrb[0].mxu0
    %v3074 = vadd.f32 %v676, %v3073
    %v3075 = vpop.f32.mrb[0].mxu0
    %v3076 = vpop.f32.mrb[0].mxu0
    %3077 = vdwg.mxu0
    %3078 = vmatprep.subr.bf16.mxu0 0
    %3079 = vmatpush1.bf16.msra.mxu0 %v769
    %3080 = vmatprep.subr.bf16.mxu0 0
    %3081 = vmatpush1.bf16.msra.mxu0 %v772
    %3082 = vmatprep.subr.bf16.mxu0 0
    %3083 = vmatpush1.bf16.msra.mxu0 %v775
    %3084 = vmatprep.subr.bf16.mxu0 0
    %3085 = vmatpush1.bf16.msra.mxu0 %v778
    %3086 = vmatprep.subr.bf16.mxu0 0
    %3087 = vmatpush1.bf16.msra.mxu0 %v781
    %3088 = vmatprep.subr.bf16.mxu0 0
    %3089 = vmatpush1.bf16.msra.mxu0 %v784
    %3090 = vmatprep.subr.bf16.mxu0 0
    %3091 = vmatpush1.bf16.msra.mxu0 %v787
    %3092 = vmatprep.subr.bf16.mxu0 0
    %3093 = vmatpush1.bf16.msra.mxu0 %v790
    %3094 = vmatprep.subr.bf16.mxu0 0
    %3095 = vmatpush1.bf16.msra.mxu0 0
    %3096 = vmatprep.subr.bf16.mxu0 0
    %3097 = vmatpush1.bf16.msra.mxu0 0
    %3098 = vmatprep.subr.bf16.mxu0 0
    %3099 = vmatpush1.bf16.msra.mxu0 0
    %3100 = vmatprep.subr.bf16.mxu0 0
    %3101 = vmatpush1.bf16.msra.mxu0 0
    %3102 = vmatprep.subr.bf16.mxu0 0
    %3103 = vmatpush1.bf16.msra.mxu0 0
    %3104 = vmatprep.subr.bf16.mxu0 0
    %3105 = vmatpush1.bf16.msra.mxu0 0
    %3106 = vmatprep.subr.bf16.mxu0 0
    %3107 = vmatpush1.bf16.msra.mxu0 0
    %3108 = vmatprep.subr.bf16.mxu0 0
    %3109 = vmatpush1.bf16.msra.mxu0 0
    %3110 = vmatprep.mubr.bf16.mxu0 0
    %3111 = vmatmul.mubr.bf16.gmra.mrb[0].mxu0 %v3036
    %v3112 = vpop.f32.mrb[0].mxu0
    %v3113 = vadd.f32 %v680, %v3112
    %v3114 = vpop.f32.mrb[0].mxu0
    %v3115 = vpop.f32.mrb[0].mxu0
    %v3116 = vpop.f32.mrb[0].mxu0
    %3117 = vdwg.mxu0
    %v3118 = vadd.f32 %v3033, %v3072
    %v3119 = vmul.f32 %v3118, 0.5
    %v3120 = vtanh.pop %v3119
    %v3121 = vmul.f32 %v3120, 0.5
    %v3122 = vadd.f32 %v3121, 0.5
    %v3123 = vadd.f32 %v3034, %v3074
    %v3124 = vmul.f32 %v3123, 0.5
    %v3125 = vtanh.pop %v3124
    %v3126 = vmul.f32 %v3125, 0.5
    %v3127 = vadd.f32 %v3126, 0.5
    %v3128 = vmul.f32 %v3122, %v3113
    %v3129 = vadd.f32 %v3035, %v3128
    %v3130 = vtanh.pop %v3129
    %v3131 = vsub.f32 %v3032, %v3130
    %v3132 = vmul.f32 %v3127, %v3131
    %v3133 = vadd.f32 %v3130, %v3132
    %v3134 = vld [vmem:[#allocation2 + $0x228] sm:$0xff]
    %v3135 = vld [vmem:[#allocation2 + $0x230] sm:$0xff]
    %v3136 = vld [vmem:[#allocation2 + $0x238] sm:$0xff]
    %v3137 = vpack.c.bf16 %v3133, %v3133
    %3138 = vmatprep.subr.bf16.mxu0 %v768
    %3139 = vmatpush1.bf16.msra.mxu0 %v767
    %3140 = vmatprep.subr.bf16.mxu0 %v771
    %3141 = vmatpush1.bf16.msra.mxu0 %v770
    %3142 = vmatprep.subr.bf16.mxu0 %v774
    %3143 = vmatpush1.bf16.msra.mxu0 %v773
    %3144 = vmatprep.subr.bf16.mxu0 %v777
    %3145 = vmatpush1.bf16.msra.mxu0 %v776
    %3146 = vmatprep.subr.bf16.mxu0 %v780
    %3147 = vmatpush1.bf16.msra.mxu0 %v779
    %3148 = vmatprep.subr.bf16.mxu0 %v783
    %3149 = vmatpush1.bf16.msra.mxu0 %v782
    %3150 = vmatprep.subr.bf16.mxu0 %v786
    %3151 = vmatpush1.bf16.msra.mxu0 %v785
    %3152 = vmatprep.subr.bf16.mxu0 %v789
    %3153 = vmatpush1.bf16.msra.mxu0 %v788
    %3154 = vmatprep.subr.bf16.mxu0 0
    %3155 = vmatpush1.bf16.msra.mxu0 0
    %3156 = vmatprep.subr.bf16.mxu0 0
    %3157 = vmatpush1.bf16.msra.mxu0 0
    %3158 = vmatprep.subr.bf16.mxu0 0
    %3159 = vmatpush1.bf16.msra.mxu0 0
    %3160 = vmatprep.subr.bf16.mxu0 0
    %3161 = vmatpush1.bf16.msra.mxu0 0
    %3162 = vmatprep.subr.bf16.mxu0 0
    %3163 = vmatpush1.bf16.msra.mxu0 0
    %3164 = vmatprep.subr.bf16.mxu0 0
    %3165 = vmatpush1.bf16.msra.mxu0 0
    %3166 = vmatprep.subr.bf16.mxu0 0
    %3167 = vmatpush1.bf16.msra.mxu0 0
    %3168 = vmatprep.subr.bf16.mxu0 0
    %3169 = vmatpush1.bf16.msra.mxu0 0
    %3170 = vmatprep.mubr.bf16.mxu0 0
    %3171 = vmatmul.mubr.bf16.gmra.mrb[0].mxu0 %v3137
    %v3172 = vpop.f32.mrb[0].mxu0
    %v3173 = vadd.f32 %v672, %v3172
    %v3174 = vpop.f32.mrb[0].mxu0
    %v3175 = vadd.f32 %v676, %v3174
    %v3176 = vpop.f32.mrb[0].mxu0
    %v3177 = vpop.f32.mrb[0].mxu0
    %3178 = vdwg.mxu0
    %3179 = vmatprep.subr.bf16.mxu0 0
    %3180 = vmatpush1.bf16.msra.mxu0 %v769
    %3181 = vmatprep.subr.bf16.mxu0 0
    %3182 = vmatpush1.bf16.msra.mxu0 %v772
    %3183 = vmatprep.subr.bf16.mxu0 0
    %3184 = vmatpush1.bf16.msra.mxu0 %v775
    %3185 = vmatprep.subr.bf16.mxu0 0
    %3186 = vmatpush1.bf16.msra.mxu0 %v778
    %3187 = vmatprep.subr.bf16.mxu0 0
    %3188 = vmatpush1.bf16.msra.mxu0 %v781
    %3189 = vmatprep.subr.bf16.mxu0 0
    %3190 = vmatpush1.bf16.msra.mxu0 %v784
    %3191 = vmatprep.subr.bf16.mxu0 0
    %3192 = vmatpush1.bf16.msra.mxu0 %v787
    %3193 = vmatprep.subr.bf16.mxu0 0
    %3194 = vmatpush1.bf16.msra.mxu0 %v790
    %3195 = vmatprep.subr.bf16.mxu0 0
    %3196 = vmatpush1.bf16.msra.mxu0 0
    %3197 = vmatprep.subr.bf16.mxu0 0
    %3198 = vmatpush1.bf16.msra.mxu0 0
    %3199 = vmatprep.subr.bf16.mxu0 0
    %3200 = vmatpush1.bf16.msra.mxu0 0
    %3201 = vmatprep.subr.bf16.mxu0 0
    %3202 = vmatpush1.bf16.msra.mxu0 0
    %3203 = vmatprep.subr.bf16.mxu0 0
    %3204 = vmatpush1.bf16.msra.mxu0 0
    %3205 = vmatprep.subr.bf16.mxu0 0
    %3206 = vmatpush1.bf16.msra.mxu0 0
    %3207 = vmatprep.subr.bf16.mxu0 0
    %3208 = vmatpush1.bf16.msra.mxu0 0
    %3209 = vmatprep.subr.bf16.mxu0 0
    %3210 = vmatpush1.bf16.msra.mxu0 0
    %3211 = vmatprep.mubr.bf16.mxu0 0
    %3212 = vmatmul.mubr.bf16.gmra.mrb[0].mxu0 %v3137
    %v3213 = vpop.f32.mrb[0].mxu0
    %v3214 = vadd.f32 %v680, %v3213
    %v3215 = vpop.f32.mrb[0].mxu0
    %v3216 = vpop.f32.mrb[0].mxu0
    %v3217 = vpop.f32.mrb[0].mxu0
    %3218 = vdwg.mxu0
    %v3219 = vadd.f32 %v3134, %v3173
    %v3220 = vmul.f32 %v3219, 0.5
    %v3221 = vtanh.pop %v3220
    %v3222 = vmul.f32 %v3221, 0.5
    %v3223 = vadd.f32 %v3222, 0.5
    %v3224 = vadd.f32 %v3135, %v3175
    %v3225 = vmul.f32 %v3224, 0.5
    %v3226 = vtanh.pop %v3225
    %v3227 = vmul.f32 %v3226, 0.5
    %v3228 = vadd.f32 %v3227, 0.5
    %v3229 = vmul.f32 %v3223, %v3214
    %v3230 = vadd.f32 %v3136, %v3229
    %v3231 = vtanh.pop %v3230
    %v3232 = vsub.f32 %v3133, %v3231
    %v3233 = vmul.f32 %v3228, %v3232
    %v3234 = vadd.f32 %v3231, %v3233
    %v3235 = vld [vmem:[#allocation2 + $0x240] sm:$0xff]
    %v3236 = vld [vmem:[#allocation2 + $0x248] sm:$0xff]
    %v3237 = vld [vmem:[#allocation2 + $0x250] sm:$0xff]
    %v3238 = vpack.c.bf16 %v3234, %v3234
    %3239 = vmatprep.subr.bf16.mxu0 %v768
    %3240 = vmatpush1.bf16.msra.mxu0 %v767
    %3241 = vmatprep.subr.bf16.mxu0 %v771
    %3242 = vmatpush1.bf16.msra.mxu0 %v770
    %3243 = vmatprep.subr.bf16.mxu0 %v774
    %3244 = vmatpush1.bf16.msra.mxu0 %v773
    %3245 = vmatprep.subr.bf16.mxu0 %v777
    %3246 = vmatpush1.bf16.msra.mxu0 %v776
    %3247 = vmatprep.subr.bf16.mxu0 %v780
    %3248 = vmatpush1.bf16.msra.mxu0 %v779
    %3249 = vmatprep.subr.bf16.mxu0 %v783
    %3250 = vmatpush1.bf16.msra.mxu0 %v782
    %3251 = vmatprep.subr.bf16.mxu0 %v786
    %3252 = vmatpush1.bf16.msra.mxu0 %v785
    %3253 = vmatprep.subr.bf16.mxu0 %v789
    %3254 = vmatpush1.bf16.msra.mxu0 %v788
    %3255 = vmatprep.subr.bf16.mxu0 0
    %3256 = vmatpush1.bf16.msra.mxu0 0
    %3257 = vmatprep.subr.bf16.mxu0 0
    %3258 = vmatpush1.bf16.msra.mxu0 0
    %3259 = vmatprep.subr.bf16.mxu0 0
    %3260 = vmatpush1.bf16.msra.mxu0 0
    %3261 = vmatprep.subr.bf16.mxu0 0
    %3262 = vmatpush1.bf16.msra.mxu0 0
    %3263 = vmatprep.subr.bf16.mxu0 0
    %3264 = vmatpush1.bf16.msra.mxu0 0
    %3265 = vmatprep.subr.bf16.mxu0 0
    %3266 = vmatpush1.bf16.msra.mxu0 0
    %3267 = vmatprep.subr.bf16.mxu0 0
    %3268 = vmatpush1.bf16.msra.mxu0 0
    %3269 = vmatprep.subr.bf16.mxu0 0
    %3270 = vmatpush1.bf16.msra.mxu0 0
    %3271 = vmatprep.mubr.bf16.mxu0 0
    %3272 = vmatmul.mubr.bf16.gmra.mrb[0].mxu0 %v3238
    %v3273 = vpop.f32.mrb[0].mxu0
    %v3274 = vadd.f32 %v672, %v3273
    %v3275 = vpop.f32.mrb[0].mxu0
    %v3276 = vadd.f32 %v676, %v3275
    %v3277 = vpop.f32.mrb[0].mxu0
    %v3278 = vpop.f32.mrb[0].mxu0
    %3279 = vdwg.mxu0
    %3280 = vmatprep.subr.bf16.mxu0 0
    %3281 = vmatpush1.bf16.msra.mxu0 %v769
    %3282 = vmatprep.subr.bf16.mxu0 0
    %3283 = vmatpush1.bf16.msra.mxu0 %v772
    %3284 = vmatprep.subr.bf16.mxu0 0
    %3285 = vmatpush1.bf16.msra.mxu0 %v775
    %3286 = vmatprep.subr.bf16.mxu0 0
    %3287 = vmatpush1.bf16.msra.mxu0 %v778
    %3288 = vmatprep.subr.bf16.mxu0 0
    %3289 = vmatpush1.bf16.msra.mxu0 %v781
    %3290 = vmatprep.subr.bf16.mxu0 0
    %3291 = vmatpush1.bf16.msra.mxu0 %v784
    %3292 = vmatprep.subr.bf16.mxu0 0
    %3293 = vmatpush1.bf16.msra.mxu0 %v787
    %3294 = vmatprep.subr.bf16.mxu0 0
    %3295 = vmatpush1.bf16.msra.mxu0 %v790
    %3296 = vmatprep.subr.bf16.mxu0 0
    %3297 = vmatpush1.bf16.msra.mxu0 0
    %3298 = vmatprep.subr.bf16.mxu0 0
    %3299 = vmatpush1.bf16.msra.mxu0 0
    %3300 = vmatprep.subr.bf16.mxu0 0
    %3301 = vmatpush1.bf16.msra.mxu0 0
    %3302 = vmatprep.subr.bf16.mxu0 0
    %3303 = vmatpush1.bf16.msra.mxu0 0
    %3304 = vmatprep.subr.bf16.mxu0 0
    %3305 = vmatpush1.bf16.msra.mxu0 0
    %3306 = vmatprep.subr.bf16.mxu0 0
    %3307 = vmatpush1.bf16.msra.mxu0 0
    %3308 = vmatprep.subr.bf16.mxu0 0
    %3309 = vmatpush1.bf16.msra.mxu0 0
    %3310 = vmatprep.subr.bf16.mxu0 0
    %3311 = vmatpush1.bf16.msra.mxu0 0
    %3312 = vmatprep.mubr.bf16.mxu0 0
    %3313 = vmatmul.mubr.bf16.gmra.mrb[0].mxu0 %v3238
    %v3314 = vpop.f32.mrb[0].mxu0
    %v3315 = vadd.f32 %v680, %v3314
    %v3316 = vpop.f32.mrb[0].mxu0
    %v3317 = vpop.f32.mrb[0].mxu0
    %v3318 = vpop.f32.mrb[0].mxu0
    %3319 = vdwg.mxu0
    %v3320 = vadd.f32 %v3235, %v3274
    %v3321 = vmul.f32 %v3320, 0.5
    %v3322 = vtanh.pop %v3321
    %v3323 = vmul.f32 %v3322, 0.5
    %v3324 = vadd.f32 %v3323, 0.5
    %v3325 = vadd.f32 %v3236, %v3276
    %v3326 = vmul.f32 %v3325, 0.5
    %v3327 = vtanh.pop %v3326
    %v3328 = vmul.f32 %v3327, 0.5
    %v3329 = vadd.f32 %v3328, 0.5
    %v3330 = vmul.f32 %v3324, %v3315
    %v3331 = vadd.f32 %v3237, %v3330
    %v3332 = vtanh.pop %v3331
    %v3333 = vsub.f32 %v3234, %v3332
    %v3334 = vmul.f32 %v3329, %v3333
    %v3335 = vadd.f32 %v3332, %v3334
    %v3336 = vld [vmem:[#allocation2 + $0x258] sm:$0xff]
    %v3337 = vld [vmem:[#allocation2 + $0x260] sm:$0xff]
    %v3338 = vld [vmem:[#allocation2 + $0x268] sm:$0xff]
    %v3339 = vpack.c.bf16 %v3335, %v3335
    %3340 = vmatprep.subr.bf16.mxu0 %v768
    %3341 = vmatpush1.bf16.msra.mxu0 %v767
    %3342 = vmatprep.subr.bf16.mxu0 %v771
    %3343 = vmatpush1.bf16.msra.mxu0 %v770
    %3344 = vmatprep.subr.bf16.mxu0 %v774
    %3345 = vmatpush1.bf16.msra.mxu0 %v773
    %3346 = vmatprep.subr.bf16.mxu0 %v777
    %3347 = vmatpush1.bf16.msra.mxu0 %v776
    %3348 = vmatprep.subr.bf16.mxu0 %v780
    %3349 = vmatpush1.bf16.msra.mxu0 %v779
    %3350 = vmatprep.subr.bf16.mxu0 %v783
    %3351 = vmatpush1.bf16.msra.mxu0 %v782
    %3352 = vmatprep.subr.bf16.mxu0 %v786
    %3353 = vmatpush1.bf16.msra.mxu0 %v785
    %3354 = vmatprep.subr.bf16.mxu0 %v789
    %3355 = vmatpush1.bf16.msra.mxu0 %v788
    %3356 = vmatprep.subr.bf16.mxu0 0
    %3357 = vmatpush1.bf16.msra.mxu0 0
    %3358 = vmatprep.subr.bf16.mxu0 0
    %3359 = vmatpush1.bf16.msra.mxu0 0
    %3360 = vmatprep.subr.bf16.mxu0 0
    %3361 = vmatpush1.bf16.msra.mxu0 0
    %3362 = vmatprep.subr.bf16.mxu0 0
    %3363 = vmatpush1.bf16.msra.mxu0 0
    %3364 = vmatprep.subr.bf16.mxu0 0
    %3365 = vmatpush1.bf16.msra.mxu0 0
    %3366 = vmatprep.subr.bf16.mxu0 0
    %3367 = vmatpush1.bf16.msra.mxu0 0
    %3368 = vmatprep.subr.bf16.mxu0 0
    %3369 = vmatpush1.bf16.msra.mxu0 0
    %3370 = vmatprep.subr.bf16.mxu0 0
    %3371 = vmatpush1.bf16.msra.mxu0 0
    %3372 = vmatprep.mubr.bf16.mxu0 0
    %3373 = vmatmul.mubr.bf16.gmra.mrb[0].mxu0 %v3339
    %v3374 = vpop.f32.mrb[0].mxu0
    %v3375 = vadd.f32 %v672, %v3374
    %v3376 = vpop.f32.mrb[0].mxu0
    %v3377 = vadd.f32 %v676, %v3376
    %v3378 = vpop.f32.mrb[0].mxu0
    %v3379 = vpop.f32.mrb[0].mxu0
    %3380 = vdwg.mxu0
    %3381 = vmatprep.subr.bf16.mxu0 0
    %3382 = vmatpush1.bf16.msra.mxu0 %v769
    %3383 = vmatprep.subr.bf16.mxu0 0
    %3384 = vmatpush1.bf16.msra.mxu0 %v772
    %3385 = vmatprep.subr.bf16.mxu0 0
    %3386 = vmatpush1.bf16.msra.mxu0 %v775
    %3387 = vmatprep.subr.bf16.mxu0 0
    %3388 = vmatpush1.bf16.msra.mxu0 %v778
    %3389 = vmatprep.subr.bf16.mxu0 0
    %3390 = vmatpush1.bf16.msra.mxu0 %v781
    %3391 = vmatprep.subr.bf16.mxu0 0
    %3392 = vmatpush1.bf16.msra.mxu0 %v784
    %3393 = vmatprep.subr.bf16.mxu0 0
    %3394 = vmatpush1.bf16.msra.mxu0 %v787
    %3395 = vmatprep.subr.bf16.mxu0 0
    %3396 = vmatpush1.bf16.msra.mxu0 %v790
    %3397 = vmatprep.subr.bf16.mxu0 0
    %3398 = vmatpush1.bf16.msra.mxu0 0
    %3399 = vmatprep.subr.bf16.mxu0 0
    %3400 = vmatpush1.bf16.msra.mxu0 0
    %3401 = vmatprep.subr.bf16.mxu0 0
    %3402 = vmatpush1.bf16.msra.mxu0 0
    %3403 = vmatprep.subr.bf16.mxu0 0
    %3404 = vmatpush1.bf16.msra.mxu0 0
    %3405 = vmatprep.subr.bf16.mxu0 0
    %3406 = vmatpush1.bf16.msra.mxu0 0
    %3407 = vmatprep.subr.bf16.mxu0 0
    %3408 = vmatpush1.bf16.msra.mxu0 0
    %3409 = vmatprep.subr.bf16.mxu0 0
    %3410 = vmatpush1.bf16.msra.mxu0 0
    %3411 = vmatprep.subr.bf16.mxu0 0
    %3412 = vmatpush1.bf16.msra.mxu0 0
    %3413 = vmatprep.mubr.bf16.mxu0 0
    %3414 = vmatmul.mubr.bf16.gmra.mrb[0].mxu0 %v3339
    %v3415 = vpop.f32.mrb[0].mxu0
    %v3416 = vadd.f32 %v680, %v3415
    %v3417 = vpop.f32.mrb[0].mxu0
    %v3418 = vpop.f32.mrb[0].mxu0
    %v3419 = vpop.f32.mrb[0].mxu0
    %3420 = vdwg.mxu0
    %v3421 = vadd.f32 %v3336, %v3375
    %v3422 = vmul.f32 %v3421, 0.5
    %v3423 = vtanh.pop %v3422
    %v3424 = vmul.f32 %v3423, 0.5
    %v3425 = vadd.f32 %v3424, 0.5
    %v3426 = vadd.f32 %v3337, %v3377
    %v3427 = vmul.f32 %v3426, 0.5
    %v3428 = vtanh.pop %v3427
    %v3429 = vmul.f32 %v3428, 0.5
    %v3430 = vadd.f32 %v3429, 0.5
    %v3431 = vmul.f32 %v3425, %v3416
    %v3432 = vadd.f32 %v3338, %v3431
    %v3433 = vtanh.pop %v3432
    %v3434 = vsub.f32 %v3335, %v3433
    %v3435 = vmul.f32 %v3430, %v3434
    %v3436 = vadd.f32 %v3433, %v3435
    %v3437 = vld [vmem:[#allocation2 + $0x270] sm:$0xff]
    %v3438 = vld [vmem:[#allocation2 + $0x278] sm:$0xff]
    %v3439 = vld [vmem:[#allocation2 + $0x280] sm:$0xff]
    %v3440 = vpack.c.bf16 %v3436, %v3436
    %3441 = vmatprep.subr.bf16.mxu0 %v768
    %3442 = vmatpush1.bf16.msra.mxu0 %v767
    %3443 = vmatprep.subr.bf16.mxu0 %v771
    %3444 = vmatpush1.bf16.msra.mxu0 %v770
    %3445 = vmatprep.subr.bf16.mxu0 %v774
    %3446 = vmatpush1.bf16.msra.mxu0 %v773
    %3447 = vmatprep.subr.bf16.mxu0 %v777
    %3448 = vmatpush1.bf16.msra.mxu0 %v776
    %3449 = vmatprep.subr.bf16.mxu0 %v780
    %3450 = vmatpush1.bf16.msra.mxu0 %v779
    %3451 = vmatprep.subr.bf16.mxu0 %v783
    %3452 = vmatpush1.bf16.msra.mxu0 %v782
    %3453 = vmatprep.subr.bf16.mxu0 %v786
    %3454 = vmatpush1.bf16.msra.mxu0 %v785
    %3455 = vmatprep.subr.bf16.mxu0 %v789
    %3456 = vmatpush1.bf16.msra.mxu0 %v788
    %3457 = vmatprep.subr.bf16.mxu0 0
    %3458 = vmatpush1.bf16.msra.mxu0 0
    %3459 = vmatprep.subr.bf16.mxu0 0
    %3460 = vmatpush1.bf16.msra.mxu0 0
    %3461 = vmatprep.subr.bf16.mxu0 0
    %3462 = vmatpush1.bf16.msra.mxu0 0
    %3463 = vmatprep.subr.bf16.mxu0 0
    %3464 = vmatpush1.bf16.msra.mxu0 0
    %3465 = vmatprep.subr.bf16.mxu0 0
    %3466 = vmatpush1.bf16.msra.mxu0 0
    %3467 = vmatprep.subr.bf16.mxu0 0
    %3468 = vmatpush1.bf16.msra.mxu0 0
    %3469 = vmatprep.subr.bf16.mxu0 0
    %3470 = vmatpush1.bf16.msra.mxu0 0
    %3471 = vmatprep.subr.bf16.mxu0 0
    %3472 = vmatpush1.bf16.msra.mxu0 0
    %3473 = vmatprep.mubr.bf16.mxu0 0
    %3474 = vmatmul.mubr.bf16.gmra.mrb[0].mxu0 %v3440
    %v3475 = vpop.f32.mrb[0].mxu0
    %v3476 = vadd.f32 %v672, %v3475
    %v3477 = vpop.f32.mrb[0].mxu0
    %v3478 = vadd.f32 %v676, %v3477
    %v3479 = vpop.f32.mrb[0].mxu0
    %v3480 = vpop.f32.mrb[0].mxu0
    %3481 = vdwg.mxu0
    %3482 = vmatprep.subr.bf16.mxu0 0
    %3483 = vmatpush1.bf16.msra.mxu0 %v769
    %3484 = vmatprep.subr.bf16.mxu0 0
    %3485 = vmatpush1.bf16.msra.mxu0 %v772
    %3486 = vmatprep.subr.bf16.mxu0 0
    %3487 = vmatpush1.bf16.msra.mxu0 %v775
    %3488 = vmatprep.subr.bf16.mxu0 0
    %3489 = vmatpush1.bf16.msra.mxu0 %v778
    %3490 = vmatprep.subr.bf16.mxu0 0
    %3491 = vmatpush1.bf16.msra.mxu0 %v781
    %3492 = vmatprep.subr.bf16.mxu0 0
    %3493 = vmatpush1.bf16.msra.mxu0 %v784
    %3494 = vmatprep.subr.bf16.mxu0 0
    %3495 = vmatpush1.bf16.msra.mxu0 %v787
    %3496 = vmatprep.subr.bf16.mxu0 0
    %3497 = vmatpush1.bf16.msra.mxu0 %v790
    %3498 = vmatprep.subr.bf16.mxu0 0
    %3499 = vmatpush1.bf16.msra.mxu0 0
    %3500 = vmatprep.subr.bf16.mxu0 0
    %3501 = vmatpush1.bf16.msra.mxu0 0
    %3502 = vmatprep.subr.bf16.mxu0 0
    %3503 = vmatpush1.bf16.msra.mxu0 0
    %3504 = vmatprep.subr.bf16.mxu0 0
    %3505 = vmatpush1.bf16.msra.mxu0 0
    %3506 = vmatprep.subr.bf16.mxu0 0
    %3507 = vmatpush1.bf16.msra.mxu0 0
    %3508 = vmatprep.subr.bf16.mxu0 0
    %3509 = vmatpush1.bf16.msra.mxu0 0
    %3510 = vmatprep.subr.bf16.mxu0 0
    %3511 = vmatpush1.bf16.msra.mxu0 0
    %3512 = vmatprep.subr.bf16.mxu0 0
    %3513 = vmatpush1.bf16.msra.mxu0 0
    %3514 = vmatprep.mubr.bf16.mxu0 0
    %3515 = vmatmul.mubr.bf16.gmra.mrb[0].mxu0 %v3440
    %v3516 = vpop.f32.mrb[0].mxu0
    %v3517 = vadd.f32 %v680, %v3516
    %v3518 = vpop.f32.mrb[0].mxu0
    %v3519 = vpop.f32.mrb[0].mxu0
    %v3520 = vpop.f32.mrb[0].mxu0
    %3521 = vdwg.mxu0
    %v3522 = vadd.f32 %v3437, %v3476
    %v3523 = vmul.f32 %v3522, 0.5
    %v3524 = vtanh.pop %v3523
    %v3525 = vmul.f32 %v3524, 0.5
    %v3526 = vadd.f32 %v3525, 0.5
    %v3527 = vadd.f32 %v3438, %v3478
    %v3528 = vmul.f32 %v3527, 0.5
    %v3529 = vtanh.pop %v3528
    %v3530 = vmul.f32 %v3529, 0.5
    %v3531 = vadd.f32 %v3530, 0.5
    %v3532 = vmul.f32 %v3526, %v3517
    %v3533 = vadd.f32 %v3439, %v3532
    %v3534 = vtanh.pop %v3533
    %v3535 = vsub.f32 %v3436, %v3534
    %v3536 = vmul.f32 %v3531, %v3535
    %v3537 = vadd.f32 %v3534, %v3536
    %v3538 = vld [vmem:[#allocation2 + $0x288] sm:$0xff]
    %v3539 = vld [vmem:[#allocation2 + $0x290] sm:$0xff]
    %v3540 = vld [vmem:[#allocation2 + $0x298] sm:$0xff]
    %v3541 = vpack.c.bf16 %v3537, %v3537
    %3542 = vmatprep.subr.bf16.mxu0 %v768
    %3543 = vmatpush1.bf16.msra.mxu0 %v767
    %3544 = vmatprep.subr.bf16.mxu0 %v771
    %3545 = vmatpush1.bf16.msra.mxu0 %v770
    %3546 = vmatprep.subr.bf16.mxu0 %v774
    %3547 = vmatpush1.bf16.msra.mxu0 %v773
    %3548 = vmatprep.subr.bf16.mxu0 %v777
    %3549 = vmatpush1.bf16.msra.mxu0 %v776
    %3550 = vmatprep.subr.bf16.mxu0 %v780
    %3551 = vmatpush1.bf16.msra.mxu0 %v779
    %3552 = vmatprep.subr.bf16.mxu0 %v783
    %3553 = vmatpush1.bf16.msra.mxu0 %v782
    %3554 = vmatprep.subr.bf16.mxu0 %v786
    %3555 = vmatpush1.bf16.msra.mxu0 %v785
    %3556 = vmatprep.subr.bf16.mxu0 %v789
    %3557 = vmatpush1.bf16.msra.mxu0 %v788
    %3558 = vmatprep.subr.bf16.mxu0 0
    %3559 = vmatpush1.bf16.msra.mxu0 0
    %3560 = vmatprep.subr.bf16.mxu0 0
    %3561 = vmatpush1.bf16.msra.mxu0 0
    %3562 = vmatprep.subr.bf16.mxu0 0
    %3563 = vmatpush1.bf16.msra.mxu0 0
    %3564 = vmatprep.subr.bf16.mxu0 0
    %3565 = vmatpush1.bf16.msra.mxu0 0
    %3566 = vmatprep.subr.bf16.mxu0 0
    %3567 = vmatpush1.bf16.msra.mxu0 0
    %3568 = vmatprep.subr.bf16.mxu0 0
    %3569 = vmatpush1.bf16.msra.mxu0 0
    %3570 = vmatprep.subr.bf16.mxu0 0
    %3571 = vmatpush1.bf16.msra.mxu0 0
    %3572 = vmatprep.subr.bf16.mxu0 0
    %3573 = vmatpush1.bf16.msra.mxu0 0
    %3574 = vmatprep.mubr.bf16.mxu0 0
    %3575 = vmatmul.mubr.bf16.gmra.mrb[0].mxu0 %v3541
    %v3576 = vpop.f32.mrb[0].mxu0
    %v3577 = vadd.f32 %v672, %v3576
    %v3578 = vpop.f32.mrb[0].mxu0
    %v3579 = vadd.f32 %v676, %v3578
    %v3580 = vpop.f32.mrb[0].mxu0
    %v3581 = vpop.f32.mrb[0].mxu0
    %3582 = vdwg.mxu0
    %3583 = vmatprep.subr.bf16.mxu0 0
    %3584 = vmatpush1.bf16.msra.mxu0 %v769
    %3585 = vmatprep.subr.bf16.mxu0 0
    %3586 = vmatpush1.bf16.msra.mxu0 %v772
    %3587 = vmatprep.subr.bf16.mxu0 0
    %3588 = vmatpush1.bf16.msra.mxu0 %v775
    %3589 = vmatprep.subr.bf16.mxu0 0
    %3590 = vmatpush1.bf16.msra.mxu0 %v778
    %3591 = vmatprep.subr.bf16.mxu0 0
    %3592 = vmatpush1.bf16.msra.mxu0 %v781
    %3593 = vmatprep.subr.bf16.mxu0 0
    %3594 = vmatpush1.bf16.msra.mxu0 %v784
    %3595 = vmatprep.subr.bf16.mxu0 0
    %3596 = vmatpush1.bf16.msra.mxu0 %v787
    %3597 = vmatprep.subr.bf16.mxu0 0
    %3598 = vmatpush1.bf16.msra.mxu0 %v790
    %3599 = vmatprep.subr.bf16.mxu0 0
    %3600 = vmatpush1.bf16.msra.mxu0 0
    %3601 = vmatprep.subr.bf16.mxu0 0
    %3602 = vmatpush1.bf16.msra.mxu0 0
    %3603 = vmatprep.subr.bf16.mxu0 0
    %3604 = vmatpush1.bf16.msra.mxu0 0
    %3605 = vmatprep.subr.bf16.mxu0 0
    %3606 = vmatpush1.bf16.msra.mxu0 0
    %3607 = vmatprep.subr.bf16.mxu0 0
    %3608 = vmatpush1.bf16.msra.mxu0 0
    %3609 = vmatprep.subr.bf16.mxu0 0
    %3610 = vmatpush1.bf16.msra.mxu0 0
    %3611 = vmatprep.subr.bf16.mxu0 0
    %3612 = vmatpush1.bf16.msra.mxu0 0
    %3613 = vmatprep.subr.bf16.mxu0 0
    %3614 = vmatpush1.bf16.msra.mxu0 0
    %3615 = vmatprep.mubr.bf16.mxu0 0
    %3616 = vmatmul.mubr.bf16.gmra.mrb[0].mxu0 %v3541
    %v3617 = vpop.f32.mrb[0].mxu0
    %v3618 = vadd.f32 %v680, %v3617
    %v3619 = vpop.f32.mrb[0].mxu0
    %v3620 = vpop.f32.mrb[0].mxu0
    %v3621 = vpop.f32.mrb[0].mxu0
    %3622 = vdwg.mxu0
    %v3623 = vadd.f32 %v3538, %v3577
    %v3624 = vmul.f32 %v3623, 0.5
    %v3625 = vtanh.pop %v3624
    %v3626 = vmul.f32 %v3625, 0.5
    %v3627 = vadd.f32 %v3626, 0.5
    %v3628 = vadd.f32 %v3539, %v3579
    %v3629 = vmul.f32 %v3628, 0.5
    %v3630 = vtanh.pop %v3629
    %v3631 = vmul.f32 %v3630, 0.5
    %v3632 = vadd.f32 %v3631, 0.5
    %v3633 = vmul.f32 %v3627, %v3618
    %v3634 = vadd.f32 %v3540, %v3633
    %v3635 = vtanh.pop %v3634
    %v3636 = vsub.f32 %v3537, %v3635
    %v3637 = vmul.f32 %v3632, %v3636
    %v3638 = vadd.f32 %v3635, %v3637
    %v3639 = vpack.c.bf16 %v3638, %v3638
    %v3640 = vld [vmem:[%s5] sm:$0xf]
    %v3641 = vld [vmem:[%s5 + $0x4] sm:$0xf]
    %v3642 = vld [vmem:[%s5 + $0x8] sm:$0xf]
    %v3643 = vld [vmem:[%s5 + $0xc] sm:$0xf]
    %v3644 = vld [vmem:[%s5 + $0x10] sm:$0xf]
    %v3645 = vld [vmem:[%s5 + $0x14] sm:$0xf]
    %v3646 = vld [vmem:[%s5 + $0x18] sm:$0xf]
    %v3647 = vld [vmem:[%s5 + $0x1c] sm:$0xf]
    %v3648 = vld [vmem:[%s5 + $0x20] sm:$0xf]
    %v3649 = vld [vmem:[%s5 + $0x24] sm:$0xf]
    %v3650 = vld [vmem:[%s5 + $0x28] sm:$0xf]
    %v3651 = vld [vmem:[%s5 + $0x2c] sm:$0xf]
    %v3652 = vld [vmem:[%s5 + $0x30] sm:$0xf]
    %v3653 = vld [vmem:[%s5 + $0x34] sm:$0xf]
    %v3654 = vld [vmem:[%s5 + $0x38] sm:$0xf]
    %v3655 = vld [vmem:[%s5 + $0x3c] sm:$0xf]
    %v3656 = vld [vmem:[%s6] sm:$0x1]
    %v3658 = vlaneseq
    %v3659 = vshrl.u32 %v3658, 7
    %v3660 = vsub.s32 0, %v3659
    %v3661 = vrot.slane %v3656, %v3660
    %v3679 = vunpack.c.l.b16 %v3640
    %v3680 = vunpack.c.l.b16 %v3641
    %v3681 = vunpack.c.l.b16 %v3642
    %v3682 = vunpack.c.l.b16 %v3643
    %v3683 = vunpack.c.l.b16 %v3644
    %v3684 = vunpack.c.l.b16 %v3645
    %v3685 = vunpack.c.l.b16 %v3646
    %v3686 = vunpack.c.l.b16 %v3647
    %v3687 = vunpack.c.l.b16 %v3648
    %v3688 = vunpack.c.l.b16 %v3649
    %v3689 = vunpack.c.l.b16 %v3650
    %v3690 = vunpack.c.l.b16 %v3651
    %v3691 = vunpack.c.l.b16 %v3652
    %v3692 = vunpack.c.l.b16 %v3653
    %v3693 = vunpack.c.l.b16 %v3654
    %v3694 = vunpack.c.l.b16 %v3655
    %v3695 = vpack.c.b16 %v3680, %v3679
    %v3696 = vpack.c.b16 %v3682, %v3681
    %v3697 = vpack.c.b16 %v3684, %v3683
    %v3698 = vpack.c.b16 %v3686, %v3685
    %v3699 = vpack.c.b16 %v3688, %v3687
    %v3700 = vpack.c.b16 %v3690, %v3689
    %v3701 = vpack.c.b16 %v3692, %v3691
    %v3702 = vpack.c.b16 %v3694, %v3693
    %3711 = vmatprep.subr.bf16.mxu0 0
    %3712 = vmatpush1.bf16.msra.mxu0 %v3695
    %3713 = vmatprep.subr.bf16.mxu0 0
    %3714 = vmatpush1.bf16.msra.mxu0 %v3696
    %3715 = vmatprep.subr.bf16.mxu0 0
    %3716 = vmatpush1.bf16.msra.mxu0 %v3697
    %3717 = vmatprep.subr.bf16.mxu0 0
    %3718 = vmatpush1.bf16.msra.mxu0 %v3698
    %3719 = vmatprep.subr.bf16.mxu0 0
    %3720 = vmatpush1.bf16.msra.mxu0 %v3699
    %3721 = vmatprep.subr.bf16.mxu0 0
    %3722 = vmatpush1.bf16.msra.mxu0 %v3700
    %3723 = vmatprep.subr.bf16.mxu0 0
    %3724 = vmatpush1.bf16.msra.mxu0 %v3701
    %3725 = vmatprep.subr.bf16.mxu0 0
    %3726 = vmatpush1.bf16.msra.mxu0 %v3702
    %3727 = vmatprep.subr.bf16.mxu0 0
    %3728 = vmatpush1.bf16.msra.mxu0 0
    %3729 = vmatprep.subr.bf16.mxu0 0
    %3730 = vmatpush1.bf16.msra.mxu0 0
    %3731 = vmatprep.subr.bf16.mxu0 0
    %3732 = vmatpush1.bf16.msra.mxu0 0
    %3733 = vmatprep.subr.bf16.mxu0 0
    %3734 = vmatpush1.bf16.msra.mxu0 0
    %3735 = vmatprep.subr.bf16.mxu0 0
    %3736 = vmatpush1.bf16.msra.mxu0 0
    %3737 = vmatprep.subr.bf16.mxu0 0
    %3738 = vmatpush1.bf16.msra.mxu0 0
    %3739 = vmatprep.subr.bf16.mxu0 0
    %3740 = vmatpush1.bf16.msra.mxu0 0
    %3741 = vmatprep.subr.bf16.mxu0 0
    %3742 = vmatpush1.bf16.msra.mxu0 0
    %3743 = vmatprep.mubr.bf16.mxu0 0
    %3744 = vmatmul.mubr.bf16.gmra.mrb[0].mxu0 %v3639
    %v3745 = vpop.f32.mrb[0].mxu0
    %v3746 = vadd.f32 %v3661, %v3745
    %v3747 = vpop.f32.mrb[0].mxu0
    %v3748 = vpop.f32.mrb[0].mxu0
    %v3749 = vpop.f32.mrb[0].mxu0
    %3750 = vdwg.mxu0
    %3751 = vst [vmem:[#allocation3] sm:$0xff] %v3746
    // Predicated region
    $region30: #{rnn_net_forward.1} parent=1 // pred_check
      _
    $region31: #{rnn_net_forward.1} parent=1 // pred_check_branch
      %3753 = sbr.rel (0) target = $region33
    $region32: #{rnn_net_forward.1} parent=1 // pred_region
      %s3755 = ssub.s32 128, 128
      %3756 = vsyncadd [#allocation4], %s3755
      %s3758 = sshll.u32 [#allocation3], 4
      %s3759 = int_to_ptr.vmem [resolvable:$true] %s3758
      %3761 = dma.vmem_to_hbm [thread:$0]  %s3759, 128, %s7, [#allocation4]
    $region33: #{rnn_net_forward.1} parent=1 // pred_fallthru
      _
    // Predicated region
    $region34: #{rnn_net_forward.1} parent=1 // pred_check
      _
    $region35: #{rnn_net_forward.1} parent=1 // pred_check_branch
      %3763 = sbr.rel (0) target = $region37
    $region36: #{rnn_net_forward.1} parent=1 // pred_region
      %3764 = dma.done [#allocation4], 128
    $region37: #{rnn_net_forward.1} parent=1 // pred_fallthru
      _
    %3765 = vsyncpa [#allocation4], 1

</llo_original>
